<compile_context>
chip_gen: v7x
topology: tpu7x:2x2x1
jax: 0.10.0
libtpu: 0.0.40
codegen_flags: <defaults>
</compile_context>

<pallas_src>
import numpy as np
import jax
import jax.numpy as jnp
from jax.experimental import pallas as pl
from jax.experimental.pallas import tpu as pltpu


# ----------------------------------------------------------------------------
# Fused whole-network kernel.
# ----------------------------------------------------------------------------
def _pmodel_kernel(x_ref,                              # (T, B, C)   seq-major GRU1 input
                   w_ih1_ref, w_hh1_ref, b1_ref,       # (C,4H1) (H1,4H1) (1,4H1)   i|f|o|g
                   w_ih5_ref, w_hh5_ref, b5_ref,       # (L,2*in,8H2) (L,2H2,8H2) (L,1,8H2)
                   w100_ref, b100_ref,                 # (2H2,100) (1,100)
                   w10_ref, b10_ref,                   # (100,H1)  (1,H1)
                   wcls_ref, bcls_ref,                 # (H1,ncls) (1,ncls)
                   out_ref,                            # (B*T, num_class)
                   g1_scr):                            # (T, B, H1) VMEM scratch
    f32 = jnp.float32
    T, B, C = x_ref.shape
    H1 = w_hh1_ref.shape[0]
    L = w_ih5_ref.shape[0]
    Hp = w_hh5_ref.shape[1]        # packed bidirectional state width = 2*H2
    H2 = Hp // 2

    def lstm_cell(pre, h, c, w_hh, H):
        # Gates packed i|f|o|g along lanes (width 4H).  For the merged
        # bidirectional cell, H is the packed width 2*H2 and every gate block
        # is itself [fwd | bwd], so the elementwise math lines up per lane.
        g = pre + jnp.dot(h, w_hh, preferred_element_type=f32)      # (rows, 4H)
        sig = jax.nn.sigmoid(g[:, :3 * H])      # ONE EUP push for i, f, o
        gg = jnp.tanh(g[:, 3 * H:])             # g gate
        i_g = sig[:, :H]
        f_g = sig[:, H:2 * H]
        o_g = sig[:, 2 * H:3 * H]
        c_new = f_g * c + i_g * gg
        h_new = o_g * jnp.tanh(c_new)
        return h_new, c_new

    # ---------------- GRU1: unidirectional LSTM over T (batch = B) ----------------
    if C == 1:
        # K=1 matmul replaced by a VPU broadcast multiply-add (no MXU, no reshape).
        xp = x_ref[...] * w_ih1_ref[...] + b1_ref[...]              # (T, B, 4H1)
    else:
        xp = (jnp.dot(x_ref[...].reshape(T * B, C), w_ih1_ref[...],
                      preferred_element_type=f32) + b1_ref[...]).reshape(T, B, 4 * H1)
    w_hh1 = w_hh1_ref[...]
    h = jnp.zeros((B, H1), f32)
    c = jnp.zeros((B, H1), f32)
    for t in range(T):                  # fully unrolled; h/c live in vregs
        h, c = lstm_cell(xp[t], h, c, w_hh1, H1)
        g1_scr[t] = h                   # store is off the serial h/c chain

    g1 = g1_scr[...]                                    # (T, B, H1)
    # Per GRU5-sequence-position features (GRU5's seq axis is B, batch axis is T).
    feat = [g1[:, s, :] for s in range(B)]              # B arrays of (T, H1)

    # -------- GRU5: depth bidirectional layers, fwd/bwd merged per iteration --------
    for l in range(L):
        w_ih_bd = w_ih5_ref[l]          # (2*in, 8H2)  rows: [fwd-input | bwd-input]
        w_hh_bd = w_hh5_ref[l]          # (2H2, 8H2)   block-diagonal recurrent weights
        b_bd = b5_ref[l]                # (1, 8H2)

        # Batched input projection for both iterations (off the serial chain):
        # iteration j feeds [feat[j] | feat[B-1-j]] to the fwd/bwd input rows.
        xin = jnp.concatenate(
            [jnp.concatenate([feat[j], feat[B - 1 - j]], axis=-1) for j in range(B)],
            axis=0)                                                    # (B*T, 2*in)
        pre_all = jnp.dot(xin, w_ih_bd, preferred_element_type=f32) + b_bd  # (B*T, 8H2)

        h = jnp.zeros((T, Hp), f32)     # packed [h_fwd | h_bwd]
        c = jnp.zeros((T, Hp), f32)
        h_list = [None] * B
        for j in range(B):              # fwd step j and bwd step B-1-j together
            h, c = lstm_cell(pre_all[j * T:(j + 1) * T], h, c, w_hh_bd, Hp)
            h_list[j] = h
        # Layer output at sequence position s = [fwd(s) | bwd(s)]  (PyTorch concat).
        feat = [jnp.concatenate([h_list[s][:, :H2], h_list[B - 1 - s][:, H2:]], axis=-1)
                for s in range(B)]

    # ------- Dense head (batched over all positions): Dense100 -> Dense10 -> CLS -------
    # TODO(synk): Dropout(0.7) is training-time stochastic; inference identity here.
    feats = jnp.concatenate(feat, axis=0)                              # (B*T, 2H2)
    h100 = jnp.dot(feats, w100_ref[...], preferred_element_type=f32) + b100_ref[...]
    h10 = jnp.dot(h100, w10_ref[...], preferred_element_type=f32) + b10_ref[...]
    out_ref[...] = jnp.dot(h10, wcls_ref[...], preferred_element_type=f32) + bcls_ref[...]


# ----------------------------------------------------------------------------
# Wrapper: single pallas_call for the entire forward pass.
# ----------------------------------------------------------------------------
def forward(params, x):
    # x: (B, T, channel) float32  ->  (B, T, num_class)
    B, T, _ = x.shape
    H1 = params["w_hh1"].shape[0]
    num_class = params["w_cls"].shape[1]

    xs = jnp.transpose(x, (1, 0, 2))    # (T, B, C): tiny, fuses away in XLA

    out2d = pl.pallas_call(
        _pmodel_kernel,
        out_shape=jax.ShapeDtypeStruct((B * T, num_class), jnp.float32),
        in_specs=[pl.BlockSpec(memory_space=pltpu.MemorySpace.VMEM)] * 13,
        out_specs=pl.BlockSpec(memory_space=pltpu.MemorySpace.VMEM),
        scratch_shapes=[pltpu.VMEM((T, B, H1), jnp.float32)],
    )(xs,
      params["w_ih1"], params["w_hh1"], params["b1"],
      params["w_ih5_bd"], params["w_hh5_bd"], params["b5_bd"],
      params["w100"], params["b100"], params["w10"], params["b10"],
      params["w_cls"], params["b_cls"])
    return out2d.reshape(B, T, num_class)     # free bitcast outside the kernel


# ----------------------------------------------------------------------------
# Host-side parameter packing (one time, outside jit).
# ----------------------------------------------------------------------------
def _reorder_gates_ifgo_to_ifog(x):
    """Reorder last-axis gate blocks from PyTorch i|f|g|o to kernel i|f|o|g."""
    H = x.shape[-1] // 4
    return jnp.concatenate([x[..., :2 * H], x[..., 3 * H:], x[..., 2 * H:3 * H]], axis=-1)


def pack_params(p):
    """Repack raw (PyTorch-equivalent) params into fused-kernel operands:
       * gate reorder i|f|g|o -> i|f|o|g everywhere,
       * GRU5 fwd/bwd merged: W_hh -> block-diagonal (2H2, 8H2), W_ih -> (2*in, 8H2)
         with [fwd-input rows | bwd-input rows], b -> (1, 8H2); packed columns are
         gate-major / direction-minor: [i_f i_b | f_f f_b | o_f o_b | g_f g_b]."""
    packed = {
        "w_ih1": _reorder_gates_ifgo_to_ifog(p["w_ih1"]),
        "w_hh1": _reorder_gates_ifgo_to_ifog(p["w_hh1"]),
        "b1": _reorder_gates_ifgo_to_ifog(p["b1"]),
        "w100": p["w100"], "b100": p["b100"],
        "w10": p["w10"], "b10": p["b10"],
        "w_cls": p["w_cls"], "b_cls": p["b_cls"],
    }

    ih = np.asarray(_reorder_gates_ifgo_to_ifog(p["w_ih5"]))   # (L,2,in,4H2)
    hh = np.asarray(_reorder_gates_ifgo_to_ifog(p["w_hh5"]))   # (L,2,H2,4H2)
    bb = np.asarray(_reorder_gates_ifgo_to_ifog(p["b5"]))      # (L,2,1,4H2)
    L, _, IN, G4 = ih.shape
    H2 = G4 // 4
    Hp = 2 * H2

    w_ih_bd = np.zeros((L, 2 * IN, 4 * Hp), np.float32)
    w_hh_bd = np.zeros((L, Hp, 4 * Hp), np.float32)
    b_bd = np.zeros((L, 1, 4 * Hp), np.float32)
    for l in range(L):
        for k in range(4):                             # gate k in i,f,o,g order
            src = slice(k * H2, (k + 1) * H2)
            dst_f = slice(k * Hp, k * Hp + H2)         # fwd half of gate block
            dst_b = slice(k * Hp + H2, (k + 1) * Hp)   # bwd half of gate block
            w_ih_bd[l, :IN, dst_f] = ih[l, 0][:, src]
            w_ih_bd[l, IN:, dst_b] = ih[l, 1][:, src]
            w_hh_bd[l, :H2, dst_f] = hh[l, 0][:, src]
            w_hh_bd[l, H2:, dst_b] = hh[l, 1][:, src]
            b_bd[l, 0, dst_f] = bb[l, 0, 0, src]
            b_bd[l, 0, dst_b] = bb[l, 1, 0, src]

    packed["w_ih5_bd"] = jnp.asarray(w_ih_bd)
    packed["w_hh5_bd"] = jnp.asarray(w_hh_bd)
    packed["b5_bd"] = jnp.asarray(b_bd)
    return packed


# ----------------------------------------------------------------------------
# Deterministic synthetic parameters (shapes mirror the PyTorch module, with
# gates packed along the last axis in PyTorch order i|f|g|o, weights stored
# transposed (in, out), and b = b_ih + b_hh combined).
# ----------------------------------------------------------------------------
def init_params(key, time_slot=10, depth=8, num_class=4, channel=1):
    assert time_slot % 2 == 0, "packed GRU5 weight stack assumes an even time_slot"
    H1 = time_slot
    H2 = time_slot // 2
    keys = iter(jax.random.split(key, 16))

    def u(shape, fan):
        s = 1.0 / float(fan) ** 0.5
        return jax.random.uniform(next(keys), shape, jnp.float32, -s, s)

    p = {}
    # GRU1: nn.LSTM(channel, time_slot, num_layers=1, unidirectional)
    p["w_ih1"] = u((channel, 4 * H1), H1)
    p["w_hh1"] = u((H1, 4 * H1), H1)
    p["b1"] = u((1, 4 * H1), H1)
    # GRU5: nn.LSTM(time_slot, time_slot//2, num_layers=depth, bidirectional)
    # stacked over (layer, direction); layer-0 input size == time_slot == 2*H2.
    p["w_ih5"] = u((depth, 2, 2 * H2, 4 * H2), H2)
    p["w_hh5"] = u((depth, 2, H2, 4 * H2), H2)
    p["b5"] = u((depth, 2, 1, 4 * H2), H2)
    # Dense100 / Dense10 / CLS
    p["w100"] = u((time_slot, 100), time_slot)
    p["b100"] = u((1, 100), time_slot)
    p["w10"] = u((100, time_slot), 100)
    p["b10"] = u((1, time_slot), 100)
    p["w_cls"] = u((time_slot, num_class), time_slot)
    p["b_cls"] = u((1, num_class), time_slot)
    return p


if __name__ == "__main__":
    time_slot, depth, num_class, channel = 10, 8, 4, 1
    B, T = 2, 8

    key = jax.random.PRNGKey(0)
    pkey, xkey = jax.random.split(key)
    raw = init_params(pkey, time_slot, depth, num_class, channel)
    params = pack_params(raw)           # one-time host-side packing
    x = jax.random.normal(xkey, (B, T, channel), jnp.float32)

    out = jax.block_until_ready(jax.jit(forward)(params, x))
    assert out.shape == (B, T, num_class), out.shape
    assert bool(jnp.all(jnp.isfinite(out)))
    print("KERNEL_OK")
</pallas_src>

<mosaic_0001>
module attributes {stable_mosaic.version = 11 : i64} {
  func.func @_pmodel_kernel(%arg0: memref<8x2x1xf32, #tpu.memory_space<vmem>>, %arg1: memref<1x40xf32, #tpu.memory_space<vmem>>, %arg2: memref<10x40xf32, #tpu.memory_space<vmem>>, %arg3: memref<1x40xf32, #tpu.memory_space<vmem>>, %arg4: memref<8x20x40xf32, #tpu.memory_space<vmem>>, %arg5: memref<8x10x40xf32, #tpu.memory_space<vmem>>, %arg6: memref<8x1x40xf32, #tpu.memory_space<vmem>>, %arg7: memref<10x100xf32, #tpu.memory_space<vmem>>, %arg8: memref<1x100xf32, #tpu.memory_space<vmem>>, %arg9: memref<100x10xf32, #tpu.memory_space<vmem>>, %arg10: memref<1x10xf32, #tpu.memory_space<vmem>>, %arg11: memref<10x4xf32, #tpu.memory_space<vmem>>, %arg12: memref<1x4xf32, #tpu.memory_space<vmem>>, %arg13: memref<16x4xf32, #tpu.memory_space<vmem>>, %arg14: memref<8x2x10xf32, #tpu.memory_space<vmem>>) attributes {dimension_semantics = [], scalar_prefetch = 0 : i64, scratch_operands = 1 : i64, tpu.core_type = #tpu.core_type<tc>} {
    %c0 = arith.constant 0 : index
    %c0_0 = arith.constant 0 : index
    %c0_1 = arith.constant 0 : index
    %0 = vector.load %arg0[%c0, %c0_0, %c0_1] : memref<8x2x1xf32, #tpu.memory_space<vmem>>, vector<8x2x1xf32>
    %c0_2 = arith.constant 0 : index
    %c0_3 = arith.constant 0 : index
    %1 = vector.load %arg1[%c0_2, %c0_3] : memref<1x40xf32, #tpu.memory_space<vmem>>, vector<1x40xf32>
    %2 = vector.shape_cast %1 : vector<1x40xf32> to vector<1x1x40xf32>
    %3 = vector.broadcast %0 : vector<8x2x1xf32> to vector<8x2x40xf32>
    %4 = vector.broadcast %2 : vector<1x1x40xf32> to vector<8x2x40xf32>
    %5 = arith.mulf %3, %4 : vector<8x2x40xf32>
    %c0_4 = arith.constant 0 : index
    %c0_5 = arith.constant 0 : index
    %6 = vector.load %arg3[%c0_4, %c0_5] : memref<1x40xf32, #tpu.memory_space<vmem>>, vector<1x40xf32>
    %7 = vector.shape_cast %6 : vector<1x40xf32> to vector<1x1x40xf32>
    %8 = vector.broadcast %7 : vector<1x1x40xf32> to vector<8x2x40xf32>
    %9 = arith.addf %5, %8 : vector<8x2x40xf32>
    %c0_6 = arith.constant 0 : index
    %c0_7 = arith.constant 0 : index
    %10 = vector.load %arg2[%c0_6, %c0_7] : memref<10x40xf32, #tpu.memory_space<vmem>>, vector<10x40xf32>
    %cst = arith.constant 0.000000e+00 : f32
    %11 = vector.broadcast %cst : f32 to vector<2x10xf32>
    %cst_8 = arith.constant 0.000000e+00 : f32
    %12 = vector.broadcast %cst_8 : f32 to vector<2x10xf32>
    %13 = vector.extract_strided_slice %9 {offsets = [0, 0, 0], sizes = [1, 2, 40], strides = [1, 1, 1]} : vector<8x2x40xf32> to vector<1x2x40xf32>
    %14 = vector.shape_cast %13 : vector<1x2x40xf32> to vector<2x40xf32>
    %cst_9 = arith.constant dense<0.000000e+00> : vector<2x40xf32>
    %15 = tpu.matmul %11, %10, %cst_9 {dimension_numbers = #tpu.dot_dimension_numbers<[1], [0], [0], [1], [0, 0, 1, 1], [], []>} : vector<2x10xf32>, vector<10x40xf32>, vector<2x40xf32> -> vector<2x40xf32>
    %16 = arith.addf %14, %15 : vector<2x40xf32>
    %17 = vector.extract_strided_slice %16 {offsets = [0, 0], sizes = [2, 30], strides = [1, 1]} : vector<2x40xf32> to vector<2x30xf32>
    %18 = arith.negf %17 : vector<2x30xf32>
    %19 = math.exp %18 : vector<2x30xf32>
    %cst_10 = arith.constant 1.000000e+00 : f32
    %20 = vector.broadcast %cst_10 : f32 to vector<2x30xf32>
    %21 = arith.addf %20, %19 : vector<2x30xf32>
    %22 = arith.divf %20, %21 : vector<2x30xf32>
    %23 = vector.extract_strided_slice %16 {offsets = [0, 30], sizes = [2, 10], strides = [1, 1]} : vector<2x40xf32> to vector<2x10xf32>
    %24 = math.tanh %23 : vector<2x10xf32>
    %25 = vector.extract_strided_slice %22 {offsets = [0, 0], sizes = [2, 10], strides = [1, 1]} : vector<2x30xf32> to vector<2x10xf32>
    %26 = vector.extract_strided_slice %22 {offsets = [0, 10], sizes = [2, 10], strides = [1, 1]} : vector<2x30xf32> to vector<2x10xf32>
    %27 = vector.extract_strided_slice %22 {offsets = [0, 20], sizes = [2, 10], strides = [1, 1]} : vector<2x30xf32> to vector<2x10xf32>
    %28 = arith.mulf %26, %12 : vector<2x10xf32>
    %29 = arith.mulf %25, %24 : vector<2x10xf32>
    %30 = arith.addf %28, %29 : vector<2x10xf32>
    %31 = math.tanh %30 : vector<2x10xf32>
    %32 = arith.mulf %27, %31 : vector<2x10xf32>
    %c0_11 = arith.constant 0 : index
    %c0_12 = arith.constant 0 : index
    %c0_13 = arith.constant 0 : index
    %33 = vector.load %arg14[%c0_11, %c0_12, %c0_13] : memref<8x2x10xf32, #tpu.memory_space<vmem>>, vector<1x2x10xf32>
    %34 = vector.shape_cast %33 : vector<1x2x10xf32> to vector<2x10xf32>
    %35 = vector.shape_cast %32 : vector<2x10xf32> to vector<1x2x10xf32>
    tpu.vector_store %arg14[%c0_11, %c0_12, %c0_13], %35 {strides = array<i32>} : memref<8x2x10xf32, #tpu.memory_space<vmem>>, vector<1x2x10xf32>,
    %36 = vector.extract_strided_slice %9 {offsets = [1, 0, 0], sizes = [1, 2, 40], strides = [1, 1, 1]} : vector<8x2x40xf32> to vector<1x2x40xf32>
    %37 = vector.shape_cast %36 : vector<1x2x40xf32> to vector<2x40xf32>
    %cst_14 = arith.constant dense<0.000000e+00> : vector<2x40xf32>
    %38 = tpu.matmul %32, %10, %cst_14 {dimension_numbers = #tpu.dot_dimension_numbers<[1], [0], [0], [1], [0, 0, 1, 1], [], []>} : vector<2x10xf32>, vector<10x40xf32>, vector<2x40xf32> -> vector<2x40xf32>
    %39 = arith.addf %37, %38 : vector<2x40xf32>
    %40 = vector.extract_strided_slice %39 {offsets = [0, 0], sizes = [2, 30], strides = [1, 1]} : vector<2x40xf32> to vector<2x30xf32>
    %41 = arith.negf %40 : vector<2x30xf32>
    %42 = math.exp %41 : vector<2x30xf32>
    %cst_15 = arith.constant 1.000000e+00 : f32
    %43 = vector.broadcast %cst_15 : f32 to vector<2x30xf32>
    %44 = arith.addf %43, %42 : vector<2x30xf32>
    %45 = arith.divf %43, %44 : vector<2x30xf32>
    %46 = vector.extract_strided_slice %39 {offsets = [0, 30], sizes = [2, 10], strides = [1, 1]} : vector<2x40xf32> to vector<2x10xf32>
    %47 = math.tanh %46 : vector<2x10xf32>
    %48 = vector.extract_strided_slice %45 {offsets = [0, 0], sizes = [2, 10], strides = [1, 1]} : vector<2x30xf32> to vector<2x10xf32>
    %49 = vector.extract_strided_slice %45 {offsets = [0, 10], sizes = [2, 10], strides = [1, 1]} : vector<2x30xf32> to vector<2x10xf32>
    %50 = vector.extract_strided_slice %45 {offsets = [0, 20], sizes = [2, 10], strides = [1, 1]} : vector<2x30xf32> to vector<2x10xf32>
    %51 = arith.mulf %49, %30 : vector<2x10xf32>
    %52 = arith.mulf %48, %47 : vector<2x10xf32>
    %53 = arith.addf %51, %52 : vector<2x10xf32>
    %54 = math.tanh %53 : vector<2x10xf32>
    %55 = arith.mulf %50, %54 : vector<2x10xf32>
    %c1 = arith.constant 1 : index
    %c0_16 = arith.constant 0 : index
    %c0_17 = arith.constant 0 : index
    %56 = vector.load %arg14[%c1, %c0_16, %c0_17] : memref<8x2x10xf32, #tpu.memory_space<vmem>>, vector<1x2x10xf32>
    %57 = vector.shape_cast %56 : vector<1x2x10xf32> to vector<2x10xf32>
    %58 = vector.shape_cast %55 : vector<2x10xf32> to vector<1x2x10xf32>
    tpu.vector_store %arg14[%c1, %c0_16, %c0_17], %58 {strides = array<i32>} : memref<8x2x10xf32, #tpu.memory_space<vmem>>, vector<1x2x10xf32>,
    %59 = vector.extract_strided_slice %9 {offsets = [2, 0, 0], sizes = [1, 2, 40], strides = [1, 1, 1]} : vector<8x2x40xf32> to vector<1x2x40xf32>
    %60 = vector.shape_cast %59 : vector<1x2x40xf32> to vector<2x40xf32>
    %cst_18 = arith.constant dense<0.000000e+00> : vector<2x40xf32>
    %61 = tpu.matmul %55, %10, %cst_18 {dimension_numbers = #tpu.dot_dimension_numbers<[1], [0], [0], [1], [0, 0, 1, 1], [], []>} : vector<2x10xf32>, vector<10x40xf32>, vector<2x40xf32> -> vector<2x40xf32>
    %62 = arith.addf %60, %61 : vector<2x40xf32>
    %63 = vector.extract_strided_slice %62 {offsets = [0, 0], sizes = [2, 30], strides = [1, 1]} : vector<2x40xf32> to vector<2x30xf32>
    %64 = arith.negf %63 : vector<2x30xf32>
    %65 = math.exp %64 : vector<2x30xf32>
    %cst_19 = arith.constant 1.000000e+00 : f32
    %66 = vector.broadcast %cst_19 : f32 to vector<2x30xf32>
    %67 = arith.addf %66, %65 : vector<2x30xf32>
    %68 = arith.divf %66, %67 : vector<2x30xf32>
    %69 = vector.extract_strided_slice %62 {offsets = [0, 30], sizes = [2, 10], strides = [1, 1]} : vector<2x40xf32> to vector<2x10xf32>
    %70 = math.tanh %69 : vector<2x10xf32>
    %71 = vector.extract_strided_slice %68 {offsets = [0, 0], sizes = [2, 10], strides = [1, 1]} : vector<2x30xf32> to vector<2x10xf32>
    %72 = vector.extract_strided_slice %68 {offsets = [0, 10], sizes = [2, 10], strides = [1, 1]} : vector<2x30xf32> to vector<2x10xf32>
    %73 = vector.extract_strided_slice %68 {offsets = [0, 20], sizes = [2, 10], strides = [1, 1]} : vector<2x30xf32> to vector<2x10xf32>
    %74 = arith.mulf %72, %53 : vector<2x10xf32>
    %75 = arith.mulf %71, %70 : vector<2x10xf32>
    %76 = arith.addf %74, %75 : vector<2x10xf32>
    %77 = math.tanh %76 : vector<2x10xf32>
    %78 = arith.mulf %73, %77 : vector<2x10xf32>
    %c2 = arith.constant 2 : index
    %c0_20 = arith.constant 0 : index
    %c0_21 = arith.constant 0 : index
    %79 = vector.load %arg14[%c2, %c0_20, %c0_21] : memref<8x2x10xf32, #tpu.memory_space<vmem>>, vector<1x2x10xf32>
    %80 = vector.shape_cast %79 : vector<1x2x10xf32> to vector<2x10xf32>
    %81 = vector.shape_cast %78 : vector<2x10xf32> to vector<1x2x10xf32>
    tpu.vector_store %arg14[%c2, %c0_20, %c0_21], %81 {strides = array<i32>} : memref<8x2x10xf32, #tpu.memory_space<vmem>>, vector<1x2x10xf32>,
    %82 = vector.extract_strided_slice %9 {offsets = [3, 0, 0], sizes = [1, 2, 40], strides = [1, 1, 1]} : vector<8x2x40xf32> to vector<1x2x40xf32>
    %83 = vector.shape_cast %82 : vector<1x2x40xf32> to vector<2x40xf32>
    %cst_22 = arith.constant dense<0.000000e+00> : vector<2x40xf32>
    %84 = tpu.matmul %78, %10, %cst_22 {dimension_numbers = #tpu.dot_dimension_numbers<[1], [0], [0], [1], [0, 0, 1, 1], [], []>} : vector<2x10xf32>, vector<10x40xf32>, vector<2x40xf32> -> vector<2x40xf32>
    %85 = arith.addf %83, %84 : vector<2x40xf32>
    %86 = vector.extract_strided_slice %85 {offsets = [0, 0], sizes = [2, 30], strides = [1, 1]} : vector<2x40xf32> to vector<2x30xf32>
    %87 = arith.negf %86 : vector<2x30xf32>
    %88 = math.exp %87 : vector<2x30xf32>
    %cst_23 = arith.constant 1.000000e+00 : f32
    %89 = vector.broadcast %cst_23 : f32 to vector<2x30xf32>
    %90 = arith.addf %89, %88 : vector<2x30xf32>
    %91 = arith.divf %89, %90 : vector<2x30xf32>
    %92 = vector.extract_strided_slice %85 {offsets = [0, 30], sizes = [2, 10], strides = [1, 1]} : vector<2x40xf32> to vector<2x10xf32>
    %93 = math.tanh %92 : vector<2x10xf32>
    %94 = vector.extract_strided_slice %91 {offsets = [0, 0], sizes = [2, 10], strides = [1, 1]} : vector<2x30xf32> to vector<2x10xf32>
    %95 = vector.extract_strided_slice %91 {offsets = [0, 10], sizes = [2, 10], strides = [1, 1]} : vector<2x30xf32> to vector<2x10xf32>
    %96 = vector.extract_strided_slice %91 {offsets = [0, 20], sizes = [2, 10], strides = [1, 1]} : vector<2x30xf32> to vector<2x10xf32>
    %97 = arith.mulf %95, %76 : vector<2x10xf32>
    %98 = arith.mulf %94, %93 : vector<2x10xf32>
    %99 = arith.addf %97, %98 : vector<2x10xf32>
    %100 = math.tanh %99 : vector<2x10xf32>
    %101 = arith.mulf %96, %100 : vector<2x10xf32>
    %c3 = arith.constant 3 : index
    %c0_24 = arith.constant 0 : index
    %c0_25 = arith.constant 0 : index
    %102 = vector.load %arg14[%c3, %c0_24, %c0_25] : memref<8x2x10xf32, #tpu.memory_space<vmem>>, vector<1x2x10xf32>
    %103 = vector.shape_cast %102 : vector<1x2x10xf32> to vector<2x10xf32>
    %104 = vector.shape_cast %101 : vector<2x10xf32> to vector<1x2x10xf32>
    tpu.vector_store %arg14[%c3, %c0_24, %c0_25], %104 {strides = array<i32>} : memref<8x2x10xf32, #tpu.memory_space<vmem>>, vector<1x2x10xf32>,
    %105 = vector.extract_strided_slice %9 {offsets = [4, 0, 0], sizes = [1, 2, 40], strides = [1, 1, 1]} : vector<8x2x40xf32> to vector<1x2x40xf32>
    %106 = vector.shape_cast %105 : vector<1x2x40xf32> to vector<2x40xf32>
    %cst_26 = arith.constant dense<0.000000e+00> : vector<2x40xf32>
    %107 = tpu.matmul %101, %10, %cst_26 {dimension_numbers = #tpu.dot_dimension_numbers<[1], [0], [0], [1], [0, 0, 1, 1], [], []>} : vector<2x10xf32>, vector<10x40xf32>, vector<2x40xf32> -> vector<2x40xf32>
    %108 = arith.addf %106, %107 : vector<2x40xf32>
    %109 = vector.extract_strided_slice %108 {offsets = [0, 0], sizes = [2, 30], strides = [1, 1]} : vector<2x40xf32> to vector<2x30xf32>
    %110 = arith.negf %109 : vector<2x30xf32>
    %111 = math.exp %110 : vector<2x30xf32>
    %cst_27 = arith.constant 1.000000e+00 : f32
    %112 = vector.broadcast %cst_27 : f32 to vector<2x30xf32>
    %113 = arith.addf %112, %111 : vector<2x30xf32>
    %114 = arith.divf %112, %113 : vector<2x30xf32>
    %115 = vector.extract_strided_slice %108 {offsets = [0, 30], sizes = [2, 10], strides = [1, 1]} : vector<2x40xf32> to vector<2x10xf32>
    %116 = math.tanh %115 : vector<2x10xf32>
    %117 = vector.extract_strided_slice %114 {offsets = [0, 0], sizes = [2, 10], strides = [1, 1]} : vector<2x30xf32> to vector<2x10xf32>
    %118 = vector.extract_strided_slice %114 {offsets = [0, 10], sizes = [2, 10], strides = [1, 1]} : vector<2x30xf32> to vector<2x10xf32>
    %119 = vector.extract_strided_slice %114 {offsets = [0, 20], sizes = [2, 10], strides = [1, 1]} : vector<2x30xf32> to vector<2x10xf32>
    %120 = arith.mulf %118, %99 : vector<2x10xf32>
    %121 = arith.mulf %117, %116 : vector<2x10xf32>
    %122 = arith.addf %120, %121 : vector<2x10xf32>
    %123 = math.tanh %122 : vector<2x10xf32>
    %124 = arith.mulf %119, %123 : vector<2x10xf32>
    %c4 = arith.constant 4 : index
    %c0_28 = arith.constant 0 : index
    %c0_29 = arith.constant 0 : index
    %125 = vector.load %arg14[%c4, %c0_28, %c0_29] : memref<8x2x10xf32, #tpu.memory_space<vmem>>, vector<1x2x10xf32>
    %126 = vector.shape_cast %125 : vector<1x2x10xf32> to vector<2x10xf32>
    %127 = vector.shape_cast %124 : vector<2x10xf32> to vector<1x2x10xf32>
    tpu.vector_store %arg14[%c4, %c0_28, %c0_29], %127 {strides = array<i32>} : memref<8x2x10xf32, #tpu.memory_space<vmem>>, vector<1x2x10xf32>,
    %128 = vector.extract_strided_slice %9 {offsets = [5, 0, 0], sizes = [1, 2, 40], strides = [1, 1, 1]} : vector<8x2x40xf32> to vector<1x2x40xf32>
    %129 = vector.shape_cast %128 : vector<1x2x40xf32> to vector<2x40xf32>
    %cst_30 = arith.constant dense<0.000000e+00> : vector<2x40xf32>
    %130 = tpu.matmul %124, %10, %cst_30 {dimension_numbers = #tpu.dot_dimension_numbers<[1], [0], [0], [1], [0, 0, 1, 1], [], []>} : vector<2x10xf32>, vector<10x40xf32>, vector<2x40xf32> -> vector<2x40xf32>
    %131 = arith.addf %129, %130 : vector<2x40xf32>
    %132 = vector.extract_strided_slice %131 {offsets = [0, 0], sizes = [2, 30], strides = [1, 1]} : vector<2x40xf32> to vector<2x30xf32>
    %133 = arith.negf %132 : vector<2x30xf32>
    %134 = math.exp %133 : vector<2x30xf32>
    %cst_31 = arith.constant 1.000000e+00 : f32
    %135 = vector.broadcast %cst_31 : f32 to vector<2x30xf32>
    %136 = arith.addf %135, %134 : vector<2x30xf32>
    %137 = arith.divf %135, %136 : vector<2x30xf32>
    %138 = vector.extract_strided_slice %131 {offsets = [0, 30], sizes = [2, 10], strides = [1, 1]} : vector<2x40xf32> to vector<2x10xf32>
    %139 = math.tanh %138 : vector<2x10xf32>
    %140 = vector.extract_strided_slice %137 {offsets = [0, 0], sizes = [2, 10], strides = [1, 1]} : vector<2x30xf32> to vector<2x10xf32>
    %141 = vector.extract_strided_slice %137 {offsets = [0, 10], sizes = [2, 10], strides = [1, 1]} : vector<2x30xf32> to vector<2x10xf32>
    %142 = vector.extract_strided_slice %137 {offsets = [0, 20], sizes = [2, 10], strides = [1, 1]} : vector<2x30xf32> to vector<2x10xf32>
    %143 = arith.mulf %141, %122 : vector<2x10xf32>
    %144 = arith.mulf %140, %139 : vector<2x10xf32>
    %145 = arith.addf %143, %144 : vector<2x10xf32>
    %146 = math.tanh %145 : vector<2x10xf32>
    %147 = arith.mulf %142, %146 : vector<2x10xf32>
    %c5 = arith.constant 5 : index
    %c0_32 = arith.constant 0 : index
    %c0_33 = arith.constant 0 : index
    %148 = vector.load %arg14[%c5, %c0_32, %c0_33] : memref<8x2x10xf32, #tpu.memory_space<vmem>>, vector<1x2x10xf32>
    %149 = vector.shape_cast %148 : vector<1x2x10xf32> to vector<2x10xf32>
    %150 = vector.shape_cast %147 : vector<2x10xf32> to vector<1x2x10xf32>
    tpu.vector_store %arg14[%c5, %c0_32, %c0_33], %150 {strides = array<i32>} : memref<8x2x10xf32, #tpu.memory_space<vmem>>, vector<1x2x10xf32>,
    %151 = vector.extract_strided_slice %9 {offsets = [6, 0, 0], sizes = [1, 2, 40], strides = [1, 1, 1]} : vector<8x2x40xf32> to vector<1x2x40xf32>
    %152 = vector.shape_cast %151 : vector<1x2x40xf32> to vector<2x40xf32>
    %cst_34 = arith.constant dense<0.000000e+00> : vector<2x40xf32>
    %153 = tpu.matmul %147, %10, %cst_34 {dimension_numbers = #tpu.dot_dimension_numbers<[1], [0], [0], [1], [0, 0, 1, 1], [], []>} : vector<2x10xf32>, vector<10x40xf32>, vector<2x40xf32> -> vector<2x40xf32>
    %154 = arith.addf %152, %153 : vector<2x40xf32>
    %155 = vector.extract_strided_slice %154 {offsets = [0, 0], sizes = [2, 30], strides = [1, 1]} : vector<2x40xf32> to vector<2x30xf32>
    %156 = arith.negf %155 : vector<2x30xf32>
    %157 = math.exp %156 : vector<2x30xf32>
    %cst_35 = arith.constant 1.000000e+00 : f32
    %158 = vector.broadcast %cst_35 : f32 to vector<2x30xf32>
    %159 = arith.addf %158, %157 : vector<2x30xf32>
    %160 = arith.divf %158, %159 : vector<2x30xf32>
    %161 = vector.extract_strided_slice %154 {offsets = [0, 30], sizes = [2, 10], strides = [1, 1]} : vector<2x40xf32> to vector<2x10xf32>
    %162 = math.tanh %161 : vector<2x10xf32>
    %163 = vector.extract_strided_slice %160 {offsets = [0, 0], sizes = [2, 10], strides = [1, 1]} : vector<2x30xf32> to vector<2x10xf32>
    %164 = vector.extract_strided_slice %160 {offsets = [0, 10], sizes = [2, 10], strides = [1, 1]} : vector<2x30xf32> to vector<2x10xf32>
    %165 = vector.extract_strided_slice %160 {offsets = [0, 20], sizes = [2, 10], strides = [1, 1]} : vector<2x30xf32> to vector<2x10xf32>
    %166 = arith.mulf %164, %145 : vector<2x10xf32>
    %167 = arith.mulf %163, %162 : vector<2x10xf32>
    %168 = arith.addf %166, %167 : vector<2x10xf32>
    %169 = math.tanh %168 : vector<2x10xf32>
    %170 = arith.mulf %165, %169 : vector<2x10xf32>
    %c6 = arith.constant 6 : index
    %c0_36 = arith.constant 0 : index
    %c0_37 = arith.constant 0 : index
    %171 = vector.load %arg14[%c6, %c0_36, %c0_37] : memref<8x2x10xf32, #tpu.memory_space<vmem>>, vector<1x2x10xf32>
    %172 = vector.shape_cast %171 : vector<1x2x10xf32> to vector<2x10xf32>
    %173 = vector.shape_cast %170 : vector<2x10xf32> to vector<1x2x10xf32>
    tpu.vector_store %arg14[%c6, %c0_36, %c0_37], %173 {strides = array<i32>} : memref<8x2x10xf32, #tpu.memory_space<vmem>>, vector<1x2x10xf32>,
    %174 = vector.extract_strided_slice %9 {offsets = [7, 0, 0], sizes = [1, 2, 40], strides = [1, 1, 1]} : vector<8x2x40xf32> to vector<1x2x40xf32>
    %175 = vector.shape_cast %174 : vector<1x2x40xf32> to vector<2x40xf32>
    %cst_38 = arith.constant dense<0.000000e+00> : vector<2x40xf32>
    %176 = tpu.matmul %170, %10, %cst_38 {dimension_numbers = #tpu.dot_dimension_numbers<[1], [0], [0], [1], [0, 0, 1, 1], [], []>} : vector<2x10xf32>, vector<10x40xf32>, vector<2x40xf32> -> vector<2x40xf32>
    %177 = arith.addf %175, %176 : vector<2x40xf32>
    %178 = vector.extract_strided_slice %177 {offsets = [0, 0], sizes = [2, 30], strides = [1, 1]} : vector<2x40xf32> to vector<2x30xf32>
    %179 = arith.negf %178 : vector<2x30xf32>
    %180 = math.exp %179 : vector<2x30xf32>
    %cst_39 = arith.constant 1.000000e+00 : f32
    %181 = vector.broadcast %cst_39 : f32 to vector<2x30xf32>
    %182 = arith.addf %181, %180 : vector<2x30xf32>
    %183 = arith.divf %181, %182 : vector<2x30xf32>
    %184 = vector.extract_strided_slice %177 {offsets = [0, 30], sizes = [2, 10], strides = [1, 1]} : vector<2x40xf32> to vector<2x10xf32>
    %185 = math.tanh %184 : vector<2x10xf32>
    %186 = vector.extract_strided_slice %183 {offsets = [0, 0], sizes = [2, 10], strides = [1, 1]} : vector<2x30xf32> to vector<2x10xf32>
    %187 = vector.extract_strided_slice %183 {offsets = [0, 10], sizes = [2, 10], strides = [1, 1]} : vector<2x30xf32> to vector<2x10xf32>
    %188 = vector.extract_strided_slice %183 {offsets = [0, 20], sizes = [2, 10], strides = [1, 1]} : vector<2x30xf32> to vector<2x10xf32>
    %189 = arith.mulf %187, %168 : vector<2x10xf32>
    %190 = arith.mulf %186, %185 : vector<2x10xf32>
    %191 = arith.addf %189, %190 : vector<2x10xf32>
    %192 = math.tanh %191 : vector<2x10xf32>
    %193 = arith.mulf %188, %192 : vector<2x10xf32>
    %c7 = arith.constant 7 : index
    %c0_40 = arith.constant 0 : index
    %c0_41 = arith.constant 0 : index
    %194 = vector.load %arg14[%c7, %c0_40, %c0_41] : memref<8x2x10xf32, #tpu.memory_space<vmem>>, vector<1x2x10xf32>
    %195 = vector.shape_cast %194 : vector<1x2x10xf32> to vector<2x10xf32>
    %196 = vector.shape_cast %193 : vector<2x10xf32> to vector<1x2x10xf32>
    tpu.vector_store %arg14[%c7, %c0_40, %c0_41], %196 {strides = array<i32>} : memref<8x2x10xf32, #tpu.memory_space<vmem>>, vector<1x2x10xf32>,
    %c0_42 = arith.constant 0 : index
    %c0_43 = arith.constant 0 : index
    %c0_44 = arith.constant 0 : index
    %197 = vector.load %arg14[%c0_42, %c0_43, %c0_44] : memref<8x2x10xf32, #tpu.memory_space<vmem>>, vector<8x2x10xf32>
    %198 = vector.extract_strided_slice %197 {offsets = [0, 0, 0], sizes = [8, 1, 10], strides = [1, 1, 1]} : vector<8x2x10xf32> to vector<8x1x10xf32>
    %199 = vector.shape_cast %198 : vector<8x1x10xf32> to vector<8x10xf32>
    %200 = vector.extract_strided_slice %197 {offsets = [0, 1, 0], sizes = [8, 1, 10], strides = [1, 1, 1]} : vector<8x2x10xf32> to vector<8x1x10xf32>
    %201 = vector.shape_cast %200 : vector<8x1x10xf32> to vector<8x10xf32>
    %c0_45 = arith.constant 0 : index
    %c0_46 = arith.constant 0 : index
    %c0_47 = arith.constant 0 : index
    %202 = vector.load %arg4[%c0_45, %c0_46, %c0_47] : memref<8x20x40xf32, #tpu.memory_space<vmem>>, vector<1x20x40xf32>
    %203 = vector.shape_cast %202 : vector<1x20x40xf32> to vector<20x40xf32>
    %c0_48 = arith.constant 0 : index
    %c0_49 = arith.constant 0 : index
    %c0_50 = arith.constant 0 : index
    %204 = vector.load %arg5[%c0_48, %c0_49, %c0_50] : memref<8x10x40xf32, #tpu.memory_space<vmem>>, vector<1x10x40xf32>
    %205 = vector.shape_cast %204 : vector<1x10x40xf32> to vector<10x40xf32>
    %c0_51 = arith.constant 0 : index
    %c0_52 = arith.constant 0 : index
    %c0_53 = arith.constant 0 : index
    %206 = vector.load %arg6[%c0_51, %c0_52, %c0_53] : memref<8x1x40xf32, #tpu.memory_space<vmem>>, vector<1x1x40xf32>
    %207 = vector.shape_cast %206 : vector<1x1x40xf32> to vector<1x40xf32>
    %208 = tpu.concatenate %199, %201 in 1 : vector<8x10xf32>, vector<8x10xf32> -> vector<8x20xf32>
    %209 = tpu.concatenate %201, %199 in 1 : vector<8x10xf32>, vector<8x10xf32> -> vector<8x20xf32>
    %210 = tpu.concatenate %208, %209 in 0 : vector<8x20xf32>, vector<8x20xf32> -> vector<16x20xf32>
    %cst_54 = arith.constant dense<0.000000e+00> : vector<16x40xf32>
    %211 = tpu.matmul %210, %203, %cst_54 {dimension_numbers = #tpu.dot_dimension_numbers<[1], [0], [0], [1], [0, 0, 1, 1], [], []>} : vector<16x20xf32>, vector<20x40xf32>, vector<16x40xf32> -> vector<16x40xf32>
    %212 = vector.broadcast %207 : vector<1x40xf32> to vector<16x40xf32>
    %213 = arith.addf %211, %212 : vector<16x40xf32>
    %cst_55 = arith.constant 0.000000e+00 : f32
    %214 = vector.broadcast %cst_55 : f32 to vector<8x10xf32>
    %cst_56 = arith.constant 0.000000e+00 : f32
    %215 = vector.broadcast %cst_56 : f32 to vector<8x10xf32>
    %216 = vector.extract_strided_slice %213 {offsets = [0, 0], sizes = [8, 40], strides = [1, 1]} : vector<16x40xf32> to vector<8x40xf32>
    %cst_57 = arith.constant dense<0.000000e+00> : vector<8x40xf32>
    %217 = tpu.matmul %214, %205, %cst_57 {dimension_numbers = #tpu.dot_dimension_numbers<[1], [0], [0], [1], [0, 0, 1, 1], [], []>} : vector<8x10xf32>, vector<10x40xf32>, vector<8x40xf32> -> vector<8x40xf32>
    %218 = arith.addf %216, %217 : vector<8x40xf32>
    %219 = vector.extract_strided_slice %218 {offsets = [0, 0], sizes = [8, 30], strides = [1, 1]} : vector<8x40xf32> to vector<8x30xf32>
    %220 = arith.negf %219 : vector<8x30xf32>
    %221 = math.exp %220 : vector<8x30xf32>
    %cst_58 = arith.constant 1.000000e+00 : f32
    %222 = vector.broadcast %cst_58 : f32 to vector<8x30xf32>
    %223 = arith.addf %222, %221 : vector<8x30xf32>
    %224 = arith.divf %222, %223 : vector<8x30xf32>
    %225 = vector.extract_strided_slice %218 {offsets = [0, 30], sizes = [8, 10], strides = [1, 1]} : vector<8x40xf32> to vector<8x10xf32>
    %226 = math.tanh %225 : vector<8x10xf32>
    %227 = vector.extract_strided_slice %224 {offsets = [0, 0], sizes = [8, 10], strides = [1, 1]} : vector<8x30xf32> to vector<8x10xf32>
    %228 = vector.extract_strided_slice %224 {offsets = [0, 10], sizes = [8, 10], strides = [1, 1]} : vector<8x30xf32> to vector<8x10xf32>
    %229 = vector.extract_strided_slice %224 {offsets = [0, 20], sizes = [8, 10], strides = [1, 1]} : vector<8x30xf32> to vector<8x10xf32>
    %230 = arith.mulf %228, %215 : vector<8x10xf32>
    %231 = arith.mulf %227, %226 : vector<8x10xf32>
    %232 = arith.addf %230, %231 : vector<8x10xf32>
    %233 = math.tanh %232 : vector<8x10xf32>
    %234 = arith.mulf %229, %233 : vector<8x10xf32>
    %235 = vector.extract_strided_slice %213 {offsets = [8, 0], sizes = [8, 40], strides = [1, 1]} : vector<16x40xf32> to vector<8x40xf32>
    %cst_59 = arith.constant dense<0.000000e+00> : vector<8x40xf32>
    %236 = tpu.matmul %234, %205, %cst_59 {dimension_numbers = #tpu.dot_dimension_numbers<[1], [0], [0], [1], [0, 0, 1, 1], [], []>} : vector<8x10xf32>, vector<10x40xf32>, vector<8x40xf32> -> vector<8x40xf32>
    %237 = arith.addf %235, %236 : vector<8x40xf32>
    %238 = vector.extract_strided_slice %237 {offsets = [0, 0], sizes = [8, 30], strides = [1, 1]} : vector<8x40xf32> to vector<8x30xf32>
    %239 = arith.negf %238 : vector<8x30xf32>
    %240 = math.exp %239 : vector<8x30xf32>
    %cst_60 = arith.constant 1.000000e+00 : f32
    %241 = vector.broadcast %cst_60 : f32 to vector<8x30xf32>
    %242 = arith.addf %241, %240 : vector<8x30xf32>
    %243 = arith.divf %241, %242 : vector<8x30xf32>
    %244 = vector.extract_strided_slice %237 {offsets = [0, 30], sizes = [8, 10], strides = [1, 1]} : vector<8x40xf32> to vector<8x10xf32>
    %245 = math.tanh %244 : vector<8x10xf32>
    %246 = vector.extract_strided_slice %243 {offsets = [0, 0], sizes = [8, 10], strides = [1, 1]} : vector<8x30xf32> to vector<8x10xf32>
    %247 = vector.extract_strided_slice %243 {offsets = [0, 10], sizes = [8, 10], strides = [1, 1]} : vector<8x30xf32> to vector<8x10xf32>
    %248 = vector.extract_strided_slice %243 {offsets = [0, 20], sizes = [8, 10], strides = [1, 1]} : vector<8x30xf32> to vector<8x10xf32>
    %249 = arith.mulf %247, %232 : vector<8x10xf32>
    %250 = arith.mulf %246, %245 : vector<8x10xf32>
    %251 = arith.addf %249, %250 : vector<8x10xf32>
    %252 = math.tanh %251 : vector<8x10xf32>
    %253 = arith.mulf %248, %252 : vector<8x10xf32>
    %254 = vector.extract_strided_slice %234 {offsets = [0, 0], sizes = [8, 5], strides = [1, 1]} : vector<8x10xf32> to vector<8x5xf32>
    %255 = vector.extract_strided_slice %253 {offsets = [0, 5], sizes = [8, 5], strides = [1, 1]} : vector<8x10xf32> to vector<8x5xf32>
    %256 = tpu.concatenate %254, %255 in 1 : vector<8x5xf32>, vector<8x5xf32> -> vector<8x10xf32>
    %257 = vector.extract_strided_slice %253 {offsets = [0, 0], sizes = [8, 5], strides = [1, 1]} : vector<8x10xf32> to vector<8x5xf32>
    %258 = vector.extract_strided_slice %234 {offsets = [0, 5], sizes = [8, 5], strides = [1, 1]} : vector<8x10xf32> to vector<8x5xf32>
    %259 = tpu.concatenate %257, %258 in 1 : vector<8x5xf32>, vector<8x5xf32> -> vector<8x10xf32>
    %c1_61 = arith.constant 1 : index
    %c0_62 = arith.constant 0 : index
    %c0_63 = arith.constant 0 : index
    %260 = vector.load %arg4[%c1_61, %c0_62, %c0_63] : memref<8x20x40xf32, #tpu.memory_space<vmem>>, vector<1x20x40xf32>
    %261 = vector.shape_cast %260 : vector<1x20x40xf32> to vector<20x40xf32>
    %c1_64 = arith.constant 1 : index
    %c0_65 = arith.constant 0 : index
    %c0_66 = arith.constant 0 : index
    %262 = vector.load %arg5[%c1_64, %c0_65, %c0_66] : memref<8x10x40xf32, #tpu.memory_space<vmem>>, vector<1x10x40xf32>
    %263 = vector.shape_cast %262 : vector<1x10x40xf32> to vector<10x40xf32>
    %c1_67 = arith.constant 1 : index
    %c0_68 = arith.constant 0 : index
    %c0_69 = arith.constant 0 : index
    %264 = vector.load %arg6[%c1_67, %c0_68, %c0_69] : memref<8x1x40xf32, #tpu.memory_space<vmem>>, vector<1x1x40xf32>
    %265 = vector.shape_cast %264 : vector<1x1x40xf32> to vector<1x40xf32>
    %266 = tpu.concatenate %256, %259 in 1 : vector<8x10xf32>, vector<8x10xf32> -> vector<8x20xf32>
    %267 = tpu.concatenate %259, %256 in 1 : vector<8x10xf32>, vector<8x10xf32> -> vector<8x20xf32>
    %268 = tpu.concatenate %266, %267 in 0 : vector<8x20xf32>, vector<8x20xf32> -> vector<16x20xf32>
    %cst_70 = arith.constant dense<0.000000e+00> : vector<16x40xf32>
    %269 = tpu.matmul %268, %261, %cst_70 {dimension_numbers = #tpu.dot_dimension_numbers<[1], [0], [0], [1], [0, 0, 1, 1], [], []>} : vector<16x20xf32>, vector<20x40xf32>, vector<16x40xf32> -> vector<16x40xf32>
    %270 = vector.broadcast %265 : vector<1x40xf32> to vector<16x40xf32>
    %271 = arith.addf %269, %270 : vector<16x40xf32>
    %cst_71 = arith.constant 0.000000e+00 : f32
    %272 = vector.broadcast %cst_71 : f32 to vector<8x10xf32>
    %cst_72 = arith.constant 0.000000e+00 : f32
    %273 = vector.broadcast %cst_72 : f32 to vector<8x10xf32>
    %274 = vector.extract_strided_slice %271 {offsets = [0, 0], sizes = [8, 40], strides = [1, 1]} : vector<16x40xf32> to vector<8x40xf32>
    %cst_73 = arith.constant dense<0.000000e+00> : vector<8x40xf32>
    %275 = tpu.matmul %272, %263, %cst_73 {dimension_numbers = #tpu.dot_dimension_numbers<[1], [0], [0], [1], [0, 0, 1, 1], [], []>} : vector<8x10xf32>, vector<10x40xf32>, vector<8x40xf32> -> vector<8x40xf32>
    %276 = arith.addf %274, %275 : vector<8x40xf32>
    %277 = vector.extract_strided_slice %276 {offsets = [0, 0], sizes = [8, 30], strides = [1, 1]} : vector<8x40xf32> to vector<8x30xf32>
    %278 = arith.negf %277 : vector<8x30xf32>
    %279 = math.exp %278 : vector<8x30xf32>
    %cst_74 = arith.constant 1.000000e+00 : f32
    %280 = vector.broadcast %cst_74 : f32 to vector<8x30xf32>
    %281 = arith.addf %280, %279 : vector<8x30xf32>
    %282 = arith.divf %280, %281 : vector<8x30xf32>
    %283 = vector.extract_strided_slice %276 {offsets = [0, 30], sizes = [8, 10], strides = [1, 1]} : vector<8x40xf32> to vector<8x10xf32>
    %284 = math.tanh %283 : vector<8x10xf32>
    %285 = vector.extract_strided_slice %282 {offsets = [0, 0], sizes = [8, 10], strides = [1, 1]} : vector<8x30xf32> to vector<8x10xf32>
    %286 = vector.extract_strided_slice %282 {offsets = [0, 10], sizes = [8, 10], strides = [1, 1]} : vector<8x30xf32> to vector<8x10xf32>
    %287 = vector.extract_strided_slice %282 {offsets = [0, 20], sizes = [8, 10], strides = [1, 1]} : vector<8x30xf32> to vector<8x10xf32>
    %288 = arith.mulf %286, %273 : vector<8x10xf32>
    %289 = arith.mulf %285, %284 : vector<8x10xf32>
    %290 = arith.addf %288, %289 : vector<8x10xf32>
    %291 = math.tanh %290 : vector<8x10xf32>
    %292 = arith.mulf %287, %291 : vector<8x10xf32>
    %293 = vector.extract_strided_slice %271 {offsets = [8, 0], sizes = [8, 40], strides = [1, 1]} : vector<16x40xf32> to vector<8x40xf32>
    %cst_75 = arith.constant dense<0.000000e+00> : vector<8x40xf32>
    %294 = tpu.matmul %292, %263, %cst_75 {dimension_numbers = #tpu.dot_dimension_numbers<[1], [0], [0], [1], [0, 0, 1, 1], [], []>} : vector<8x10xf32>, vector<10x40xf32>, vector<8x40xf32> -> vector<8x40xf32>
    %295 = arith.addf %293, %294 : vector<8x40xf32>
    %296 = vector.extract_strided_slice %295 {offsets = [0, 0], sizes = [8, 30], strides = [1, 1]} : vector<8x40xf32> to vector<8x30xf32>
    %297 = arith.negf %296 : vector<8x30xf32>
    %298 = math.exp %297 : vector<8x30xf32>
    %cst_76 = arith.constant 1.000000e+00 : f32
    %299 = vector.broadcast %cst_76 : f32 to vector<8x30xf32>
    %300 = arith.addf %299, %298 : vector<8x30xf32>
    %301 = arith.divf %299, %300 : vector<8x30xf32>
    %302 = vector.extract_strided_slice %295 {offsets = [0, 30], sizes = [8, 10], strides = [1, 1]} : vector<8x40xf32> to vector<8x10xf32>
    %303 = math.tanh %302 : vector<8x10xf32>
    %304 = vector.extract_strided_slice %301 {offsets = [0, 0], sizes = [8, 10], strides = [1, 1]} : vector<8x30xf32> to vector<8x10xf32>
    %305 = vector.extract_strided_slice %301 {offsets = [0, 10], sizes = [8, 10], strides = [1, 1]} : vector<8x30xf32> to vector<8x10xf32>
    %306 = vector.extract_strided_slice %301 {offsets = [0, 20], sizes = [8, 10], strides = [1, 1]} : vector<8x30xf32> to vector<8x10xf32>
    %307 = arith.mulf %305, %290 : vector<8x10xf32>
    %308 = arith.mulf %304, %303 : vector<8x10xf32>
    %309 = arith.addf %307, %308 : vector<8x10xf32>
    %310 = math.tanh %309 : vector<8x10xf32>
    %311 = arith.mulf %306, %310 : vector<8x10xf32>
    %312 = vector.extract_strided_slice %292 {offsets = [0, 0], sizes = [8, 5], strides = [1, 1]} : vector<8x10xf32> to vector<8x5xf32>
    %313 = vector.extract_strided_slice %311 {offsets = [0, 5], sizes = [8, 5], strides = [1, 1]} : vector<8x10xf32> to vector<8x5xf32>
    %314 = tpu.concatenate %312, %313 in 1 : vector<8x5xf32>, vector<8x5xf32> -> vector<8x10xf32>
    %315 = vector.extract_strided_slice %311 {offsets = [0, 0], sizes = [8, 5], strides = [1, 1]} : vector<8x10xf32> to vector<8x5xf32>
    %316 = vector.extract_strided_slice %292 {offsets = [0, 5], sizes = [8, 5], strides = [1, 1]} : vector<8x10xf32> to vector<8x5xf32>
    %317 = tpu.concatenate %315, %316 in 1 : vector<8x5xf32>, vector<8x5xf32> -> vector<8x10xf32>
    %c2_77 = arith.constant 2 : index
    %c0_78 = arith.constant 0 : index
    %c0_79 = arith.constant 0 : index
    %318 = vector.load %arg4[%c2_77, %c0_78, %c0_79] : memref<8x20x40xf32, #tpu.memory_space<vmem>>, vector<1x20x40xf32>
    %319 = vector.shape_cast %318 : vector<1x20x40xf32> to vector<20x40xf32>
    %c2_80 = arith.constant 2 : index
    %c0_81 = arith.constant 0 : index
    %c0_82 = arith.constant 0 : index
    %320 = vector.load %arg5[%c2_80, %c0_81, %c0_82] : memref<8x10x40xf32, #tpu.memory_space<vmem>>, vector<1x10x40xf32>
    %321 = vector.shape_cast %320 : vector<1x10x40xf32> to vector<10x40xf32>
    %c2_83 = arith.constant 2 : index
    %c0_84 = arith.constant 0 : index
    %c0_85 = arith.constant 0 : index
    %322 = vector.load %arg6[%c2_83, %c0_84, %c0_85] : memref<8x1x40xf32, #tpu.memory_space<vmem>>, vector<1x1x40xf32>
    %323 = vector.shape_cast %322 : vector<1x1x40xf32> to vector<1x40xf32>
    %324 = tpu.concatenate %314, %317 in 1 : vector<8x10xf32>, vector<8x10xf32> -> vector<8x20xf32>
    %325 = tpu.concatenate %317, %314 in 1 : vector<8x10xf32>, vector<8x10xf32> -> vector<8x20xf32>
    %326 = tpu.concatenate %324, %325 in 0 : vector<8x20xf32>, vector<8x20xf32> -> vector<16x20xf32>
    %cst_86 = arith.constant dense<0.000000e+00> : vector<16x40xf32>
    %327 = tpu.matmul %326, %319, %cst_86 {dimension_numbers = #tpu.dot_dimension_numbers<[1], [0], [0], [1], [0, 0, 1, 1], [], []>} : vector<16x20xf32>, vector<20x40xf32>, vector<16x40xf32> -> vector<16x40xf32>
    %328 = vector.broadcast %323 : vector<1x40xf32> to vector<16x40xf32>
    %329 = arith.addf %327, %328 : vector<16x40xf32>
    %cst_87 = arith.constant 0.000000e+00 : f32
    %330 = vector.broadcast %cst_87 : f32 to vector<8x10xf32>
    %cst_88 = arith.constant 0.000000e+00 : f32
    %331 = vector.broadcast %cst_88 : f32 to vector<8x10xf32>
    %332 = vector.extract_strided_slice %329 {offsets = [0, 0], sizes = [8, 40], strides = [1, 1]} : vector<16x40xf32> to vector<8x40xf32>
    %cst_89 = arith.constant dense<0.000000e+00> : vector<8x40xf32>
    %333 = tpu.matmul %330, %321, %cst_89 {dimension_numbers = #tpu.dot_dimension_numbers<[1], [0], [0], [1], [0, 0, 1, 1], [], []>} : vector<8x10xf32>, vector<10x40xf32>, vector<8x40xf32> -> vector<8x40xf32>
    %334 = arith.addf %332, %333 : vector<8x40xf32>
    %335 = vector.extract_strided_slice %334 {offsets = [0, 0], sizes = [8, 30], strides = [1, 1]} : vector<8x40xf32> to vector<8x30xf32>
    %336 = arith.negf %335 : vector<8x30xf32>
    %337 = math.exp %336 : vector<8x30xf32>
    %cst_90 = arith.constant 1.000000e+00 : f32
    %338 = vector.broadcast %cst_90 : f32 to vector<8x30xf32>
    %339 = arith.addf %338, %337 : vector<8x30xf32>
    %340 = arith.divf %338, %339 : vector<8x30xf32>
    %341 = vector.extract_strided_slice %334 {offsets = [0, 30], sizes = [8, 10], strides = [1, 1]} : vector<8x40xf32> to vector<8x10xf32>
    %342 = math.tanh %341 : vector<8x10xf32>
    %343 = vector.extract_strided_slice %340 {offsets = [0, 0], sizes = [8, 10], strides = [1, 1]} : vector<8x30xf32> to vector<8x10xf32>
    %344 = vector.extract_strided_slice %340 {offsets = [0, 10], sizes = [8, 10], strides = [1, 1]} : vector<8x30xf32> to vector<8x10xf32>
    %345 = vector.extract_strided_slice %340 {offsets = [0, 20], sizes = [8, 10], strides = [1, 1]} : vector<8x30xf32> to vector<8x10xf32>
    %346 = arith.mulf %344, %331 : vector<8x10xf32>
    %347 = arith.mulf %343, %342 : vector<8x10xf32>
    %348 = arith.addf %346, %347 : vector<8x10xf32>
    %349 = math.tanh %348 : vector<8x10xf32>
    %350 = arith.mulf %345, %349 : vector<8x10xf32>
    %351 = vector.extract_strided_slice %329 {offsets = [8, 0], sizes = [8, 40], strides = [1, 1]} : vector<16x40xf32> to vector<8x40xf32>
    %cst_91 = arith.constant dense<0.000000e+00> : vector<8x40xf32>
    %352 = tpu.matmul %350, %321, %cst_91 {dimension_numbers = #tpu.dot_dimension_numbers<[1], [0], [0], [1], [0, 0, 1, 1], [], []>} : vector<8x10xf32>, vector<10x40xf32>, vector<8x40xf32> -> vector<8x40xf32>
    %353 = arith.addf %351, %352 : vector<8x40xf32>
    %354 = vector.extract_strided_slice %353 {offsets = [0, 0], sizes = [8, 30], strides = [1, 1]} : vector<8x40xf32> to vector<8x30xf32>
    %355 = arith.negf %354 : vector<8x30xf32>
    %356 = math.exp %355 : vector<8x30xf32>
    %cst_92 = arith.constant 1.000000e+00 : f32
    %357 = vector.broadcast %cst_92 : f32 to vector<8x30xf32>
    %358 = arith.addf %357, %356 : vector<8x30xf32>
    %359 = arith.divf %357, %358 : vector<8x30xf32>
    %360 = vector.extract_strided_slice %353 {offsets = [0, 30], sizes = [8, 10], strides = [1, 1]} : vector<8x40xf32> to vector<8x10xf32>
    %361 = math.tanh %360 : vector<8x10xf32>
    %362 = vector.extract_strided_slice %359 {offsets = [0, 0], sizes = [8, 10], strides = [1, 1]} : vector<8x30xf32> to vector<8x10xf32>
    %363 = vector.extract_strided_slice %359 {offsets = [0, 10], sizes = [8, 10], strides = [1, 1]} : vector<8x30xf32> to vector<8x10xf32>
    %364 = vector.extract_strided_slice %359 {offsets = [0, 20], sizes = [8, 10], strides = [1, 1]} : vector<8x30xf32> to vector<8x10xf32>
    %365 = arith.mulf %363, %348 : vector<8x10xf32>
    %366 = arith.mulf %362, %361 : vector<8x10xf32>
    %367 = arith.addf %365, %366 : vector<8x10xf32>
    %368 = math.tanh %367 : vector<8x10xf32>
    %369 = arith.mulf %364, %368 : vector<8x10xf32>
    %370 = vector.extract_strided_slice %350 {offsets = [0, 0], sizes = [8, 5], strides = [1, 1]} : vector<8x10xf32> to vector<8x5xf32>
    %371 = vector.extract_strided_slice %369 {offsets = [0, 5], sizes = [8, 5], strides = [1, 1]} : vector<8x10xf32> to vector<8x5xf32>
    %372 = tpu.concatenate %370, %371 in 1 : vector<8x5xf32>, vector<8x5xf32> -> vector<8x10xf32>
    %373 = vector.extract_strided_slice %369 {offsets = [0, 0], sizes = [8, 5], strides = [1, 1]} : vector<8x10xf32> to vector<8x5xf32>
    %374 = vector.extract_strided_slice %350 {offsets = [0, 5], sizes = [8, 5], strides = [1, 1]} : vector<8x10xf32> to vector<8x5xf32>
    %375 = tpu.concatenate %373, %374 in 1 : vector<8x5xf32>, vector<8x5xf32> -> vector<8x10xf32>
    %c3_93 = arith.constant 3 : index
    %c0_94 = arith.constant 0 : index
    %c0_95 = arith.constant 0 : index
    %376 = vector.load %arg4[%c3_93, %c0_94, %c0_95] : memref<8x20x40xf32, #tpu.memory_space<vmem>>, vector<1x20x40xf32>
    %377 = vector.shape_cast %376 : vector<1x20x40xf32> to vector<20x40xf32>
    %c3_96 = arith.constant 3 : index
    %c0_97 = arith.constant 0 : index
    %c0_98 = arith.constant 0 : index
    %378 = vector.load %arg5[%c3_96, %c0_97, %c0_98] : memref<8x10x40xf32, #tpu.memory_space<vmem>>, vector<1x10x40xf32>
    %379 = vector.shape_cast %378 : vector<1x10x40xf32> to vector<10x40xf32>
    %c3_99 = arith.constant 3 : index
    %c0_100 = arith.constant 0 : index
    %c0_101 = arith.constant 0 : index
    %380 = vector.load %arg6[%c3_99, %c0_100, %c0_101] : memref<8x1x40xf32, #tpu.memory_space<vmem>>, vector<1x1x40xf32>
    %381 = vector.shape_cast %380 : vector<1x1x40xf32> to vector<1x40xf32>
    %382 = tpu.concatenate %372, %375 in 1 : vector<8x10xf32>, vector<8x10xf32> -> vector<8x20xf32>
    %383 = tpu.concatenate %375, %372 in 1 : vector<8x10xf32>, vector<8x10xf32> -> vector<8x20xf32>
    %384 = tpu.concatenate %382, %383 in 0 : vector<8x20xf32>, vector<8x20xf32> -> vector<16x20xf32>
    %cst_102 = arith.constant dense<0.000000e+00> : vector<16x40xf32>
    %385 = tpu.matmul %384, %377, %cst_102 {dimension_numbers = #tpu.dot_dimension_numbers<[1], [0], [0], [1], [0, 0, 1, 1], [], []>} : vector<16x20xf32>, vector<20x40xf32>, vector<16x40xf32> -> vector<16x40xf32>
    %386 = vector.broadcast %381 : vector<1x40xf32> to vector<16x40xf32>
    %387 = arith.addf %385, %386 : vector<16x40xf32>
    %cst_103 = arith.constant 0.000000e+00 : f32
    %388 = vector.broadcast %cst_103 : f32 to vector<8x10xf32>
    %cst_104 = arith.constant 0.000000e+00 : f32
    %389 = vector.broadcast %cst_104 : f32 to vector<8x10xf32>
    %390 = vector.extract_strided_slice %387 {offsets = [0, 0], sizes = [8, 40], strides = [1, 1]} : vector<16x40xf32> to vector<8x40xf32>
    %cst_105 = arith.constant dense<0.000000e+00> : vector<8x40xf32>
    %391 = tpu.matmul %388, %379, %cst_105 {dimension_numbers = #tpu.dot_dimension_numbers<[1], [0], [0], [1], [0, 0, 1, 1], [], []>} : vector<8x10xf32>, vector<10x40xf32>, vector<8x40xf32> -> vector<8x40xf32>
    %392 = arith.addf %390, %391 : vector<8x40xf32>
    %393 = vector.extract_strided_slice %392 {offsets = [0, 0], sizes = [8, 30], strides = [1, 1]} : vector<8x40xf32> to vector<8x30xf32>
    %394 = arith.negf %393 : vector<8x30xf32>
    %395 = math.exp %394 : vector<8x30xf32>
    %cst_106 = arith.constant 1.000000e+00 : f32
    %396 = vector.broadcast %cst_106 : f32 to vector<8x30xf32>
    %397 = arith.addf %396, %395 : vector<8x30xf32>
    %398 = arith.divf %396, %397 : vector<8x30xf32>
    %399 = vector.extract_strided_slice %392 {offsets = [0, 30], sizes = [8, 10], strides = [1, 1]} : vector<8x40xf32> to vector<8x10xf32>
    %400 = math.tanh %399 : vector<8x10xf32>
    %401 = vector.extract_strided_slice %398 {offsets = [0, 0], sizes = [8, 10], strides = [1, 1]} : vector<8x30xf32> to vector<8x10xf32>
    %402 = vector.extract_strided_slice %398 {offsets = [0, 10], sizes = [8, 10], strides = [1, 1]} : vector<8x30xf32> to vector<8x10xf32>
    %403 = vector.extract_strided_slice %398 {offsets = [0, 20], sizes = [8, 10], strides = [1, 1]} : vector<8x30xf32> to vector<8x10xf32>
    %404 = arith.mulf %402, %389 : vector<8x10xf32>
    %405 = arith.mulf %401, %400 : vector<8x10xf32>
    %406 = arith.addf %404, %405 : vector<8x10xf32>
    %407 = math.tanh %406 : vector<8x10xf32>
    %408 = arith.mulf %403, %407 : vector<8x10xf32>
    %409 = vector.extract_strided_slice %387 {offsets = [8, 0], sizes = [8, 40], strides = [1, 1]} : vector<16x40xf32> to vector<8x40xf32>
    %cst_107 = arith.constant dense<0.000000e+00> : vector<8x40xf32>
    %410 = tpu.matmul %408, %379, %cst_107 {dimension_numbers = #tpu.dot_dimension_numbers<[1], [0], [0], [1], [0, 0, 1, 1], [], []>} : vector<8x10xf32>, vector<10x40xf32>, vector<8x40xf32> -> vector<8x40xf32>
    %411 = arith.addf %409, %410 : vector<8x40xf32>
    %412 = vector.extract_strided_slice %411 {offsets = [0, 0], sizes = [8, 30], strides = [1, 1]} : vector<8x40xf32> to vector<8x30xf32>
    %413 = arith.negf %412 : vector<8x30xf32>
    %414 = math.exp %413 : vector<8x30xf32>
    %cst_108 = arith.constant 1.000000e+00 : f32
    %415 = vector.broadcast %cst_108 : f32 to vector<8x30xf32>
    %416 = arith.addf %415, %414 : vector<8x30xf32>
    %417 = arith.divf %415, %416 : vector<8x30xf32>
    %418 = vector.extract_strided_slice %411 {offsets = [0, 30], sizes = [8, 10], strides = [1, 1]} : vector<8x40xf32> to vector<8x10xf32>
    %419 = math.tanh %418 : vector<8x10xf32>
    %420 = vector.extract_strided_slice %417 {offsets = [0, 0], sizes = [8, 10], strides = [1, 1]} : vector<8x30xf32> to vector<8x10xf32>
    %421 = vector.extract_strided_slice %417 {offsets = [0, 10], sizes = [8, 10], strides = [1, 1]} : vector<8x30xf32> to vector<8x10xf32>
    %422 = vector.extract_strided_slice %417 {offsets = [0, 20], sizes = [8, 10], strides = [1, 1]} : vector<8x30xf32> to vector<8x10xf32>
    %423 = arith.mulf %421, %406 : vector<8x10xf32>
    %424 = arith.mulf %420, %419 : vector<8x10xf32>
    %425 = arith.addf %423, %424 : vector<8x10xf32>
    %426 = math.tanh %425 : vector<8x10xf32>
    %427 = arith.mulf %422, %426 : vector<8x10xf32>
    %428 = vector.extract_strided_slice %408 {offsets = [0, 0], sizes = [8, 5], strides = [1, 1]} : vector<8x10xf32> to vector<8x5xf32>
    %429 = vector.extract_strided_slice %427 {offsets = [0, 5], sizes = [8, 5], strides = [1, 1]} : vector<8x10xf32> to vector<8x5xf32>
    %430 = tpu.concatenate %428, %429 in 1 : vector<8x5xf32>, vector<8x5xf32> -> vector<8x10xf32>
    %431 = vector.extract_strided_slice %427 {offsets = [0, 0], sizes = [8, 5], strides = [1, 1]} : vector<8x10xf32> to vector<8x5xf32>
    %432 = vector.extract_strided_slice %408 {offsets = [0, 5], sizes = [8, 5], strides = [1, 1]} : vector<8x10xf32> to vector<8x5xf32>
    %433 = tpu.concatenate %431, %432 in 1 : vector<8x5xf32>, vector<8x5xf32> -> vector<8x10xf32>
    %c4_109 = arith.constant 4 : index
    %c0_110 = arith.constant 0 : index
    %c0_111 = arith.constant 0 : index
    %434 = vector.load %arg4[%c4_109, %c0_110, %c0_111] : memref<8x20x40xf32, #tpu.memory_space<vmem>>, vector<1x20x40xf32>
    %435 = vector.shape_cast %434 : vector<1x20x40xf32> to vector<20x40xf32>
    %c4_112 = arith.constant 4 : index
    %c0_113 = arith.constant 0 : index
    %c0_114 = arith.constant 0 : index
    %436 = vector.load %arg5[%c4_112, %c0_113, %c0_114] : memref<8x10x40xf32, #tpu.memory_space<vmem>>, vector<1x10x40xf32>
    %437 = vector.shape_cast %436 : vector<1x10x40xf32> to vector<10x40xf32>
    %c4_115 = arith.constant 4 : index
    %c0_116 = arith.constant 0 : index
    %c0_117 = arith.constant 0 : index
    %438 = vector.load %arg6[%c4_115, %c0_116, %c0_117] : memref<8x1x40xf32, #tpu.memory_space<vmem>>, vector<1x1x40xf32>
    %439 = vector.shape_cast %438 : vector<1x1x40xf32> to vector<1x40xf32>
    %440 = tpu.concatenate %430, %433 in 1 : vector<8x10xf32>, vector<8x10xf32> -> vector<8x20xf32>
    %441 = tpu.concatenate %433, %430 in 1 : vector<8x10xf32>, vector<8x10xf32> -> vector<8x20xf32>
    %442 = tpu.concatenate %440, %441 in 0 : vector<8x20xf32>, vector<8x20xf32> -> vector<16x20xf32>
    %cst_118 = arith.constant dense<0.000000e+00> : vector<16x40xf32>
    %443 = tpu.matmul %442, %435, %cst_118 {dimension_numbers = #tpu.dot_dimension_numbers<[1], [0], [0], [1], [0, 0, 1, 1], [], []>} : vector<16x20xf32>, vector<20x40xf32>, vector<16x40xf32> -> vector<16x40xf32>
    %444 = vector.broadcast %439 : vector<1x40xf32> to vector<16x40xf32>
    %445 = arith.addf %443, %444 : vector<16x40xf32>
    %cst_119 = arith.constant 0.000000e+00 : f32
    %446 = vector.broadcast %cst_119 : f32 to vector<8x10xf32>
    %cst_120 = arith.constant 0.000000e+00 : f32
    %447 = vector.broadcast %cst_120 : f32 to vector<8x10xf32>
    %448 = vector.extract_strided_slice %445 {offsets = [0, 0], sizes = [8, 40], strides = [1, 1]} : vector<16x40xf32> to vector<8x40xf32>
    %cst_121 = arith.constant dense<0.000000e+00> : vector<8x40xf32>
    %449 = tpu.matmul %446, %437, %cst_121 {dimension_numbers = #tpu.dot_dimension_numbers<[1], [0], [0], [1], [0, 0, 1, 1], [], []>} : vector<8x10xf32>, vector<10x40xf32>, vector<8x40xf32> -> vector<8x40xf32>
    %450 = arith.addf %448, %449 : vector<8x40xf32>
    %451 = vector.extract_strided_slice %450 {offsets = [0, 0], sizes = [8, 30], strides = [1, 1]} : vector<8x40xf32> to vector<8x30xf32>
    %452 = arith.negf %451 : vector<8x30xf32>
    %453 = math.exp %452 : vector<8x30xf32>
    %cst_122 = arith.constant 1.000000e+00 : f32
    %454 = vector.broadcast %cst_122 : f32 to vector<8x30xf32>
    %455 = arith.addf %454, %453 : vector<8x30xf32>
    %456 = arith.divf %454, %455 : vector<8x30xf32>
    %457 = vector.extract_strided_slice %450 {offsets = [0, 30], sizes = [8, 10], strides = [1, 1]} : vector<8x40xf32> to vector<8x10xf32>
    %458 = math.tanh %457 : vector<8x10xf32>
    %459 = vector.extract_strided_slice %456 {offsets = [0, 0], sizes = [8, 10], strides = [1, 1]} : vector<8x30xf32> to vector<8x10xf32>
    %460 = vector.extract_strided_slice %456 {offsets = [0, 10], sizes = [8, 10], strides = [1, 1]} : vector<8x30xf32> to vector<8x10xf32>
    %461 = vector.extract_strided_slice %456 {offsets = [0, 20], sizes = [8, 10], strides = [1, 1]} : vector<8x30xf32> to vector<8x10xf32>
    %462 = arith.mulf %460, %447 : vector<8x10xf32>
    %463 = arith.mulf %459, %458 : vector<8x10xf32>
    %464 = arith.addf %462, %463 : vector<8x10xf32>
    %465 = math.tanh %464 : vector<8x10xf32>
    %466 = arith.mulf %461, %465 : vector<8x10xf32>
    %467 = vector.extract_strided_slice %445 {offsets = [8, 0], sizes = [8, 40], strides = [1, 1]} : vector<16x40xf32> to vector<8x40xf32>
    %cst_123 = arith.constant dense<0.000000e+00> : vector<8x40xf32>
    %468 = tpu.matmul %466, %437, %cst_123 {dimension_numbers = #tpu.dot_dimension_numbers<[1], [0], [0], [1], [0, 0, 1, 1], [], []>} : vector<8x10xf32>, vector<10x40xf32>, vector<8x40xf32> -> vector<8x40xf32>
    %469 = arith.addf %467, %468 : vector<8x40xf32>
    %470 = vector.extract_strided_slice %469 {offsets = [0, 0], sizes = [8, 30], strides = [1, 1]} : vector<8x40xf32> to vector<8x30xf32>
    %471 = arith.negf %470 : vector<8x30xf32>
    %472 = math.exp %471 : vector<8x30xf32>
    %cst_124 = arith.constant 1.000000e+00 : f32
    %473 = vector.broadcast %cst_124 : f32 to vector<8x30xf32>
    %474 = arith.addf %473, %472 : vector<8x30xf32>
    %475 = arith.divf %473, %474 : vector<8x30xf32>
    %476 = vector.extract_strided_slice %469 {offsets = [0, 30], sizes = [8, 10], strides = [1, 1]} : vector<8x40xf32> to vector<8x10xf32>
    %477 = math.tanh %476 : vector<8x10xf32>
    %478 = vector.extract_strided_slice %475 {offsets = [0, 0], sizes = [8, 10], strides = [1, 1]} : vector<8x30xf32> to vector<8x10xf32>
    %479 = vector.extract_strided_slice %475 {offsets = [0, 10], sizes = [8, 10], strides = [1, 1]} : vector<8x30xf32> to vector<8x10xf32>
    %480 = vector.extract_strided_slice %475 {offsets = [0, 20], sizes = [8, 10], strides = [1, 1]} : vector<8x30xf32> to vector<8x10xf32>
    %481 = arith.mulf %479, %464 : vector<8x10xf32>
    %482 = arith.mulf %478, %477 : vector<8x10xf32>
    %483 = arith.addf %481, %482 : vector<8x10xf32>
    %484 = math.tanh %483 : vector<8x10xf32>
    %485 = arith.mulf %480, %484 : vector<8x10xf32>
    %486 = vector.extract_strided_slice %466 {offsets = [0, 0], sizes = [8, 5], strides = [1, 1]} : vector<8x10xf32> to vector<8x5xf32>
    %487 = vector.extract_strided_slice %485 {offsets = [0, 5], sizes = [8, 5], strides = [1, 1]} : vector<8x10xf32> to vector<8x5xf32>
    %488 = tpu.concatenate %486, %487 in 1 : vector<8x5xf32>, vector<8x5xf32> -> vector<8x10xf32>
    %489 = vector.extract_strided_slice %485 {offsets = [0, 0], sizes = [8, 5], strides = [1, 1]} : vector<8x10xf32> to vector<8x5xf32>
    %490 = vector.extract_strided_slice %466 {offsets = [0, 5], sizes = [8, 5], strides = [1, 1]} : vector<8x10xf32> to vector<8x5xf32>
    %491 = tpu.concatenate %489, %490 in 1 : vector<8x5xf32>, vector<8x5xf32> -> vector<8x10xf32>
    %c5_125 = arith.constant 5 : index
    %c0_126 = arith.constant 0 : index
    %c0_127 = arith.constant 0 : index
    %492 = vector.load %arg4[%c5_125, %c0_126, %c0_127] : memref<8x20x40xf32, #tpu.memory_space<vmem>>, vector<1x20x40xf32>
    %493 = vector.shape_cast %492 : vector<1x20x40xf32> to vector<20x40xf32>
    %c5_128 = arith.constant 5 : index
    %c0_129 = arith.constant 0 : index
    %c0_130 = arith.constant 0 : index
    %494 = vector.load %arg5[%c5_128, %c0_129, %c0_130] : memref<8x10x40xf32, #tpu.memory_space<vmem>>, vector<1x10x40xf32>
    %495 = vector.shape_cast %494 : vector<1x10x40xf32> to vector<10x40xf32>
    %c5_131 = arith.constant 5 : index
    %c0_132 = arith.constant 0 : index
    %c0_133 = arith.constant 0 : index
    %496 = vector.load %arg6[%c5_131, %c0_132, %c0_133] : memref<8x1x40xf32, #tpu.memory_space<vmem>>, vector<1x1x40xf32>
    %497 = vector.shape_cast %496 : vector<1x1x40xf32> to vector<1x40xf32>
    %498 = tpu.concatenate %488, %491 in 1 : vector<8x10xf32>, vector<8x10xf32> -> vector<8x20xf32>
    %499 = tpu.concatenate %491, %488 in 1 : vector<8x10xf32>, vector<8x10xf32> -> vector<8x20xf32>
    %500 = tpu.concatenate %498, %499 in 0 : vector<8x20xf32>, vector<8x20xf32> -> vector<16x20xf32>
    %cst_134 = arith.constant dense<0.000000e+00> : vector<16x40xf32>
    %501 = tpu.matmul %500, %493, %cst_134 {dimension_numbers = #tpu.dot_dimension_numbers<[1], [0], [0], [1], [0, 0, 1, 1], [], []>} : vector<16x20xf32>, vector<20x40xf32>, vector<16x40xf32> -> vector<16x40xf32>
    %502 = vector.broadcast %497 : vector<1x40xf32> to vector<16x40xf32>
    %503 = arith.addf %501, %502 : vector<16x40xf32>
    %cst_135 = arith.constant 0.000000e+00 : f32
    %504 = vector.broadcast %cst_135 : f32 to vector<8x10xf32>
    %cst_136 = arith.constant 0.000000e+00 : f32
    %505 = vector.broadcast %cst_136 : f32 to vector<8x10xf32>
    %506 = vector.extract_strided_slice %503 {offsets = [0, 0], sizes = [8, 40], strides = [1, 1]} : vector<16x40xf32> to vector<8x40xf32>
    %cst_137 = arith.constant dense<0.000000e+00> : vector<8x40xf32>
    %507 = tpu.matmul %504, %495, %cst_137 {dimension_numbers = #tpu.dot_dimension_numbers<[1], [0], [0], [1], [0, 0, 1, 1], [], []>} : vector<8x10xf32>, vector<10x40xf32>, vector<8x40xf32> -> vector<8x40xf32>
    %508 = arith.addf %506, %507 : vector<8x40xf32>
    %509 = vector.extract_strided_slice %508 {offsets = [0, 0], sizes = [8, 30], strides = [1, 1]} : vector<8x40xf32> to vector<8x30xf32>
    %510 = arith.negf %509 : vector<8x30xf32>
    %511 = math.exp %510 : vector<8x30xf32>
    %cst_138 = arith.constant 1.000000e+00 : f32
    %512 = vector.broadcast %cst_138 : f32 to vector<8x30xf32>
    %513 = arith.addf %512, %511 : vector<8x30xf32>
    %514 = arith.divf %512, %513 : vector<8x30xf32>
    %515 = vector.extract_strided_slice %508 {offsets = [0, 30], sizes = [8, 10], strides = [1, 1]} : vector<8x40xf32> to vector<8x10xf32>
    %516 = math.tanh %515 : vector<8x10xf32>
    %517 = vector.extract_strided_slice %514 {offsets = [0, 0], sizes = [8, 10], strides = [1, 1]} : vector<8x30xf32> to vector<8x10xf32>
    %518 = vector.extract_strided_slice %514 {offsets = [0, 10], sizes = [8, 10], strides = [1, 1]} : vector<8x30xf32> to vector<8x10xf32>
    %519 = vector.extract_strided_slice %514 {offsets = [0, 20], sizes = [8, 10], strides = [1, 1]} : vector<8x30xf32> to vector<8x10xf32>
    %520 = arith.mulf %518, %505 : vector<8x10xf32>
    %521 = arith.mulf %517, %516 : vector<8x10xf32>
    %522 = arith.addf %520, %521 : vector<8x10xf32>
    %523 = math.tanh %522 : vector<8x10xf32>
    %524 = arith.mulf %519, %523 : vector<8x10xf32>
    %525 = vector.extract_strided_slice %503 {offsets = [8, 0], sizes = [8, 40], strides = [1, 1]} : vector<16x40xf32> to vector<8x40xf32>
    %cst_139 = arith.constant dense<0.000000e+00> : vector<8x40xf32>
    %526 = tpu.matmul %524, %495, %cst_139 {dimension_numbers = #tpu.dot_dimension_numbers<[1], [0], [0], [1], [0, 0, 1, 1], [], []>} : vector<8x10xf32>, vector<10x40xf32>, vector<8x40xf32> -> vector<8x40xf32>
    %527 = arith.addf %525, %526 : vector<8x40xf32>
    %528 = vector.extract_strided_slice %527 {offsets = [0, 0], sizes = [8, 30], strides = [1, 1]} : vector<8x40xf32> to vector<8x30xf32>
    %529 = arith.negf %528 : vector<8x30xf32>
    %530 = math.exp %529 : vector<8x30xf32>
    %cst_140 = arith.constant 1.000000e+00 : f32
    %531 = vector.broadcast %cst_140 : f32 to vector<8x30xf32>
    %532 = arith.addf %531, %530 : vector<8x30xf32>
    %533 = arith.divf %531, %532 : vector<8x30xf32>
    %534 = vector.extract_strided_slice %527 {offsets = [0, 30], sizes = [8, 10], strides = [1, 1]} : vector<8x40xf32> to vector<8x10xf32>
    %535 = math.tanh %534 : vector<8x10xf32>
    %536 = vector.extract_strided_slice %533 {offsets = [0, 0], sizes = [8, 10], strides = [1, 1]} : vector<8x30xf32> to vector<8x10xf32>
    %537 = vector.extract_strided_slice %533 {offsets = [0, 10], sizes = [8, 10], strides = [1, 1]} : vector<8x30xf32> to vector<8x10xf32>
    %538 = vector.extract_strided_slice %533 {offsets = [0, 20], sizes = [8, 10], strides = [1, 1]} : vector<8x30xf32> to vector<8x10xf32>
    %539 = arith.mulf %537, %522 : vector<8x10xf32>
    %540 = arith.mulf %536, %535 : vector<8x10xf32>
    %541 = arith.addf %539, %540 : vector<8x10xf32>
    %542 = math.tanh %541 : vector<8x10xf32>
    %543 = arith.mulf %538, %542 : vector<8x10xf32>
    %544 = vector.extract_strided_slice %524 {offsets = [0, 0], sizes = [8, 5], strides = [1, 1]} : vector<8x10xf32> to vector<8x5xf32>
    %545 = vector.extract_strided_slice %543 {offsets = [0, 5], sizes = [8, 5], strides = [1, 1]} : vector<8x10xf32> to vector<8x5xf32>
    %546 = tpu.concatenate %544, %545 in 1 : vector<8x5xf32>, vector<8x5xf32> -> vector<8x10xf32>
    %547 = vector.extract_strided_slice %543 {offsets = [0, 0], sizes = [8, 5], strides = [1, 1]} : vector<8x10xf32> to vector<8x5xf32>
    %548 = vector.extract_strided_slice %524 {offsets = [0, 5], sizes = [8, 5], strides = [1, 1]} : vector<8x10xf32> to vector<8x5xf32>
    %549 = tpu.concatenate %547, %548 in 1 : vector<8x5xf32>, vector<8x5xf32> -> vector<8x10xf32>
    %c6_141 = arith.constant 6 : index
    %c0_142 = arith.constant 0 : index
    %c0_143 = arith.constant 0 : index
    %550 = vector.load %arg4[%c6_141, %c0_142, %c0_143] : memref<8x20x40xf32, #tpu.memory_space<vmem>>, vector<1x20x40xf32>
    %551 = vector.shape_cast %550 : vector<1x20x40xf32> to vector<20x40xf32>
    %c6_144 = arith.constant 6 : index
    %c0_145 = arith.constant 0 : index
    %c0_146 = arith.constant 0 : index
    %552 = vector.load %arg5[%c6_144, %c0_145, %c0_146] : memref<8x10x40xf32, #tpu.memory_space<vmem>>, vector<1x10x40xf32>
    %553 = vector.shape_cast %552 : vector<1x10x40xf32> to vector<10x40xf32>
    %c6_147 = arith.constant 6 : index
    %c0_148 = arith.constant 0 : index
    %c0_149 = arith.constant 0 : index
    %554 = vector.load %arg6[%c6_147, %c0_148, %c0_149] : memref<8x1x40xf32, #tpu.memory_space<vmem>>, vector<1x1x40xf32>
    %555 = vector.shape_cast %554 : vector<1x1x40xf32> to vector<1x40xf32>
    %556 = tpu.concatenate %546, %549 in 1 : vector<8x10xf32>, vector<8x10xf32> -> vector<8x20xf32>
    %557 = tpu.concatenate %549, %546 in 1 : vector<8x10xf32>, vector<8x10xf32> -> vector<8x20xf32>
    %558 = tpu.concatenate %556, %557 in 0 : vector<8x20xf32>, vector<8x20xf32> -> vector<16x20xf32>
    %cst_150 = arith.constant dense<0.000000e+00> : vector<16x40xf32>
    %559 = tpu.matmul %558, %551, %cst_150 {dimension_numbers = #tpu.dot_dimension_numbers<[1], [0], [0], [1], [0, 0, 1, 1], [], []>} : vector<16x20xf32>, vector<20x40xf32>, vector<16x40xf32> -> vector<16x40xf32>
    %560 = vector.broadcast %555 : vector<1x40xf32> to vector<16x40xf32>
    %561 = arith.addf %559, %560 : vector<16x40xf32>
    %cst_151 = arith.constant 0.000000e+00 : f32
    %562 = vector.broadcast %cst_151 : f32 to vector<8x10xf32>
    %cst_152 = arith.constant 0.000000e+00 : f32
    %563 = vector.broadcast %cst_152 : f32 to vector<8x10xf32>
    %564 = vector.extract_strided_slice %561 {offsets = [0, 0], sizes = [8, 40], strides = [1, 1]} : vector<16x40xf32> to vector<8x40xf32>
    %cst_153 = arith.constant dense<0.000000e+00> : vector<8x40xf32>
    %565 = tpu.matmul %562, %553, %cst_153 {dimension_numbers = #tpu.dot_dimension_numbers<[1], [0], [0], [1], [0, 0, 1, 1], [], []>} : vector<8x10xf32>, vector<10x40xf32>, vector<8x40xf32> -> vector<8x40xf32>
    %566 = arith.addf %564, %565 : vector<8x40xf32>
    %567 = vector.extract_strided_slice %566 {offsets = [0, 0], sizes = [8, 30], strides = [1, 1]} : vector<8x40xf32> to vector<8x30xf32>
    %568 = arith.negf %567 : vector<8x30xf32>
    %569 = math.exp %568 : vector<8x30xf32>
    %cst_154 = arith.constant 1.000000e+00 : f32
    %570 = vector.broadcast %cst_154 : f32 to vector<8x30xf32>
    %571 = arith.addf %570, %569 : vector<8x30xf32>
    %572 = arith.divf %570, %571 : vector<8x30xf32>
    %573 = vector.extract_strided_slice %566 {offsets = [0, 30], sizes = [8, 10], strides = [1, 1]} : vector<8x40xf32> to vector<8x10xf32>
    %574 = math.tanh %573 : vector<8x10xf32>
    %575 = vector.extract_strided_slice %572 {offsets = [0, 0], sizes = [8, 10], strides = [1, 1]} : vector<8x30xf32> to vector<8x10xf32>
    %576 = vector.extract_strided_slice %572 {offsets = [0, 10], sizes = [8, 10], strides = [1, 1]} : vector<8x30xf32> to vector<8x10xf32>
    %577 = vector.extract_strided_slice %572 {offsets = [0, 20], sizes = [8, 10], strides = [1, 1]} : vector<8x30xf32> to vector<8x10xf32>
    %578 = arith.mulf %576, %563 : vector<8x10xf32>
    %579 = arith.mulf %575, %574 : vector<8x10xf32>
    %580 = arith.addf %578, %579 : vector<8x10xf32>
    %581 = math.tanh %580 : vector<8x10xf32>
    %582 = arith.mulf %577, %581 : vector<8x10xf32>
    %583 = vector.extract_strided_slice %561 {offsets = [8, 0], sizes = [8, 40], strides = [1, 1]} : vector<16x40xf32> to vector<8x40xf32>
    %cst_155 = arith.constant dense<0.000000e+00> : vector<8x40xf32>
    %584 = tpu.matmul %582, %553, %cst_155 {dimension_numbers = #tpu.dot_dimension_numbers<[1], [0], [0], [1], [0, 0, 1, 1], [], []>} : vector<8x10xf32>, vector<10x40xf32>, vector<8x40xf32> -> vector<8x40xf32>
    %585 = arith.addf %583, %584 : vector<8x40xf32>
    %586 = vector.extract_strided_slice %585 {offsets = [0, 0], sizes = [8, 30], strides = [1, 1]} : vector<8x40xf32> to vector<8x30xf32>
    %587 = arith.negf %586 : vector<8x30xf32>
    %588 = math.exp %587 : vector<8x30xf32>
    %cst_156 = arith.constant 1.000000e+00 : f32
    %589 = vector.broadcast %cst_156 : f32 to vector<8x30xf32>
    %590 = arith.addf %589, %588 : vector<8x30xf32>
    %591 = arith.divf %589, %590 : vector<8x30xf32>
    %592 = vector.extract_strided_slice %585 {offsets = [0, 30], sizes = [8, 10], strides = [1, 1]} : vector<8x40xf32> to vector<8x10xf32>
    %593 = math.tanh %592 : vector<8x10xf32>
    %594 = vector.extract_strided_slice %591 {offsets = [0, 0], sizes = [8, 10], strides = [1, 1]} : vector<8x30xf32> to vector<8x10xf32>
    %595 = vector.extract_strided_slice %591 {offsets = [0, 10], sizes = [8, 10], strides = [1, 1]} : vector<8x30xf32> to vector<8x10xf32>
    %596 = vector.extract_strided_slice %591 {offsets = [0, 20], sizes = [8, 10], strides = [1, 1]} : vector<8x30xf32> to vector<8x10xf32>
    %597 = arith.mulf %595, %580 : vector<8x10xf32>
    %598 = arith.mulf %594, %593 : vector<8x10xf32>
    %599 = arith.addf %597, %598 : vector<8x10xf32>
    %600 = math.tanh %599 : vector<8x10xf32>
    %601 = arith.mulf %596, %600 : vector<8x10xf32>
    %602 = vector.extract_strided_slice %582 {offsets = [0, 0], sizes = [8, 5], strides = [1, 1]} : vector<8x10xf32> to vector<8x5xf32>
    %603 = vector.extract_strided_slice %601 {offsets = [0, 5], sizes = [8, 5], strides = [1, 1]} : vector<8x10xf32> to vector<8x5xf32>
    %604 = tpu.concatenate %602, %603 in 1 : vector<8x5xf32>, vector<8x5xf32> -> vector<8x10xf32>
    %605 = vector.extract_strided_slice %601 {offsets = [0, 0], sizes = [8, 5], strides = [1, 1]} : vector<8x10xf32> to vector<8x5xf32>
    %606 = vector.extract_strided_slice %582 {offsets = [0, 5], sizes = [8, 5], strides = [1, 1]} : vector<8x10xf32> to vector<8x5xf32>
    %607 = tpu.concatenate %605, %606 in 1 : vector<8x5xf32>, vector<8x5xf32> -> vector<8x10xf32>
    %c7_157 = arith.constant 7 : index
    %c0_158 = arith.constant 0 : index
    %c0_159 = arith.constant 0 : index
    %608 = vector.load %arg4[%c7_157, %c0_158, %c0_159] : memref<8x20x40xf32, #tpu.memory_space<vmem>>, vector<1x20x40xf32>
    %609 = vector.shape_cast %608 : vector<1x20x40xf32> to vector<20x40xf32>
    %c7_160 = arith.constant 7 : index
    %c0_161 = arith.constant 0 : index
    %c0_162 = arith.constant 0 : index
    %610 = vector.load %arg5[%c7_160, %c0_161, %c0_162] : memref<8x10x40xf32, #tpu.memory_space<vmem>>, vector<1x10x40xf32>
    %611 = vector.shape_cast %610 : vector<1x10x40xf32> to vector<10x40xf32>
    %c7_163 = arith.constant 7 : index
    %c0_164 = arith.constant 0 : index
    %c0_165 = arith.constant 0 : index
    %612 = vector.load %arg6[%c7_163, %c0_164, %c0_165] : memref<8x1x40xf32, #tpu.memory_space<vmem>>, vector<1x1x40xf32>
    %613 = vector.shape_cast %612 : vector<1x1x40xf32> to vector<1x40xf32>
    %614 = tpu.concatenate %604, %607 in 1 : vector<8x10xf32>, vector<8x10xf32> -> vector<8x20xf32>
    %615 = tpu.concatenate %607, %604 in 1 : vector<8x10xf32>, vector<8x10xf32> -> vector<8x20xf32>
    %616 = tpu.concatenate %614, %615 in 0 : vector<8x20xf32>, vector<8x20xf32> -> vector<16x20xf32>
    %cst_166 = arith.constant dense<0.000000e+00> : vector<16x40xf32>
    %617 = tpu.matmul %616, %609, %cst_166 {dimension_numbers = #tpu.dot_dimension_numbers<[1], [0], [0], [1], [0, 0, 1, 1], [], []>} : vector<16x20xf32>, vector<20x40xf32>, vector<16x40xf32> -> vector<16x40xf32>
    %618 = vector.broadcast %613 : vector<1x40xf32> to vector<16x40xf32>
    %619 = arith.addf %617, %618 : vector<16x40xf32>
    %cst_167 = arith.constant 0.000000e+00 : f32
    %620 = vector.broadcast %cst_167 : f32 to vector<8x10xf32>
    %cst_168 = arith.constant 0.000000e+00 : f32
    %621 = vector.broadcast %cst_168 : f32 to vector<8x10xf32>
    %622 = vector.extract_strided_slice %619 {offsets = [0, 0], sizes = [8, 40], strides = [1, 1]} : vector<16x40xf32> to vector<8x40xf32>
    %cst_169 = arith.constant dense<0.000000e+00> : vector<8x40xf32>
    %623 = tpu.matmul %620, %611, %cst_169 {dimension_numbers = #tpu.dot_dimension_numbers<[1], [0], [0], [1], [0, 0, 1, 1], [], []>} : vector<8x10xf32>, vector<10x40xf32>, vector<8x40xf32> -> vector<8x40xf32>
    %624 = arith.addf %622, %623 : vector<8x40xf32>
    %625 = vector.extract_strided_slice %624 {offsets = [0, 0], sizes = [8, 30], strides = [1, 1]} : vector<8x40xf32> to vector<8x30xf32>
    %626 = arith.negf %625 : vector<8x30xf32>
    %627 = math.exp %626 : vector<8x30xf32>
    %cst_170 = arith.constant 1.000000e+00 : f32
    %628 = vector.broadcast %cst_170 : f32 to vector<8x30xf32>
    %629 = arith.addf %628, %627 : vector<8x30xf32>
    %630 = arith.divf %628, %629 : vector<8x30xf32>
    %631 = vector.extract_strided_slice %624 {offsets = [0, 30], sizes = [8, 10], strides = [1, 1]} : vector<8x40xf32> to vector<8x10xf32>
    %632 = math.tanh %631 : vector<8x10xf32>
    %633 = vector.extract_strided_slice %630 {offsets = [0, 0], sizes = [8, 10], strides = [1, 1]} : vector<8x30xf32> to vector<8x10xf32>
    %634 = vector.extract_strided_slice %630 {offsets = [0, 10], sizes = [8, 10], strides = [1, 1]} : vector<8x30xf32> to vector<8x10xf32>
    %635 = vector.extract_strided_slice %630 {offsets = [0, 20], sizes = [8, 10], strides = [1, 1]} : vector<8x30xf32> to vector<8x10xf32>
    %636 = arith.mulf %634, %621 : vector<8x10xf32>
    %637 = arith.mulf %633, %632 : vector<8x10xf32>
    %638 = arith.addf %636, %637 : vector<8x10xf32>
    %639 = math.tanh %638 : vector<8x10xf32>
    %640 = arith.mulf %635, %639 : vector<8x10xf32>
    %641 = vector.extract_strided_slice %619 {offsets = [8, 0], sizes = [8, 40], strides = [1, 1]} : vector<16x40xf32> to vector<8x40xf32>
    %cst_171 = arith.constant dense<0.000000e+00> : vector<8x40xf32>
    %642 = tpu.matmul %640, %611, %cst_171 {dimension_numbers = #tpu.dot_dimension_numbers<[1], [0], [0], [1], [0, 0, 1, 1], [], []>} : vector<8x10xf32>, vector<10x40xf32>, vector<8x40xf32> -> vector<8x40xf32>
    %643 = arith.addf %641, %642 : vector<8x40xf32>
    %644 = vector.extract_strided_slice %643 {offsets = [0, 0], sizes = [8, 30], strides = [1, 1]} : vector<8x40xf32> to vector<8x30xf32>
    %645 = arith.negf %644 : vector<8x30xf32>
    %646 = math.exp %645 : vector<8x30xf32>
    %cst_172 = arith.constant 1.000000e+00 : f32
    %647 = vector.broadcast %cst_172 : f32 to vector<8x30xf32>
    %648 = arith.addf %647, %646 : vector<8x30xf32>
    %649 = arith.divf %647, %648 : vector<8x30xf32>
    %650 = vector.extract_strided_slice %643 {offsets = [0, 30], sizes = [8, 10], strides = [1, 1]} : vector<8x40xf32> to vector<8x10xf32>
    %651 = math.tanh %650 : vector<8x10xf32>
    %652 = vector.extract_strided_slice %649 {offsets = [0, 0], sizes = [8, 10], strides = [1, 1]} : vector<8x30xf32> to vector<8x10xf32>
    %653 = vector.extract_strided_slice %649 {offsets = [0, 10], sizes = [8, 10], strides = [1, 1]} : vector<8x30xf32> to vector<8x10xf32>
    %654 = vector.extract_strided_slice %649 {offsets = [0, 20], sizes = [8, 10], strides = [1, 1]} : vector<8x30xf32> to vector<8x10xf32>
    %655 = arith.mulf %653, %638 : vector<8x10xf32>
    %656 = arith.mulf %652, %651 : vector<8x10xf32>
    %657 = arith.addf %655, %656 : vector<8x10xf32>
    %658 = math.tanh %657 : vector<8x10xf32>
    %659 = arith.mulf %654, %658 : vector<8x10xf32>
    %660 = vector.extract_strided_slice %640 {offsets = [0, 0], sizes = [8, 5], strides = [1, 1]} : vector<8x10xf32> to vector<8x5xf32>
    %661 = vector.extract_strided_slice %659 {offsets = [0, 5], sizes = [8, 5], strides = [1, 1]} : vector<8x10xf32> to vector<8x5xf32>
    %662 = tpu.concatenate %660, %661 in 1 : vector<8x5xf32>, vector<8x5xf32> -> vector<8x10xf32>
    %663 = vector.extract_strided_slice %659 {offsets = [0, 0], sizes = [8, 5], strides = [1, 1]} : vector<8x10xf32> to vector<8x5xf32>
    %664 = vector.extract_strided_slice %640 {offsets = [0, 5], sizes = [8, 5], strides = [1, 1]} : vector<8x10xf32> to vector<8x5xf32>
    %665 = tpu.concatenate %663, %664 in 1 : vector<8x5xf32>, vector<8x5xf32> -> vector<8x10xf32>
    %666 = tpu.concatenate %662, %665 in 0 : vector<8x10xf32>, vector<8x10xf32> -> vector<16x10xf32>
    %c0_173 = arith.constant 0 : index
    %c0_174 = arith.constant 0 : index
    %667 = vector.load %arg7[%c0_173, %c0_174] : memref<10x100xf32, #tpu.memory_space<vmem>>, vector<10x100xf32>
    %cst_175 = arith.constant dense<0.000000e+00> : vector<16x100xf32>
    %668 = tpu.matmul %666, %667, %cst_175 {dimension_numbers = #tpu.dot_dimension_numbers<[1], [0], [0], [1], [0, 0, 1, 1], [], []>} : vector<16x10xf32>, vector<10x100xf32>, vector<16x100xf32> -> vector<16x100xf32>
    %c0_176 = arith.constant 0 : index
    %c0_177 = arith.constant 0 : index
    %669 = vector.load %arg8[%c0_176, %c0_177] : memref<1x100xf32, #tpu.memory_space<vmem>>, vector<1x100xf32>
    %670 = vector.broadcast %669 : vector<1x100xf32> to vector<16x100xf32>
    %671 = arith.addf %668, %670 : vector<16x100xf32>
    %c0_178 = arith.constant 0 : index
    %c0_179 = arith.constant 0 : index
    %672 = vector.load %arg9[%c0_178, %c0_179] : memref<100x10xf32, #tpu.memory_space<vmem>>, vector<100x10xf32>
    %cst_180 = arith.constant dense<0.000000e+00> : vector<16x10xf32>
    %673 = tpu.matmul %671, %672, %cst_180 {dimension_numbers = #tpu.dot_dimension_numbers<[1], [0], [0], [1], [0, 0, 1, 1], [], []>} : vector<16x100xf32>, vector<100x10xf32>, vector<16x10xf32> -> vector<16x10xf32>
    %c0_181 = arith.constant 0 : index
    %c0_182 = arith.constant 0 : index
    %674 = vector.load %arg10[%c0_181, %c0_182] : memref<1x10xf32, #tpu.memory_space<vmem>>, vector<1x10xf32>
    %675 = vector.broadcast %674 : vector<1x10xf32> to vector<16x10xf32>
    %676 = arith.addf %673, %675 : vector<16x10xf32>
    %c0_183 = arith.constant 0 : index
    %c0_184 = arith.constant 0 : index
    %677 = vector.load %arg11[%c0_183, %c0_184] : memref<10x4xf32, #tpu.memory_space<vmem>>, vector<10x4xf32>
    %cst_185 = arith.constant dense<0.000000e+00> : vector<16x4xf32>
    %678 = tpu.matmul %676, %677, %cst_185 {dimension_numbers = #tpu.dot_dimension_numbers<[1], [0], [0], [1], [0, 0, 1, 1], [], []>} : vector<16x10xf32>, vector<10x4xf32>, vector<16x4xf32> -> vector<16x4xf32>
    %c0_186 = arith.constant 0 : index
    %c0_187 = arith.constant 0 : index
    %679 = vector.load %arg12[%c0_186, %c0_187] : memref<1x4xf32, #tpu.memory_space<vmem>>, vector<1x4xf32>
    %680 = vector.broadcast %679 : vector<1x4xf32> to vector<16x4xf32>
    %681 = arith.addf %678, %680 : vector<16x4xf32>
    %c0_188 = arith.constant 0 : index
    %c0_189 = arith.constant 0 : index
    %682 = vector.load %arg13[%c0_188, %c0_189] : memref<16x4xf32, #tpu.memory_space<vmem>>, vector<16x4xf32>
    tpu.vector_store %arg13[%c0_188, %c0_189], %681 {strides = array<i32>} : memref<16x4xf32, #tpu.memory_space<vmem>>, vector<16x4xf32>,
    return
  }
}

</mosaic_0001>

<llo_original>
// kernel: forward.1
$region0: #{forward.1}
  #allocation0 [shape = 'u32[]', space=smem, size = 0x4, offset = 0x4, fixed_abs, tag = 'smem constant byte address 0x4 - core index']
  #allocation1 [shape = 'u32[144,128]{1,0:T(1,128)}', space=vmem, size = 0x12000, scoped, tag = 'internal scratch']
  #allocation2 [shape = 'f32[8,2,10]{2,1,0:T(2,128)}', space=vmem, size = 0x2000, scoped, tag = 'scratch operand']
  %s0 = inlined_call_operand.vmem [shape: f32[8,2,1], index: 0, kind: input, shape index: {}]
  %s1 = inlined_call_operand.vmem [shape: f32[1,40], index: 1, kind: input, shape index: {}]
  %s2 = inlined_call_operand.vmem [shape: f32[10,40], index: 2, kind: input, shape index: {}]
  %s3 = inlined_call_operand.vmem [shape: f32[1,40], index: 3, kind: input, shape index: {}]
  %s4 = inlined_call_operand.vmem [shape: f32[8,20,40], index: 4, kind: input, shape index: {}]
  %s5 = inlined_call_operand.vmem [shape: f32[8,10,40], index: 5, kind: input, shape index: {}]
  %s6 = inlined_call_operand.vmem [shape: f32[8,1,40], index: 6, kind: input, shape index: {}]
  %s7 = inlined_call_operand.vmem [shape: f32[10,100], index: 7, kind: input, shape index: {}]
  %s8 = inlined_call_operand.vmem [shape: f32[1,100], index: 8, kind: input, shape index: {}]
  %s9 = inlined_call_operand.vmem [shape: f32[100,10], index: 9, kind: input, shape index: {}]
  %s10 = inlined_call_operand.vmem [shape: f32[1,10], index: 10, kind: input, shape index: {}]
  %s11 = inlined_call_operand.vmem [shape: f32[10,4], index: 11, kind: input, shape index: {}]
  %s12 = inlined_call_operand.vmem [shape: f32[1,4], index: 12, kind: input, shape index: {}]
  %s13 = inlined_call_operand.vmem [shape: f32[16,4], index: 13, kind: output, shape index: {}]
  %s14 = sld [smem:[#allocation0]]
  $region62: #{forward.1} parent=0
    _
  %s16 = ssub.s32 1, %s14
  %s17 = scalar_select 0, %s16, %s14
  // Predicated region
  $region2: #{forward.1} parent=0 // pred_check
    _
  $region3: #{forward.1} parent=0 // pred_check_branch
    %19 = sbr.rel (0) target = $region5
  $region4: #{forward.1} parent=0 // pred_region
    _
  $region5: #{forward.1} parent=0 // pred_fallthru
    _
  // Predicated region
  $region6: #{forward.1} parent=0 // pred_check
    _
  $region7: #{forward.1} parent=0 // pred_check_branch
    %21 = sbr.rel (0) target = $region9
  $region8: #{forward.1} parent=0 // pred_region
    _
  $region9: #{forward.1} parent=0 // pred_fallthru
    _
  // Predicated region
  $region10: #{forward.1} parent=0 // pred_check
    _
  $region11: #{forward.1} parent=0 // pred_check_branch
    %23 = sbr.rel (0) target = $region13
  $region12: #{forward.1} parent=0 // pred_region
    _
  $region13: #{forward.1} parent=0 // pred_fallthru
    _
  // Predicated region
  $region14: #{forward.1} parent=0 // pred_check
    _
  $region15: #{forward.1} parent=0 // pred_check_branch
    %25 = sbr.rel (0) target = $region17
  $region16: #{forward.1} parent=0 // pred_region
    _
  $region17: #{forward.1} parent=0 // pred_fallthru
    _
  // Predicated region
  $region18: #{forward.1} parent=0 // pred_check
    _
  $region19: #{forward.1} parent=0 // pred_check_branch
    %27 = sbr.rel (0) target = $region21
  $region20: #{forward.1} parent=0 // pred_region
    _
  $region21: #{forward.1} parent=0 // pred_fallthru
    _
  // Predicated region
  $region22: #{forward.1} parent=0 // pred_check
    _
  $region23: #{forward.1} parent=0 // pred_check_branch
    %29 = sbr.rel (0) target = $region25
  $region24: #{forward.1} parent=0 // pred_region
    _
  $region25: #{forward.1} parent=0 // pred_fallthru
    _
  // Predicated region
  $region26: #{forward.1} parent=0 // pred_check
    _
  $region27: #{forward.1} parent=0 // pred_check_branch
    %31 = sbr.rel (0) target = $region29
  $region28: #{forward.1} parent=0 // pred_region
    _
  $region29: #{forward.1} parent=0 // pred_fallthru
    _
  // Predicated region
  $region30: #{forward.1} parent=0 // pred_check
    _
  $region31: #{forward.1} parent=0 // pred_check_branch
    %33 = sbr.rel (0) target = $region33
  $region32: #{forward.1} parent=0 // pred_region
    _
  $region33: #{forward.1} parent=0 // pred_fallthru
    _
  // Predicated region
  $region34: #{forward.1} parent=0 // pred_check
    _
  $region35: #{forward.1} parent=0 // pred_check_branch
    %35 = sbr.rel (0) target = $region37
  $region36: #{forward.1} parent=0 // pred_region
    _
  $region37: #{forward.1} parent=0 // pred_fallthru
    _
  // Predicated region
  $region38: #{forward.1} parent=0 // pred_check
    _
  $region39: #{forward.1} parent=0 // pred_check_branch
    %37 = sbr.rel (0) target = $region41
  $region40: #{forward.1} parent=0 // pred_region
    _
  $region41: #{forward.1} parent=0 // pred_fallthru
    _
  // Predicated region
  $region42: #{forward.1} parent=0 // pred_check
    _
  $region43: #{forward.1} parent=0 // pred_check_branch
    %39 = sbr.rel (0) target = $region45
  $region44: #{forward.1} parent=0 // pred_region
    _
  $region45: #{forward.1} parent=0 // pred_fallthru
    _
  // Predicated region
  $region46: #{forward.1} parent=0 // pred_check
    _
  $region47: #{forward.1} parent=0 // pred_check_branch
    %41 = sbr.rel (0) target = $region49
  $region48: #{forward.1} parent=0 // pred_region
    _
  $region49: #{forward.1} parent=0 // pred_fallthru
    _
  // Predicated region
  $region50: #{forward.1} parent=0 // pred_check
    _
  $region51: #{forward.1} parent=0 // pred_check_branch
    %43 = sbr.rel (0) target = $region53
  $region52: #{forward.1} parent=0 // pred_region
    _
  $region53: #{forward.1} parent=0 // pred_fallthru
    _
  %v44 = vld [vmem:[%s0] sm:$0x3]
  %v45 = vld [vmem:[%s0 + $0x2] sm:$0x3]
  %v46 = vld [vmem:[%s0 + $0x4] sm:$0x3]
  %v47 = vld [vmem:[%s0 + $0x6] sm:$0x3]
  %v48 = vld [vmem:[%s0 + $0x8] sm:$0x3]
  %v49 = vld [vmem:[%s0 + $0xa] sm:$0x3]
  %v50 = vld [vmem:[%s0 + $0xc] sm:$0x3]
  %v51 = vld [vmem:[%s0 + $0xe] sm:$0x3]
  %v52 = vld [vmem:[%s1] sm:$0x1]
  %54 = vset.pattern.permute.xlu0 0
  %55 = vperm.xlu0 %54, %v44
  %v56 = vpop.permute.xlu0 %55
  %59 = vset.pattern.permute.xlu0 0
  %60 = vperm.xlu0 %59, %v45
  %v61 = vpop.permute.xlu0 %60
  %64 = vset.pattern.permute.xlu0 0
  %65 = vperm.xlu0 %64, %v46
  %v66 = vpop.permute.xlu0 %65
  %69 = vset.pattern.permute.xlu0 0
  %70 = vperm.xlu0 %69, %v47
  %v71 = vpop.permute.xlu0 %70
  %74 = vset.pattern.permute.xlu0 0
  %75 = vperm.xlu0 %74, %v48
  %v76 = vpop.permute.xlu0 %75
  %79 = vset.pattern.permute.xlu0 0
  %80 = vperm.xlu0 %79, %v49
  %v81 = vpop.permute.xlu0 %80
  %84 = vset.pattern.permute.xlu0 0
  %85 = vperm.xlu0 %84, %v50
  %v86 = vpop.permute.xlu0 %85
  %89 = vset.pattern.permute.xlu0 0
  %90 = vperm.xlu0 %89, %v51
  %v91 = vpop.permute.xlu0 %90
  %v94 = vlaneseq
  %v95 = vshrl.u32 %v94, 7
  %v96 = vsub.s32 0, %v95
  %v97 = vrot.slane %v52, %v96
  %v99 = vmul.f32 %v56, %v97
  %v100 = vmul.f32 %v61, %v97
  %v101 = vmul.f32 %v66, %v97
  %v102 = vmul.f32 %v71, %v97
  %v103 = vmul.f32 %v76, %v97
  %v104 = vmul.f32 %v81, %v97
  %v105 = vmul.f32 %v86, %v97
  %v106 = vmul.f32 %v91, %v97
  %v107 = vld [vmem:[%s3] sm:$0x1]
  %v109 = vlaneseq
  %v110 = vshrl.u32 %v109, 7
  %v111 = vsub.s32 0, %v110
  %v112 = vrot.slane %v107, %v111
  %v114 = vadd.f32 %v99, %v112
  %v115 = vadd.f32 %v100, %v112
  %v116 = vadd.f32 %v101, %v112
  %v117 = vadd.f32 %v102, %v112
  %v118 = vadd.f32 %v103, %v112
  %v119 = vadd.f32 %v104, %v112
  %v120 = vadd.f32 %v105, %v112
  %v121 = vadd.f32 %v106, %v112
  %v122 = vld [vmem:[%s2] sm:$0xff]
  %v123 = vld [vmem:[%s2 + $0x8] sm:$0x3]
  %vm124 = vcmask 80896
  %v126 = vsel %vm124, 0.0, 0
  %vm128 = vcmask 1041408
  %v130 = vsel %vm128, %v123, 0
  %132 = vmatprep.subr.mxu0 0.0
  %133 = vmatpush1.msra.mxu0 %v122
  %134 = vmatprep.subr.mxu0 0.0
  %135 = vmatpush1.msra.mxu0 %v130
  %136 = vmatprep.subr.mxu0 0.0
  %137 = vmatpush1.msra.mxu0 0.0
  %138 = vmatprep.subr.mxu0 0.0
  %139 = vmatpush1.msra.mxu0 0.0
  %140 = vmatprep.subr.mxu0 0.0
  %141 = vmatpush1.msra.mxu0 0.0
  %142 = vmatprep.subr.mxu0 0.0
  %143 = vmatpush1.msra.mxu0 0.0
  %144 = vmatprep.subr.mxu0 0.0
  %145 = vmatpush1.msra.mxu0 0.0
  %146 = vmatprep.subr.mxu0 0.0
  %147 = vmatpush1.msra.mxu0 0.0
  %148 = vmatprep.subr.mxu0 0.0
  %149 = vmatpush1.msra.mxu0 0.0
  %150 = vmatprep.subr.mxu0 0.0
  %151 = vmatpush1.msra.mxu0 0.0
  %152 = vmatprep.subr.mxu0 0.0
  %153 = vmatpush1.msra.mxu0 0.0
  %154 = vmatprep.subr.mxu0 0.0
  %155 = vmatpush1.msra.mxu0 0.0
  %156 = vmatprep.subr.mxu0 0.0
  %157 = vmatpush1.msra.mxu0 0.0
  %158 = vmatprep.subr.mxu0 0.0
  %159 = vmatpush1.msra.mxu0 0.0
  %160 = vmatprep.subr.mxu0 0.0
  %161 = vmatpush1.msra.mxu0 0.0
  %162 = vmatprep.subr.mxu0 0.0
  %163 = vmatpush1.msra.mxu0 0.0
  %164 = vmatprep.subr.mxu0 0.0
  %165 = vmatpush1.msra.mxu0 0.0
  %166 = vmatprep.subr.mxu0 0.0
  %167 = vmatpush1.msra.mxu0 0.0
  %168 = vmatprep.subr.mxu0 0.0
  %169 = vmatpush1.msra.mxu0 0.0
  %170 = vmatprep.subr.mxu0 0.0
  %171 = vmatpush1.msra.mxu0 0.0
  %172 = vmatprep.subr.mxu0 0.0
  %173 = vmatpush1.msra.mxu0 0.0
  %174 = vmatprep.subr.mxu0 0.0
  %175 = vmatpush1.msra.mxu0 0.0
  %176 = vmatprep.subr.mxu0 0.0
  %177 = vmatpush1.msra.mxu0 0.0
  %178 = vmatprep.subr.mxu0 0.0
  %179 = vmatpush1.msra.mxu0 0.0
  %180 = vmatprep.subr.mxu0 0.0
  %181 = vmatpush1.msra.mxu0 0.0
  %182 = vmatprep.subr.mxu0 0.0
  %183 = vmatpush1.msra.mxu0 0.0
  %184 = vmatprep.subr.mxu0 0.0
  %185 = vmatpush1.msra.mxu0 0.0
  %186 = vmatprep.subr.mxu0 0.0
  %187 = vmatpush1.msra.mxu0 0.0
  %188 = vmatprep.subr.mxu0 0.0
  %189 = vmatpush1.msra.mxu0 0.0
  %190 = vmatprep.subr.mxu0 0.0
  %191 = vmatpush1.msra.mxu0 0.0
  %192 = vmatprep.subr.mxu0 0.0
  %193 = vmatpush1.msra.mxu0 0.0
  %194 = vmatprep.subr.mxu0 0.0
  %195 = vmatpush1.msra.mxu0 0.0
  %196 = vmatprep.mubr.f32.mxu0 0.0
  %197 = vmatmul.mubr.f32.gmra.mrb[0].mxu0 %v126
  %v198 = vpop.f32.mrb[0].mxu0
  %v199 = vadd.f32 0.0, %v198
  %v200 = vpop.f32.mrb[0].mxu0
  %201 = vdwg.mxu0
  %v202 = vadd.f32 %v114, %v199
  %v203 = vxor.u32 %v202, 2147483648
  %v204 = vmul.f32 %v203, 1.442695
  %v205 = vpow.pop %v204
  %v206 = vadd.f32 %v205, 1.0
  %v207 = vrcp.pop %v206
  %v208 = vmul.f32 1.0, %v207
  %v209 = vtanh.pop %v202
  %v210 = vmul.f32 %v208, 0.0
  %212 = vrot.lane.b32.xlu0 %v209, 98
  %v213 = vpop.permute.xlu0 %212
  %v215 = vmul.f32 %v208, %v213
  %217 = vrot.lane.b32.xlu0 %v215, 10
  %v218 = vpop.permute.xlu0 %217
  %v220 = vadd.f32 %v210, %v218
  %v221 = vtanh.pop %v220
  %223 = vrot.lane.b32.xlu0 %v221, 10
  %v224 = vpop.permute.xlu0 %223
  %v226 = vmul.f32 %v208, %v224
  %228 = vrot.lane.b32.xlu0 %v226, 108
  %v229 = vpop.permute.xlu0 %228
  %vm231 = vcmask 74752
  %232 = vst.msk [vmem:[#allocation2] sm:$0x3] %vm231, %v229
  %v233 = vsel %vm124, %v229, 0
  %235 = vmatprep.subr.mxu0 0.0
  %236 = vmatpush1.msra.mxu0 %v122
  %237 = vmatprep.subr.mxu0 0.0
  %238 = vmatpush1.msra.mxu0 %v130
  %239 = vmatprep.subr.mxu0 0.0
  %240 = vmatpush1.msra.mxu0 0.0
  %241 = vmatprep.subr.mxu0 0.0
  %242 = vmatpush1.msra.mxu0 0.0
  %243 = vmatprep.subr.mxu0 0.0
  %244 = vmatpush1.msra.mxu0 0.0
  %245 = vmatprep.subr.mxu0 0.0
  %246 = vmatpush1.msra.mxu0 0.0
  %247 = vmatprep.subr.mxu0 0.0
  %248 = vmatpush1.msra.mxu0 0.0
  %249 = vmatprep.subr.mxu0 0.0
  %250 = vmatpush1.msra.mxu0 0.0
  %251 = vmatprep.subr.mxu0 0.0
  %252 = vmatpush1.msra.mxu0 0.0
  %253 = vmatprep.subr.mxu0 0.0
  %254 = vmatpush1.msra.mxu0 0.0
  %255 = vmatprep.subr.mxu0 0.0
  %256 = vmatpush1.msra.mxu0 0.0
  %257 = vmatprep.subr.mxu0 0.0
  %258 = vmatpush1.msra.mxu0 0.0
  %259 = vmatprep.subr.mxu0 0.0
  %260 = vmatpush1.msra.mxu0 0.0
  %261 = vmatprep.subr.mxu0 0.0
  %262 = vmatpush1.msra.mxu0 0.0
  %263 = vmatprep.subr.mxu0 0.0
  %264 = vmatpush1.msra.mxu0 0.0
  %265 = vmatprep.subr.mxu0 0.0
  %266 = vmatpush1.msra.mxu0 0.0
  %267 = vmatprep.subr.mxu0 0.0
  %268 = vmatpush1.msra.mxu0 0.0
  %269 = vmatprep.subr.mxu0 0.0
  %270 = vmatpush1.msra.mxu0 0.0
  %271 = vmatprep.subr.mxu0 0.0
  %272 = vmatpush1.msra.mxu0 0.0
  %273 = vmatprep.subr.mxu0 0.0
  %274 = vmatpush1.msra.mxu0 0.0
  %275 = vmatprep.subr.mxu0 0.0
  %276 = vmatpush1.msra.mxu0 0.0
  %277 = vmatprep.subr.mxu0 0.0
  %278 = vmatpush1.msra.mxu0 0.0
  %279 = vmatprep.subr.mxu0 0.0
  %280 = vmatpush1.msra.mxu0 0.0
  %281 = vmatprep.subr.mxu0 0.0
  %282 = vmatpush1.msra.mxu0 0.0
  %283 = vmatprep.subr.mxu0 0.0
  %284 = vmatpush1.msra.mxu0 0.0
  %285 = vmatprep.subr.mxu0 0.0
  %286 = vmatpush1.msra.mxu0 0.0
  %287 = vmatprep.subr.mxu0 0.0
  %288 = vmatpush1.msra.mxu0 0.0
  %289 = vmatprep.subr.mxu0 0.0
  %290 = vmatpush1.msra.mxu0 0.0
  %291 = vmatprep.subr.mxu0 0.0
  %292 = vmatpush1.msra.mxu0 0.0
  %293 = vmatprep.subr.mxu0 0.0
  %294 = vmatpush1.msra.mxu0 0.0
  %295 = vmatprep.subr.mxu0 0.0
  %296 = vmatpush1.msra.mxu0 0.0
  %297 = vmatprep.subr.mxu0 0.0
  %298 = vmatpush1.msra.mxu0 0.0
  %299 = vmatprep.mubr.f32.mxu0 0.0
  %300 = vmatmul.mubr.f32.gmra.mrb[0].mxu0 %v233
  %v301 = vpop.f32.mrb[0].mxu0
  %v302 = vadd.f32 0.0, %v301
  %v303 = vpop.f32.mrb[0].mxu0
  %304 = vdwg.mxu0
  %v305 = vadd.f32 %v115, %v302
  %v306 = vxor.u32 %v305, 2147483648
  %v307 = vmul.f32 %v306, 1.442695
  %v308 = vpow.pop %v307
  %v309 = vadd.f32 %v308, 1.0
  %v310 = vrcp.pop %v309
  %v311 = vmul.f32 1.0, %v310
  %v312 = vtanh.pop %v305
  %v313 = vmul.f32 %v311, %v220
  %315 = vrot.lane.b32.xlu0 %v312, 98
  %v316 = vpop.permute.xlu0 %315
  %v318 = vmul.f32 %v311, %v316
  %320 = vrot.lane.b32.xlu0 %v318, 10
  %v321 = vpop.permute.xlu0 %320
  %v323 = vadd.f32 %v313, %v321
  %v324 = vtanh.pop %v323
  %326 = vrot.lane.b32.xlu0 %v324, 10
  %v327 = vpop.permute.xlu0 %326
  %v329 = vmul.f32 %v311, %v327
  %331 = vrot.lane.b32.xlu0 %v329, 108
  %v332 = vpop.permute.xlu0 %331
  %s334 = scalar_lea.vmem [#allocation2], 2
  %335 = vst.msk [vmem:[%s334] sm:$0x3] %vm231, %v332
  %v336 = vsel %vm124, %v332, 0
  %338 = vmatprep.subr.mxu0 0.0
  %339 = vmatpush1.msra.mxu0 %v122
  %340 = vmatprep.subr.mxu0 0.0
  %341 = vmatpush1.msra.mxu0 %v130
  %342 = vmatprep.subr.mxu0 0.0
  %343 = vmatpush1.msra.mxu0 0.0
  %344 = vmatprep.subr.mxu0 0.0
  %345 = vmatpush1.msra.mxu0 0.0
  %346 = vmatprep.subr.mxu0 0.0
  %347 = vmatpush1.msra.mxu0 0.0
  %348 = vmatprep.subr.mxu0 0.0
  %349 = vmatpush1.msra.mxu0 0.0
  %350 = vmatprep.subr.mxu0 0.0
  %351 = vmatpush1.msra.mxu0 0.0
  %352 = vmatprep.subr.mxu0 0.0
  %353 = vmatpush1.msra.mxu0 0.0
  %354 = vmatprep.subr.mxu0 0.0
  %355 = vmatpush1.msra.mxu0 0.0
  %356 = vmatprep.subr.mxu0 0.0
  %357 = vmatpush1.msra.mxu0 0.0
  %358 = vmatprep.subr.mxu0 0.0
  %359 = vmatpush1.msra.mxu0 0.0
  %360 = vmatprep.subr.mxu0 0.0
  %361 = vmatpush1.msra.mxu0 0.0
  %362 = vmatprep.subr.mxu0 0.0
  %363 = vmatpush1.msra.mxu0 0.0
  %364 = vmatprep.subr.mxu0 0.0
  %365 = vmatpush1.msra.mxu0 0.0
  %366 = vmatprep.subr.mxu0 0.0
  %367 = vmatpush1.msra.mxu0 0.0
  %368 = vmatprep.subr.mxu0 0.0
  %369 = vmatpush1.msra.mxu0 0.0
  %370 = vmatprep.subr.mxu0 0.0
  %371 = vmatpush1.msra.mxu0 0.0
  %372 = vmatprep.subr.mxu0 0.0
  %373 = vmatpush1.msra.mxu0 0.0
  %374 = vmatprep.subr.mxu0 0.0
  %375 = vmatpush1.msra.mxu0 0.0
  %376 = vmatprep.subr.mxu0 0.0
  %377 = vmatpush1.msra.mxu0 0.0
  %378 = vmatprep.subr.mxu0 0.0
  %379 = vmatpush1.msra.mxu0 0.0
  %380 = vmatprep.subr.mxu0 0.0
  %381 = vmatpush1.msra.mxu0 0.0
  %382 = vmatprep.subr.mxu0 0.0
  %383 = vmatpush1.msra.mxu0 0.0
  %384 = vmatprep.subr.mxu0 0.0
  %385 = vmatpush1.msra.mxu0 0.0
  %386 = vmatprep.subr.mxu0 0.0
  %387 = vmatpush1.msra.mxu0 0.0
  %388 = vmatprep.subr.mxu0 0.0
  %389 = vmatpush1.msra.mxu0 0.0
  %390 = vmatprep.subr.mxu0 0.0
  %391 = vmatpush1.msra.mxu0 0.0
  %392 = vmatprep.subr.mxu0 0.0
  %393 = vmatpush1.msra.mxu0 0.0
  %394 = vmatprep.subr.mxu0 0.0
  %395 = vmatpush1.msra.mxu0 0.0
  %396 = vmatprep.subr.mxu0 0.0
  %397 = vmatpush1.msra.mxu0 0.0
  %398 = vmatprep.subr.mxu0 0.0
  %399 = vmatpush1.msra.mxu0 0.0
  %400 = vmatprep.subr.mxu0 0.0
  %401 = vmatpush1.msra.mxu0 0.0
  %402 = vmatprep.mubr.f32.mxu0 0.0
  %403 = vmatmul.mubr.f32.gmra.mrb[0].mxu0 %v336
  %v404 = vpop.f32.mrb[0].mxu0
  %v405 = vadd.f32 0.0, %v404
  %v406 = vpop.f32.mrb[0].mxu0
  %407 = vdwg.mxu0
  %v408 = vadd.f32 %v116, %v405
  %v409 = vxor.u32 %v408, 2147483648
  %v410 = vmul.f32 %v409, 1.442695
  %v411 = vpow.pop %v410
  %v412 = vadd.f32 %v411, 1.0
  %v413 = vrcp.pop %v412
  %v414 = vmul.f32 1.0, %v413
  %v415 = vtanh.pop %v408
  %v416 = vmul.f32 %v414, %v323
  %418 = vrot.lane.b32.xlu0 %v415, 98
  %v419 = vpop.permute.xlu0 %418
  %v421 = vmul.f32 %v414, %v419
  %423 = vrot.lane.b32.xlu0 %v421, 10
  %v424 = vpop.permute.xlu0 %423
  %v426 = vadd.f32 %v416, %v424
  %v427 = vtanh.pop %v426
  %429 = vrot.lane.b32.xlu0 %v427, 10
  %v430 = vpop.permute.xlu0 %429
  %v432 = vmul.f32 %v414, %v430
  %434 = vrot.lane.b32.xlu0 %v432, 108
  %v435 = vpop.permute.xlu0 %434
  %s437 = scalar_lea.vmem [#allocation2], 4
  %438 = vst.msk [vmem:[%s437] sm:$0x3] %vm231, %v435
  %v439 = vsel %vm124, %v435, 0
  %441 = vmatprep.subr.mxu0 0.0
  %442 = vmatpush1.msra.mxu0 %v122
  %443 = vmatprep.subr.mxu0 0.0
  %444 = vmatpush1.msra.mxu0 %v130
  %445 = vmatprep.subr.mxu0 0.0
  %446 = vmatpush1.msra.mxu0 0.0
  %447 = vmatprep.subr.mxu0 0.0
  %448 = vmatpush1.msra.mxu0 0.0
  %449 = vmatprep.subr.mxu0 0.0
  %450 = vmatpush1.msra.mxu0 0.0
  %451 = vmatprep.subr.mxu0 0.0
  %452 = vmatpush1.msra.mxu0 0.0
  %453 = vmatprep.subr.mxu0 0.0
  %454 = vmatpush1.msra.mxu0 0.0
  %455 = vmatprep.subr.mxu0 0.0
  %456 = vmatpush1.msra.mxu0 0.0
  %457 = vmatprep.subr.mxu0 0.0
  %458 = vmatpush1.msra.mxu0 0.0
  %459 = vmatprep.subr.mxu0 0.0
  %460 = vmatpush1.msra.mxu0 0.0
  %461 = vmatprep.subr.mxu0 0.0
  %462 = vmatpush1.msra.mxu0 0.0
  %463 = vmatprep.subr.mxu0 0.0
  %464 = vmatpush1.msra.mxu0 0.0
  %465 = vmatprep.subr.mxu0 0.0
  %466 = vmatpush1.msra.mxu0 0.0
  %467 = vmatprep.subr.mxu0 0.0
  %468 = vmatpush1.msra.mxu0 0.0
  %469 = vmatprep.subr.mxu0 0.0
  %470 = vmatpush1.msra.mxu0 0.0
  %471 = vmatprep.subr.mxu0 0.0
  %472 = vmatpush1.msra.mxu0 0.0
  %473 = vmatprep.subr.mxu0 0.0
  %474 = vmatpush1.msra.mxu0 0.0
  %475 = vmatprep.subr.mxu0 0.0
  %476 = vmatpush1.msra.mxu0 0.0
  %477 = vmatprep.subr.mxu0 0.0
  %478 = vmatpush1.msra.mxu0 0.0
  %479 = vmatprep.subr.mxu0 0.0
  %480 = vmatpush1.msra.mxu0 0.0
  %481 = vmatprep.subr.mxu0 0.0
  %482 = vmatpush1.msra.mxu0 0.0
  %483 = vmatprep.subr.mxu0 0.0
  %484 = vmatpush1.msra.mxu0 0.0
  %485 = vmatprep.subr.mxu0 0.0
  %486 = vmatpush1.msra.mxu0 0.0
  %487 = vmatprep.subr.mxu0 0.0
  %488 = vmatpush1.msra.mxu0 0.0
  %489 = vmatprep.subr.mxu0 0.0
  %490 = vmatpush1.msra.mxu0 0.0
  %491 = vmatprep.subr.mxu0 0.0
  %492 = vmatpush1.msra.mxu0 0.0
  %493 = vmatprep.subr.mxu0 0.0
  %494 = vmatpush1.msra.mxu0 0.0
  %495 = vmatprep.subr.mxu0 0.0
  %496 = vmatpush1.msra.mxu0 0.0
  %497 = vmatprep.subr.mxu0 0.0
  %498 = vmatpush1.msra.mxu0 0.0
  %499 = vmatprep.subr.mxu0 0.0
  %500 = vmatpush1.msra.mxu0 0.0
  %501 = vmatprep.subr.mxu0 0.0
  %502 = vmatpush1.msra.mxu0 0.0
  %503 = vmatprep.subr.mxu0 0.0
  %504 = vmatpush1.msra.mxu0 0.0
  %505 = vmatprep.mubr.f32.mxu0 0.0
  %506 = vmatmul.mubr.f32.gmra.mrb[0].mxu0 %v439
  %v507 = vpop.f32.mrb[0].mxu0
  %v508 = vadd.f32 0.0, %v507
  %v509 = vpop.f32.mrb[0].mxu0
  %510 = vdwg.mxu0
  %v511 = vadd.f32 %v117, %v508
  %v512 = vxor.u32 %v511, 2147483648
  %v513 = vmul.f32 %v512, 1.442695
  %v514 = vpow.pop %v513
  %v515 = vadd.f32 %v514, 1.0
  %v516 = vrcp.pop %v515
  %v517 = vmul.f32 1.0, %v516
  %v518 = vtanh.pop %v511
  %v519 = vmul.f32 %v517, %v426
  %521 = vrot.lane.b32.xlu0 %v518, 98
  %v522 = vpop.permute.xlu0 %521
  %v524 = vmul.f32 %v517, %v522
  %526 = vrot.lane.b32.xlu0 %v524, 10
  %v527 = vpop.permute.xlu0 %526
  %v529 = vadd.f32 %v519, %v527
  %v530 = vtanh.pop %v529
  %532 = vrot.lane.b32.xlu0 %v530, 10
  %v533 = vpop.permute.xlu0 %532
  %v535 = vmul.f32 %v517, %v533
  %537 = vrot.lane.b32.xlu0 %v535, 108
  %v538 = vpop.permute.xlu0 %537
  %s540 = scalar_lea.vmem [#allocation2], 6
  %541 = vst.msk [vmem:[%s540] sm:$0x3] %vm231, %v538
  %v542 = vsel %vm124, %v538, 0
  %544 = vmatprep.subr.mxu0 0.0
  %545 = vmatpush1.msra.mxu0 %v122
  %546 = vmatprep.subr.mxu0 0.0
  %547 = vmatpush1.msra.mxu0 %v130
  %548 = vmatprep.subr.mxu0 0.0
  %549 = vmatpush1.msra.mxu0 0.0
  %550 = vmatprep.subr.mxu0 0.0
  %551 = vmatpush1.msra.mxu0 0.0
  %552 = vmatprep.subr.mxu0 0.0
  %553 = vmatpush1.msra.mxu0 0.0
  %554 = vmatprep.subr.mxu0 0.0
  %555 = vmatpush1.msra.mxu0 0.0
  %556 = vmatprep.subr.mxu0 0.0
  %557 = vmatpush1.msra.mxu0 0.0
  %558 = vmatprep.subr.mxu0 0.0
  %559 = vmatpush1.msra.mxu0 0.0
  %560 = vmatprep.subr.mxu0 0.0
  %561 = vmatpush1.msra.mxu0 0.0
  %562 = vmatprep.subr.mxu0 0.0
  %563 = vmatpush1.msra.mxu0 0.0
  %564 = vmatprep.subr.mxu0 0.0
  %565 = vmatpush1.msra.mxu0 0.0
  %566 = vmatprep.subr.mxu0 0.0
  %567 = vmatpush1.msra.mxu0 0.0
  %568 = vmatprep.subr.mxu0 0.0
  %569 = vmatpush1.msra.mxu0 0.0
  %570 = vmatprep.subr.mxu0 0.0
  %571 = vmatpush1.msra.mxu0 0.0
  %572 = vmatprep.subr.mxu0 0.0
  %573 = vmatpush1.msra.mxu0 0.0
  %574 = vmatprep.subr.mxu0 0.0
  %575 = vmatpush1.msra.mxu0 0.0
  %576 = vmatprep.subr.mxu0 0.0
  %577 = vmatpush1.msra.mxu0 0.0
  %578 = vmatprep.subr.mxu0 0.0
  %579 = vmatpush1.msra.mxu0 0.0
  %580 = vmatprep.subr.mxu0 0.0
  %581 = vmatpush1.msra.mxu0 0.0
  %582 = vmatprep.subr.mxu0 0.0
  %583 = vmatpush1.msra.mxu0 0.0
  %584 = vmatprep.subr.mxu0 0.0
  %585 = vmatpush1.msra.mxu0 0.0
  %586 = vmatprep.subr.mxu0 0.0
  %587 = vmatpush1.msra.mxu0 0.0
  %588 = vmatprep.subr.mxu0 0.0
  %589 = vmatpush1.msra.mxu0 0.0
  %590 = vmatprep.subr.mxu0 0.0
  %591 = vmatpush1.msra.mxu0 0.0
  %592 = vmatprep.subr.mxu0 0.0
  %593 = vmatpush1.msra.mxu0 0.0
  %594 = vmatprep.subr.mxu0 0.0
  %595 = vmatpush1.msra.mxu0 0.0
  %596 = vmatprep.subr.mxu0 0.0
  %597 = vmatpush1.msra.mxu0 0.0
  %598 = vmatprep.subr.mxu0 0.0
  %599 = vmatpush1.msra.mxu0 0.0
  %600 = vmatprep.subr.mxu0 0.0
  %601 = vmatpush1.msra.mxu0 0.0
  %602 = vmatprep.subr.mxu0 0.0
  %603 = vmatpush1.msra.mxu0 0.0
  %604 = vmatprep.subr.mxu0 0.0
  %605 = vmatpush1.msra.mxu0 0.0
  %606 = vmatprep.subr.mxu0 0.0
  %607 = vmatpush1.msra.mxu0 0.0
  %608 = vmatprep.mubr.f32.mxu0 0.0
  %609 = vmatmul.mubr.f32.gmra.mrb[0].mxu0 %v542
  %v610 = vpop.f32.mrb[0].mxu0
  %v611 = vadd.f32 0.0, %v610
  %v612 = vpop.f32.mrb[0].mxu0
  %613 = vdwg.mxu0
  %v614 = vadd.f32 %v118, %v611
  %v615 = vxor.u32 %v614, 2147483648
  %v616 = vmul.f32 %v615, 1.442695
  %v617 = vpow.pop %v616
  %v618 = vadd.f32 %v617, 1.0
  %v619 = vrcp.pop %v618
  %v620 = vmul.f32 1.0, %v619
  %v621 = vtanh.pop %v614
  %v622 = vmul.f32 %v620, %v529
  %624 = vrot.lane.b32.xlu0 %v621, 98
  %v625 = vpop.permute.xlu0 %624
  %v627 = vmul.f32 %v620, %v625
  %629 = vrot.lane.b32.xlu0 %v627, 10
  %v630 = vpop.permute.xlu0 %629
  %v632 = vadd.f32 %v622, %v630
  %v633 = vtanh.pop %v632
  %635 = vrot.lane.b32.xlu0 %v633, 10
  %v636 = vpop.permute.xlu0 %635
  %v638 = vmul.f32 %v620, %v636
  %640 = vrot.lane.b32.xlu0 %v638, 108
  %v641 = vpop.permute.xlu0 %640
  %s643 = scalar_lea.vmem [#allocation2], 8
  %644 = vst.msk [vmem:[%s643] sm:$0x3] %vm231, %v641
  %v645 = vsel %vm124, %v641, 0
  %647 = vmatprep.subr.mxu0 0.0
  %648 = vmatpush1.msra.mxu0 %v122
  %649 = vmatprep.subr.mxu0 0.0
  %650 = vmatpush1.msra.mxu0 %v130
  %651 = vmatprep.subr.mxu0 0.0
  %652 = vmatpush1.msra.mxu0 0.0
  %653 = vmatprep.subr.mxu0 0.0
  %654 = vmatpush1.msra.mxu0 0.0
  %655 = vmatprep.subr.mxu0 0.0
  %656 = vmatpush1.msra.mxu0 0.0
  %657 = vmatprep.subr.mxu0 0.0
  %658 = vmatpush1.msra.mxu0 0.0
  %659 = vmatprep.subr.mxu0 0.0
  %660 = vmatpush1.msra.mxu0 0.0
  %661 = vmatprep.subr.mxu0 0.0
  %662 = vmatpush1.msra.mxu0 0.0
  %663 = vmatprep.subr.mxu0 0.0
  %664 = vmatpush1.msra.mxu0 0.0
  %665 = vmatprep.subr.mxu0 0.0
  %666 = vmatpush1.msra.mxu0 0.0
  %667 = vmatprep.subr.mxu0 0.0
  %668 = vmatpush1.msra.mxu0 0.0
  %669 = vmatprep.subr.mxu0 0.0
  %670 = vmatpush1.msra.mxu0 0.0
  %671 = vmatprep.subr.mxu0 0.0
  %672 = vmatpush1.msra.mxu0 0.0
  %673 = vmatprep.subr.mxu0 0.0
  %674 = vmatpush1.msra.mxu0 0.0
  %675 = vmatprep.subr.mxu0 0.0
  %676 = vmatpush1.msra.mxu0 0.0
  %677 = vmatprep.subr.mxu0 0.0
  %678 = vmatpush1.msra.mxu0 0.0
  %679 = vmatprep.subr.mxu0 0.0
  %680 = vmatpush1.msra.mxu0 0.0
  %681 = vmatprep.subr.mxu0 0.0
  %682 = vmatpush1.msra.mxu0 0.0
  %683 = vmatprep.subr.mxu0 0.0
  %684 = vmatpush1.msra.mxu0 0.0
  %685 = vmatprep.subr.mxu0 0.0
  %686 = vmatpush1.msra.mxu0 0.0
  %687 = vmatprep.subr.mxu0 0.0
  %688 = vmatpush1.msra.mxu0 0.0
  %689 = vmatprep.subr.mxu0 0.0
  %690 = vmatpush1.msra.mxu0 0.0
  %691 = vmatprep.subr.mxu0 0.0
  %692 = vmatpush1.msra.mxu0 0.0
  %693 = vmatprep.subr.mxu0 0.0
  %694 = vmatpush1.msra.mxu0 0.0
  %695 = vmatprep.subr.mxu0 0.0
  %696 = vmatpush1.msra.mxu0 0.0
  %697 = vmatprep.subr.mxu0 0.0
  %698 = vmatpush1.msra.mxu0 0.0
  %699 = vmatprep.subr.mxu0 0.0
  %700 = vmatpush1.msra.mxu0 0.0
  %701 = vmatprep.subr.mxu0 0.0
  %702 = vmatpush1.msra.mxu0 0.0
  %703 = vmatprep.subr.mxu0 0.0
  %704 = vmatpush1.msra.mxu0 0.0
  %705 = vmatprep.subr.mxu0 0.0
  %706 = vmatpush1.msra.mxu0 0.0
  %707 = vmatprep.subr.mxu0 0.0
  %708 = vmatpush1.msra.mxu0 0.0
  %709 = vmatprep.subr.mxu0 0.0
  %710 = vmatpush1.msra.mxu0 0.0
  %711 = vmatprep.mubr.f32.mxu0 0.0
  %712 = vmatmul.mubr.f32.gmra.mrb[0].mxu0 %v645
  %v713 = vpop.f32.mrb[0].mxu0
  %v714 = vadd.f32 0.0, %v713
  %v715 = vpop.f32.mrb[0].mxu0
  %716 = vdwg.mxu0
  %v717 = vadd.f32 %v119, %v714
  %v718 = vxor.u32 %v717, 2147483648
  %v719 = vmul.f32 %v718, 1.442695
  %v720 = vpow.pop %v719
  %v721 = vadd.f32 %v720, 1.0
  %v722 = vrcp.pop %v721
  %v723 = vmul.f32 1.0, %v722
  %v724 = vtanh.pop %v717
  %v725 = vmul.f32 %v723, %v632
  %727 = vrot.lane.b32.xlu0 %v724, 98
  %v728 = vpop.permute.xlu0 %727
  %v730 = vmul.f32 %v723, %v728
  %732 = vrot.lane.b32.xlu0 %v730, 10
  %v733 = vpop.permute.xlu0 %732
  %v735 = vadd.f32 %v725, %v733
  %v736 = vtanh.pop %v735
  %738 = vrot.lane.b32.xlu0 %v736, 10
  %v739 = vpop.permute.xlu0 %738
  %v741 = vmul.f32 %v723, %v739
  %743 = vrot.lane.b32.xlu0 %v741, 108
  %v744 = vpop.permute.xlu0 %743
  %s746 = scalar_lea.vmem [#allocation2], 10
  %747 = vst.msk [vmem:[%s746] sm:$0x3] %vm231, %v744
  %v748 = vsel %vm124, %v744, 0
  %750 = vmatprep.subr.mxu0 0.0
  %751 = vmatpush1.msra.mxu0 %v122
  %752 = vmatprep.subr.mxu0 0.0
  %753 = vmatpush1.msra.mxu0 %v130
  %754 = vmatprep.subr.mxu0 0.0
  %755 = vmatpush1.msra.mxu0 0.0
  %756 = vmatprep.subr.mxu0 0.0
  %757 = vmatpush1.msra.mxu0 0.0
  %758 = vmatprep.subr.mxu0 0.0
  %759 = vmatpush1.msra.mxu0 0.0
  %760 = vmatprep.subr.mxu0 0.0
  %761 = vmatpush1.msra.mxu0 0.0
  %762 = vmatprep.subr.mxu0 0.0
  %763 = vmatpush1.msra.mxu0 0.0
  %764 = vmatprep.subr.mxu0 0.0
  %765 = vmatpush1.msra.mxu0 0.0
  %766 = vmatprep.subr.mxu0 0.0
  %767 = vmatpush1.msra.mxu0 0.0
  %768 = vmatprep.subr.mxu0 0.0
  %769 = vmatpush1.msra.mxu0 0.0
  %770 = vmatprep.subr.mxu0 0.0
  %771 = vmatpush1.msra.mxu0 0.0
  %772 = vmatprep.subr.mxu0 0.0
  %773 = vmatpush1.msra.mxu0 0.0
  %774 = vmatprep.subr.mxu0 0.0
  %775 = vmatpush1.msra.mxu0 0.0
  %776 = vmatprep.subr.mxu0 0.0
  %777 = vmatpush1.msra.mxu0 0.0
  %778 = vmatprep.subr.mxu0 0.0
  %779 = vmatpush1.msra.mxu0 0.0
  %780 = vmatprep.subr.mxu0 0.0
  %781 = vmatpush1.msra.mxu0 0.0
  %782 = vmatprep.subr.mxu0 0.0
  %783 = vmatpush1.msra.mxu0 0.0
  %784 = vmatprep.subr.mxu0 0.0
  %785 = vmatpush1.msra.mxu0 0.0
  %786 = vmatprep.subr.mxu0 0.0
  %787 = vmatpush1.msra.mxu0 0.0
  %788 = vmatprep.subr.mxu0 0.0
  %789 = vmatpush1.msra.mxu0 0.0
  %790 = vmatprep.subr.mxu0 0.0
  %791 = vmatpush1.msra.mxu0 0.0
  %792 = vmatprep.subr.mxu0 0.0
  %793 = vmatpush1.msra.mxu0 0.0
  %794 = vmatprep.subr.mxu0 0.0
  %795 = vmatpush1.msra.mxu0 0.0
  %796 = vmatprep.subr.mxu0 0.0
  %797 = vmatpush1.msra.mxu0 0.0
  %798 = vmatprep.subr.mxu0 0.0
  %799 = vmatpush1.msra.mxu0 0.0
  %800 = vmatprep.subr.mxu0 0.0
  %801 = vmatpush1.msra.mxu0 0.0
  %802 = vmatprep.subr.mxu0 0.0
  %803 = vmatpush1.msra.mxu0 0.0
  %804 = vmatprep.subr.mxu0 0.0
  %805 = vmatpush1.msra.mxu0 0.0
  %806 = vmatprep.subr.mxu0 0.0
  %807 = vmatpush1.msra.mxu0 0.0
  %808 = vmatprep.subr.mxu0 0.0
  %809 = vmatpush1.msra.mxu0 0.0
  %810 = vmatprep.subr.mxu0 0.0
  %811 = vmatpush1.msra.mxu0 0.0
  %812 = vmatprep.subr.mxu0 0.0
  %813 = vmatpush1.msra.mxu0 0.0
  %814 = vmatprep.mubr.f32.mxu0 0.0
  %815 = vmatmul.mubr.f32.gmra.mrb[0].mxu0 %v748
  %v816 = vpop.f32.mrb[0].mxu0
  %v817 = vadd.f32 0.0, %v816
  %v818 = vpop.f32.mrb[0].mxu0
  %819 = vdwg.mxu0
  %v820 = vadd.f32 %v120, %v817
  %v821 = vxor.u32 %v820, 2147483648
  %v822 = vmul.f32 %v821, 1.442695
  %v823 = vpow.pop %v822
  %v824 = vadd.f32 %v823, 1.0
  %v825 = vrcp.pop %v824
  %v826 = vmul.f32 1.0, %v825
  %v827 = vtanh.pop %v820
  %v828 = vmul.f32 %v826, %v735
  %830 = vrot.lane.b32.xlu0 %v827, 98
  %v831 = vpop.permute.xlu0 %830
  %v833 = vmul.f32 %v826, %v831
  %835 = vrot.lane.b32.xlu0 %v833, 10
  %v836 = vpop.permute.xlu0 %835
  %v838 = vadd.f32 %v828, %v836
  %v839 = vtanh.pop %v838
  %841 = vrot.lane.b32.xlu0 %v839, 10
  %v842 = vpop.permute.xlu0 %841
  %v844 = vmul.f32 %v826, %v842
  %846 = vrot.lane.b32.xlu0 %v844, 108
  %v847 = vpop.permute.xlu0 %846
  %s849 = scalar_lea.vmem [#allocation2], 12
  %850 = vst.msk [vmem:[%s849] sm:$0x3] %vm231, %v847
  %v851 = vsel %vm124, %v847, 0
  %853 = vmatprep.subr.mxu0 0.0
  %854 = vmatpush1.msra.mxu0 %v122
  %855 = vmatprep.subr.mxu0 0.0
  %856 = vmatpush1.msra.mxu0 %v130
  %857 = vmatprep.subr.mxu0 0.0
  %858 = vmatpush1.msra.mxu0 0.0
  %859 = vmatprep.subr.mxu0 0.0
  %860 = vmatpush1.msra.mxu0 0.0
  %861 = vmatprep.subr.mxu0 0.0
  %862 = vmatpush1.msra.mxu0 0.0
  %863 = vmatprep.subr.mxu0 0.0
  %864 = vmatpush1.msra.mxu0 0.0
  %865 = vmatprep.subr.mxu0 0.0
  %866 = vmatpush1.msra.mxu0 0.0
  %867 = vmatprep.subr.mxu0 0.0
  %868 = vmatpush1.msra.mxu0 0.0
  %869 = vmatprep.subr.mxu0 0.0
  %870 = vmatpush1.msra.mxu0 0.0
  %871 = vmatprep.subr.mxu0 0.0
  %872 = vmatpush1.msra.mxu0 0.0
  %873 = vmatprep.subr.mxu0 0.0
  %874 = vmatpush1.msra.mxu0 0.0
  %875 = vmatprep.subr.mxu0 0.0
  %876 = vmatpush1.msra.mxu0 0.0
  %877 = vmatprep.subr.mxu0 0.0
  %878 = vmatpush1.msra.mxu0 0.0
  %879 = vmatprep.subr.mxu0 0.0
  %880 = vmatpush1.msra.mxu0 0.0
  %881 = vmatprep.subr.mxu0 0.0
  %882 = vmatpush1.msra.mxu0 0.0
  %883 = vmatprep.subr.mxu0 0.0
  %884 = vmatpush1.msra.mxu0 0.0
  %885 = vmatprep.subr.mxu0 0.0
  %886 = vmatpush1.msra.mxu0 0.0
  %887 = vmatprep.subr.mxu0 0.0
  %888 = vmatpush1.msra.mxu0 0.0
  %889 = vmatprep.subr.mxu0 0.0
  %890 = vmatpush1.msra.mxu0 0.0
  %891 = vmatprep.subr.mxu0 0.0
  %892 = vmatpush1.msra.mxu0 0.0
  %893 = vmatprep.subr.mxu0 0.0
  %894 = vmatpush1.msra.mxu0 0.0
  %895 = vmatprep.subr.mxu0 0.0
  %896 = vmatpush1.msra.mxu0 0.0
  %897 = vmatprep.subr.mxu0 0.0
  %898 = vmatpush1.msra.mxu0 0.0
  %899 = vmatprep.subr.mxu0 0.0
  %900 = vmatpush1.msra.mxu0 0.0
  %901 = vmatprep.subr.mxu0 0.0
  %902 = vmatpush1.msra.mxu0 0.0
  %903 = vmatprep.subr.mxu0 0.0
  %904 = vmatpush1.msra.mxu0 0.0
  %905 = vmatprep.subr.mxu0 0.0
  %906 = vmatpush1.msra.mxu0 0.0
  %907 = vmatprep.subr.mxu0 0.0
  %908 = vmatpush1.msra.mxu0 0.0
  %909 = vmatprep.subr.mxu0 0.0
  %910 = vmatpush1.msra.mxu0 0.0
  %911 = vmatprep.subr.mxu0 0.0
  %912 = vmatpush1.msra.mxu0 0.0
  %913 = vmatprep.subr.mxu0 0.0
  %914 = vmatpush1.msra.mxu0 0.0
  %915 = vmatprep.subr.mxu0 0.0
  %916 = vmatpush1.msra.mxu0 0.0
  %917 = vmatprep.mubr.f32.mxu0 0.0
  %918 = vmatmul.mubr.f32.gmra.mrb[0].mxu0 %v851
  %v919 = vpop.f32.mrb[0].mxu0
  %v920 = vadd.f32 0.0, %v919
  %v921 = vpop.f32.mrb[0].mxu0
  %922 = vdwg.mxu0
  %v923 = vadd.f32 %v121, %v920
  %v924 = vxor.u32 %v923, 2147483648
  %v925 = vmul.f32 %v924, 1.442695
  %v926 = vpow.pop %v925
  %v927 = vadd.f32 %v926, 1.0
  %v928 = vrcp.pop %v927
  %v929 = vmul.f32 1.0, %v928
  %v930 = vtanh.pop %v923
  %v931 = vmul.f32 %v929, %v838
  %933 = vrot.lane.b32.xlu0 %v930, 98
  %v934 = vpop.permute.xlu0 %933
  %v936 = vmul.f32 %v929, %v934
  %938 = vrot.lane.b32.xlu0 %v936, 10
  %v939 = vpop.permute.xlu0 %938
  %v941 = vadd.f32 %v931, %v939
  %v942 = vtanh.pop %v941
  %944 = vrot.lane.b32.xlu0 %v942, 10
  %v945 = vpop.permute.xlu0 %944
  %v947 = vmul.f32 %v929, %v945
  %949 = vrot.lane.b32.xlu0 %v947, 108
  %v950 = vpop.permute.xlu0 %949
  %s952 = scalar_lea.vmem [#allocation2], 14
  %953 = vst.msk [vmem:[%s952] sm:$0x3] %vm231, %v950
  %v954 = vld [vmem:[#allocation2] sm:$0x3]
  %v955 = vld [vmem:[#allocation2 + $0x2] sm:$0x3]
  %v956 = vld [vmem:[#allocation2 + $0x4] sm:$0x3]
  %v957 = vld [vmem:[#allocation2 + $0x6] sm:$0x3]
  %v958 = vld [vmem:[#allocation2 + $0x8] sm:$0x3]
  %v959 = vld [vmem:[#allocation2 + $0xa] sm:$0x3]
  %v960 = vld [vmem:[#allocation2 + $0xc] sm:$0x3]
  %v961 = vld [vmem:[#allocation2 + $0xe] sm:$0x3]
  %v962 = vld [vmem:[%s4] sm:$0xff]
  %v963 = vld [vmem:[%s4 + $0x8] sm:$0xff]
  %v964 = vld [vmem:[%s4 + $0x10] sm:$0xf]
  %v965 = vld [vmem:[%s5] sm:$0xff]
  %v966 = vld [vmem:[%s5 + $0x8] sm:$0x3]
  %v967 = vld [vmem:[%s6] sm:$0x1]
  %v976 = vrot.slane %v955, 7
  %vm977 = vcmask 1041409
  %v978 = vsel %vm977, %v976, %v954
  %v979 = vrot.slane %v956, 6
  %vm980 = vcmask 1042434
  %v981 = vsel %vm980, %v979, %v978
  %v982 = vrot.slane %v957, 5
  %vm983 = vcmask 1043459
  %v984 = vsel %vm983, %v982, %v981
  %v985 = vrot.slane %v958, 4
  %vm986 = vcmask 1044484
  %v987 = vsel %vm986, %v985, %v984
  %v988 = vrot.slane %v959, 3
  %vm989 = vcmask 1045509
  %v990 = vsel %vm989, %v988, %v987
  %v991 = vrot.slane %v960, 2
  %vm992 = vcmask 1046534
  %v993 = vsel %vm992, %v991, %v990
  %v994 = vrot.slane %v961, 1
  %vm995 = vcmask 1047559
  %v996 = vsel %vm995, %v994, %v993
  %v998 = vrot.slane %v954, 1
  %v999 = vsel %vm977, %v955, %v998
  %v1000 = vrot.slane %v956, 7
  %v1001 = vsel %vm980, %v1000, %v999
  %v1002 = vrot.slane %v957, 6
  %v1003 = vsel %vm983, %v1002, %v1001
  %v1004 = vrot.slane %v958, 5
  %v1005 = vsel %vm986, %v1004, %v1003
  %v1006 = vrot.slane %v959, 4
  %v1007 = vsel %vm989, %v1006, %v1005
  %v1008 = vrot.slane %v960, 3
  %v1009 = vsel %vm992, %v1008, %v1007
  %v1010 = vrot.slane %v961, 2
  %v1011 = vsel %vm995, %v1010, %v1009
  %1012 = vrot.lane.b32.xlu0 %v1011, 10
  %v1013 = vpop.permute.xlu0 %1012
  %v1015 = vsel %vm124, %v996, %v1013
  %v1016 = vsel %vm980, %v976, %v954
  %v1017 = vsel %vm983, %v979, %v1016
  %v1018 = vsel %vm986, %v982, %v1017
  %v1019 = vsel %vm989, %v985, %v1018
  %v1020 = vsel %vm992, %v988, %v1019
  %v1021 = vsel %vm995, %v991, %v1020
  %v1024 = vrot.slane %v954, 7
  %v1025 = vrot.slane %v955, 6
  %v1026 = vsel %vm980, %v1025, %v1024
  %v1027 = vrot.slane %v956, 5
  %v1028 = vsel %vm983, %v1027, %v1026
  %v1029 = vrot.slane %v957, 4
  %v1030 = vsel %vm986, %v1029, %v1028
  %v1031 = vrot.slane %v958, 3
  %v1032 = vsel %vm989, %v1031, %v1030
  %v1033 = vrot.slane %v959, 2
  %v1034 = vsel %vm992, %v1033, %v1032
  %v1035 = vrot.slane %v960, 1
  %v1036 = vsel %vm995, %v1035, %v1034
  %1037 = vrot.lane.b32.xlu0 %v1036, 10
  %v1038 = vpop.permute.xlu0 %1037
  %1039 = vrot.lane.b32.xlu0 %v961, 10
  %v1040 = vpop.permute.xlu0 %1039
  %v1043 = vsel %vm124, %v1021, %v1038
  %v1044 = vsel %vm124, %v994, %v1040
  %vm1047 = vcmask 1046528
  %v1048 = vrot.slane %v1043, 1
  %v1049 = vrot.slane %v1044, 1
  %v1050 = vsel %vm1047, %v1048, %v1049
  %v1052 = vlaneseq
  %v1053 = vshrl.u32 %v1052, 7
  %v1054 = vsub.s32 0, %v1053
  %v1055 = vrot.slane %v967, %v1054
  %vm1057 = vcmask 162816
  %v1059 = vsel %vm1057, %v1015, 0
  %v1061 = vsel %vm1057, %v1050, 0
  %vm1063 = vcmask 1043456
  %v1065 = vsel %vm1063, %v964, 0
  %1067 = vmatprep.subr.mxu0 0.0
  %1068 = vmatpush1.msra.mxu0 %v962
  %1069 = vmatprep.subr.mxu0 0.0
  %1070 = vmatpush1.msra.mxu0 %v963
  %1071 = vmatprep.subr.mxu0 0.0
  %1072 = vmatpush1.msra.mxu0 %v1065
  %1073 = vmatprep.subr.mxu0 0.0
  %1074 = vmatpush1.msra.mxu0 0.0
  %1075 = vmatprep.subr.mxu0 0.0
  %1076 = vmatpush1.msra.mxu0 0.0
  %1077 = vmatprep.subr.mxu0 0.0
  %1078 = vmatpush1.msra.mxu0 0.0
  %1079 = vmatprep.subr.mxu0 0.0
  %1080 = vmatpush1.msra.mxu0 0.0
  %1081 = vmatprep.subr.mxu0 0.0
  %1082 = vmatpush1.msra.mxu0 0.0
  %1083 = vmatprep.subr.mxu0 0.0
  %1084 = vmatpush1.msra.mxu0 0.0
  %1085 = vmatprep.subr.mxu0 0.0
  %1086 = vmatpush1.msra.mxu0 0.0
  %1087 = vmatprep.subr.mxu0 0.0
  %1088 = vmatpush1.msra.mxu0 0.0
  %1089 = vmatprep.subr.mxu0 0.0
  %1090 = vmatpush1.msra.mxu0 0.0
  %1091 = vmatprep.subr.mxu0 0.0
  %1092 = vmatpush1.msra.mxu0 0.0
  %1093 = vmatprep.subr.mxu0 0.0
  %1094 = vmatpush1.msra.mxu0 0.0
  %1095 = vmatprep.subr.mxu0 0.0
  %1096 = vmatpush1.msra.mxu0 0.0
  %1097 = vmatprep.subr.mxu0 0.0
  %1098 = vmatpush1.msra.mxu0 0.0
  %1099 = vmatprep.subr.mxu0 0.0
  %1100 = vmatpush1.msra.mxu0 0.0
  %1101 = vmatprep.subr.mxu0 0.0
  %1102 = vmatpush1.msra.mxu0 0.0
  %1103 = vmatprep.subr.mxu0 0.0
  %1104 = vmatpush1.msra.mxu0 0.0
  %1105 = vmatprep.subr.mxu0 0.0
  %1106 = vmatpush1.msra.mxu0 0.0
  %1107 = vmatprep.subr.mxu0 0.0
  %1108 = vmatpush1.msra.mxu0 0.0
  %1109 = vmatprep.subr.mxu0 0.0
  %1110 = vmatpush1.msra.mxu0 0.0
  %1111 = vmatprep.subr.mxu0 0.0
  %1112 = vmatpush1.msra.mxu0 0.0
  %1113 = vmatprep.subr.mxu0 0.0
  %1114 = vmatpush1.msra.mxu0 0.0
  %1115 = vmatprep.subr.mxu0 0.0
  %1116 = vmatpush1.msra.mxu0 0.0
  %1117 = vmatprep.subr.mxu0 0.0
  %1118 = vmatpush1.msra.mxu0 0.0
  %1119 = vmatprep.subr.mxu0 0.0
  %1120 = vmatpush1.msra.mxu0 0.0
  %1121 = vmatprep.subr.mxu0 0.0
  %1122 = vmatpush1.msra.mxu0 0.0
  %1123 = vmatprep.subr.mxu0 0.0
  %1124 = vmatpush1.msra.mxu0 0.0
  %1125 = vmatprep.subr.mxu0 0.0
  %1126 = vmatpush1.msra.mxu0 0.0
  %1127 = vmatprep.subr.mxu0 0.0
  %1128 = vmatpush1.msra.mxu0 0.0
  %1129 = vmatprep.subr.mxu0 0.0
  %1130 = vmatpush1.msra.mxu0 0.0
  %1131 = vmatprep.mubr.f32.mxu0 0.0
  %1132 = vmatmul.mubr.f32.gmra.mrb[0].mxu0 %v1059
  %v1133 = vpop.f32.mrb[0].mxu0
  %v1134 = vadd.f32 %v1055, %v1133
  %v1135 = vpop.f32.mrb[0].mxu0
  %1136 = vmatprep.mubr.f32.mxu0 0.0
  %1137 = vmatmul.mubr.f32.gmra.mrb[0].mxu0 %v1061
  %v1138 = vpop.f32.mrb[0].mxu0
  %v1139 = vadd.f32 %v1055, %v1138
  %v1140 = vpop.f32.mrb[0].mxu0
  %1141 = vdwg.mxu0
  %v1143 = vsel %vm128, %v966, 0
  %1145 = vmatprep.subr.mxu0 0.0
  %1146 = vmatpush1.msra.mxu0 %v965
  %1147 = vmatprep.subr.mxu0 0.0
  %1148 = vmatpush1.msra.mxu0 %v1143
  %1149 = vmatprep.subr.mxu0 0.0
  %1150 = vmatpush1.msra.mxu0 0.0
  %1151 = vmatprep.subr.mxu0 0.0
  %1152 = vmatpush1.msra.mxu0 0.0
  %1153 = vmatprep.subr.mxu0 0.0
  %1154 = vmatpush1.msra.mxu0 0.0
  %1155 = vmatprep.subr.mxu0 0.0
  %1156 = vmatpush1.msra.mxu0 0.0
  %1157 = vmatprep.subr.mxu0 0.0
  %1158 = vmatpush1.msra.mxu0 0.0
  %1159 = vmatprep.subr.mxu0 0.0
  %1160 = vmatpush1.msra.mxu0 0.0
  %1161 = vmatprep.subr.mxu0 0.0
  %1162 = vmatpush1.msra.mxu0 0.0
  %1163 = vmatprep.subr.mxu0 0.0
  %1164 = vmatpush1.msra.mxu0 0.0
  %1165 = vmatprep.subr.mxu0 0.0
  %1166 = vmatpush1.msra.mxu0 0.0
  %1167 = vmatprep.subr.mxu0 0.0
  %1168 = vmatpush1.msra.mxu0 0.0
  %1169 = vmatprep.subr.mxu0 0.0
  %1170 = vmatpush1.msra.mxu0 0.0
  %1171 = vmatprep.subr.mxu0 0.0
  %1172 = vmatpush1.msra.mxu0 0.0
  %1173 = vmatprep.subr.mxu0 0.0
  %1174 = vmatpush1.msra.mxu0 0.0
  %1175 = vmatprep.subr.mxu0 0.0
  %1176 = vmatpush1.msra.mxu0 0.0
  %1177 = vmatprep.subr.mxu0 0.0
  %1178 = vmatpush1.msra.mxu0 0.0
  %1179 = vmatprep.subr.mxu0 0.0
  %1180 = vmatpush1.msra.mxu0 0.0
  %1181 = vmatprep.subr.mxu0 0.0
  %1182 = vmatpush1.msra.mxu0 0.0
  %1183 = vmatprep.subr.mxu0 0.0
  %1184 = vmatpush1.msra.mxu0 0.0
  %1185 = vmatprep.subr.mxu0 0.0
  %1186 = vmatpush1.msra.mxu0 0.0
  %1187 = vmatprep.subr.mxu0 0.0
  %1188 = vmatpush1.msra.mxu0 0.0
  %1189 = vmatprep.subr.mxu0 0.0
  %1190 = vmatpush1.msra.mxu0 0.0
  %1191 = vmatprep.subr.mxu0 0.0
  %1192 = vmatpush1.msra.mxu0 0.0
  %1193 = vmatprep.subr.mxu0 0.0
  %1194 = vmatpush1.msra.mxu0 0.0
  %1195 = vmatprep.subr.mxu0 0.0
  %1196 = vmatpush1.msra.mxu0 0.0
  %1197 = vmatprep.subr.mxu0 0.0
  %1198 = vmatpush1.msra.mxu0 0.0
  %1199 = vmatprep.subr.mxu0 0.0
  %1200 = vmatpush1.msra.mxu0 0.0
  %1201 = vmatprep.subr.mxu0 0.0
  %1202 = vmatpush1.msra.mxu0 0.0
  %1203 = vmatprep.subr.mxu0 0.0
  %1204 = vmatpush1.msra.mxu0 0.0
  %1205 = vmatprep.subr.mxu0 0.0
  %1206 = vmatpush1.msra.mxu0 0.0
  %1207 = vmatprep.subr.mxu0 0.0
  %1208 = vmatpush1.msra.mxu0 0.0
  %1209 = vmatprep.mubr.f32.mxu0 0.0
  %1210 = vmatmul.mubr.f32.gmra.mrb[0].mxu0 %v126
  %v1211 = vpop.f32.mrb[0].mxu0
  %v1212 = vadd.f32 0.0, %v1211
  %v1213 = vpop.f32.mrb[0].mxu0
  %1214 = vdwg.mxu0
  %v1215 = vadd.f32 %v1134, %v1212
  %v1216 = vxor.u32 %v1215, 2147483648
  %v1217 = vmul.f32 %v1216, 1.442695
  %v1218 = vpow.pop %v1217
  %v1219 = vadd.f32 %v1218, 1.0
  %v1220 = vrcp.pop %v1219
  %v1221 = vmul.f32 1.0, %v1220
  %v1222 = vtanh.pop %v1215
  %v1223 = vmul.f32 %v1221, 0.0
  %1225 = vrot.lane.b32.xlu0 %v1222, 98
  %v1226 = vpop.permute.xlu0 %1225
  %v1228 = vmul.f32 %v1221, %v1226
  %1230 = vrot.lane.b32.xlu0 %v1228, 10
  %v1231 = vpop.permute.xlu0 %1230
  %v1233 = vadd.f32 %v1223, %v1231
  %v1234 = vtanh.pop %v1233
  %1236 = vrot.lane.b32.xlu0 %v1234, 10
  %v1237 = vpop.permute.xlu0 %1236
  %v1239 = vmul.f32 %v1221, %v1237
  %1241 = vrot.lane.b32.xlu0 %v1239, 108
  %v1242 = vpop.permute.xlu0 %1241
  %v1243 = vsel %vm124, %v1242, 0
  %1245 = vmatprep.subr.mxu0 0.0
  %1246 = vmatpush1.msra.mxu0 %v965
  %1247 = vmatprep.subr.mxu0 0.0
  %1248 = vmatpush1.msra.mxu0 %v1143
  %1249 = vmatprep.subr.mxu0 0.0
  %1250 = vmatpush1.msra.mxu0 0.0
  %1251 = vmatprep.subr.mxu0 0.0
  %1252 = vmatpush1.msra.mxu0 0.0
  %1253 = vmatprep.subr.mxu0 0.0
  %1254 = vmatpush1.msra.mxu0 0.0
  %1255 = vmatprep.subr.mxu0 0.0
  %1256 = vmatpush1.msra.mxu0 0.0
  %1257 = vmatprep.subr.mxu0 0.0
  %1258 = vmatpush1.msra.mxu0 0.0
  %1259 = vmatprep.subr.mxu0 0.0
  %1260 = vmatpush1.msra.mxu0 0.0
  %1261 = vmatprep.subr.mxu0 0.0
  %1262 = vmatpush1.msra.mxu0 0.0
  %1263 = vmatprep.subr.mxu0 0.0
  %1264 = vmatpush1.msra.mxu0 0.0
  %1265 = vmatprep.subr.mxu0 0.0
  %1266 = vmatpush1.msra.mxu0 0.0
  %1267 = vmatprep.subr.mxu0 0.0
  %1268 = vmatpush1.msra.mxu0 0.0
  %1269 = vmatprep.subr.mxu0 0.0
  %1270 = vmatpush1.msra.mxu0 0.0
  %1271 = vmatprep.subr.mxu0 0.0
  %1272 = vmatpush1.msra.mxu0 0.0
  %1273 = vmatprep.subr.mxu0 0.0
  %1274 = vmatpush1.msra.mxu0 0.0
  %1275 = vmatprep.subr.mxu0 0.0
  %1276 = vmatpush1.msra.mxu0 0.0
  %1277 = vmatprep.subr.mxu0 0.0
  %1278 = vmatpush1.msra.mxu0 0.0
  %1279 = vmatprep.subr.mxu0 0.0
  %1280 = vmatpush1.msra.mxu0 0.0
  %1281 = vmatprep.subr.mxu0 0.0
  %1282 = vmatpush1.msra.mxu0 0.0
  %1283 = vmatprep.subr.mxu0 0.0
  %1284 = vmatpush1.msra.mxu0 0.0
  %1285 = vmatprep.subr.mxu0 0.0
  %1286 = vmatpush1.msra.mxu0 0.0
  %1287 = vmatprep.subr.mxu0 0.0
  %1288 = vmatpush1.msra.mxu0 0.0
  %1289 = vmatprep.subr.mxu0 0.0
  %1290 = vmatpush1.msra.mxu0 0.0
  %1291 = vmatprep.subr.mxu0 0.0
  %1292 = vmatpush1.msra.mxu0 0.0
  %1293 = vmatprep.subr.mxu0 0.0
  %1294 = vmatpush1.msra.mxu0 0.0
  %1295 = vmatprep.subr.mxu0 0.0
  %1296 = vmatpush1.msra.mxu0 0.0
  %1297 = vmatprep.subr.mxu0 0.0
  %1298 = vmatpush1.msra.mxu0 0.0
  %1299 = vmatprep.subr.mxu0 0.0
  %1300 = vmatpush1.msra.mxu0 0.0
  %1301 = vmatprep.subr.mxu0 0.0
  %1302 = vmatpush1.msra.mxu0 0.0
  %1303 = vmatprep.subr.mxu0 0.0
  %1304 = vmatpush1.msra.mxu0 0.0
  %1305 = vmatprep.subr.mxu0 0.0
  %1306 = vmatpush1.msra.mxu0 0.0
  %1307 = vmatprep.subr.mxu0 0.0
  %1308 = vmatpush1.msra.mxu0 0.0
  %1309 = vmatprep.mubr.f32.mxu0 0.0
  %1310 = vmatmul.mubr.f32.gmra.mrb[0].mxu0 %v1243
  %v1311 = vpop.f32.mrb[0].mxu0
  %v1312 = vadd.f32 0.0, %v1311
  %v1313 = vpop.f32.mrb[0].mxu0
  %1314 = vdwg.mxu0
  %v1315 = vadd.f32 %v1139, %v1312
  %v1316 = vxor.u32 %v1315, 2147483648
  %v1317 = vmul.f32 %v1316, 1.442695
  %v1318 = vpow.pop %v1317
  %v1319 = vadd.f32 %v1318, 1.0
  %v1320 = vrcp.pop %v1319
  %v1321 = vmul.f32 1.0, %v1320
  %v1322 = vtanh.pop %v1315
  %v1323 = vmul.f32 %v1321, %v1233
  %1325 = vrot.lane.b32.xlu0 %v1322, 98
  %v1326 = vpop.permute.xlu0 %1325
  %v1328 = vmul.f32 %v1321, %v1326
  %1330 = vrot.lane.b32.xlu0 %v1328, 10
  %v1331 = vpop.permute.xlu0 %1330
  %v1333 = vadd.f32 %v1323, %v1331
  %v1334 = vtanh.pop %v1333
  %1336 = vrot.lane.b32.xlu0 %v1334, 10
  %v1337 = vpop.permute.xlu0 %1336
  %v1339 = vmul.f32 %v1321, %v1337
  %1342 = vrot.lane.b32.xlu0 %v1339, 108
  %v1343 = vpop.permute.xlu0 %1342
  %vm1345 = vcmask 39936
  %v1346 = vsel %vm1345, %v1242, %v1343
  %v1347 = vsel %vm1345, %v1343, %v1242
  %s1348 = scalar_lea.vmem %s4, 24
  %v1349 = vld [vmem:[%s1348] sm:$0xff]
  %v1350 = vld [vmem:[%s1348 + $0x8] sm:$0xff]
  %v1351 = vld [vmem:[%s1348 + $0x10] sm:$0xf]
  %s1352 = scalar_lea.vmem %s5, 16
  %v1353 = vld [vmem:[%s1352] sm:$0xff]
  %v1354 = vld [vmem:[%s1352 + $0x8] sm:$0x3]
  %s1355 = scalar_lea.vmem %s6, 1
  %v1356 = vld [vmem:[%s1355] sm:$0x1]
  %1358 = vrot.lane.b32.xlu0 %v1347, 10
  %v1359 = vpop.permute.xlu0 %1358
  %v1361 = vsel %vm124, %v1346, %v1359
  %1363 = vrot.lane.b32.xlu0 %v1346, 10
  %v1364 = vpop.permute.xlu0 %1363
  %v1366 = vsel %vm124, %v1347, %v1364
  %v1368 = vlaneseq
  %v1369 = vshrl.u32 %v1368, 7
  %v1370 = vsub.s32 0, %v1369
  %v1371 = vrot.slane %v1356, %v1370
  %v1374 = vsel %vm1057, %v1361, 0
  %v1377 = vsel %vm1057, %v1366, 0
  %v1380 = vsel %vm1063, %v1351, 0
  %1382 = vmatprep.subr.mxu0 0.0
  %1383 = vmatpush1.msra.mxu0 %v1349
  %1384 = vmatprep.subr.mxu0 0.0
  %1385 = vmatpush1.msra.mxu0 %v1350
  %1386 = vmatprep.subr.mxu0 0.0
  %1387 = vmatpush1.msra.mxu0 %v1380
  %1388 = vmatprep.subr.mxu0 0.0
  %1389 = vmatpush1.msra.mxu0 0.0
  %1390 = vmatprep.subr.mxu0 0.0
  %1391 = vmatpush1.msra.mxu0 0.0
  %1392 = vmatprep.subr.mxu0 0.0
  %1393 = vmatpush1.msra.mxu0 0.0
  %1394 = vmatprep.subr.mxu0 0.0
  %1395 = vmatpush1.msra.mxu0 0.0
  %1396 = vmatprep.subr.mxu0 0.0
  %1397 = vmatpush1.msra.mxu0 0.0
  %1398 = vmatprep.subr.mxu0 0.0
  %1399 = vmatpush1.msra.mxu0 0.0
  %1400 = vmatprep.subr.mxu0 0.0
  %1401 = vmatpush1.msra.mxu0 0.0
  %1402 = vmatprep.subr.mxu0 0.0
  %1403 = vmatpush1.msra.mxu0 0.0
  %1404 = vmatprep.subr.mxu0 0.0
  %1405 = vmatpush1.msra.mxu0 0.0
  %1406 = vmatprep.subr.mxu0 0.0
  %1407 = vmatpush1.msra.mxu0 0.0
  %1408 = vmatprep.subr.mxu0 0.0
  %1409 = vmatpush1.msra.mxu0 0.0
  %1410 = vmatprep.subr.mxu0 0.0
  %1411 = vmatpush1.msra.mxu0 0.0
  %1412 = vmatprep.subr.mxu0 0.0
  %1413 = vmatpush1.msra.mxu0 0.0
  %1414 = vmatprep.subr.mxu0 0.0
  %1415 = vmatpush1.msra.mxu0 0.0
  %1416 = vmatprep.subr.mxu0 0.0
  %1417 = vmatpush1.msra.mxu0 0.0
  %1418 = vmatprep.subr.mxu0 0.0
  %1419 = vmatpush1.msra.mxu0 0.0
  %1420 = vmatprep.subr.mxu0 0.0
  %1421 = vmatpush1.msra.mxu0 0.0
  %1422 = vmatprep.subr.mxu0 0.0
  %1423 = vmatpush1.msra.mxu0 0.0
  %1424 = vmatprep.subr.mxu0 0.0
  %1425 = vmatpush1.msra.mxu0 0.0
  %1426 = vmatprep.subr.mxu0 0.0
  %1427 = vmatpush1.msra.mxu0 0.0
  %1428 = vmatprep.subr.mxu0 0.0
  %1429 = vmatpush1.msra.mxu0 0.0
  %1430 = vmatprep.subr.mxu0 0.0
  %1431 = vmatpush1.msra.mxu0 0.0
  %1432 = vmatprep.subr.mxu0 0.0
  %1433 = vmatpush1.msra.mxu0 0.0
  %1434 = vmatprep.subr.mxu0 0.0
  %1435 = vmatpush1.msra.mxu0 0.0
  %1436 = vmatprep.subr.mxu0 0.0
  %1437 = vmatpush1.msra.mxu0 0.0
  %1438 = vmatprep.subr.mxu0 0.0
  %1439 = vmatpush1.msra.mxu0 0.0
  %1440 = vmatprep.subr.mxu0 0.0
  %1441 = vmatpush1.msra.mxu0 0.0
  %1442 = vmatprep.subr.mxu0 0.0
  %1443 = vmatpush1.msra.mxu0 0.0
  %1444 = vmatprep.subr.mxu0 0.0
  %1445 = vmatpush1.msra.mxu0 0.0
  %1446 = vmatprep.mubr.f32.mxu0 0.0
  %1447 = vmatmul.mubr.f32.gmra.mrb[0].mxu0 %v1374
  %v1448 = vpop.f32.mrb[0].mxu0
  %v1449 = vadd.f32 %v1371, %v1448
  %v1450 = vpop.f32.mrb[0].mxu0
  %1451 = vmatprep.mubr.f32.mxu0 0.0
  %1452 = vmatmul.mubr.f32.gmra.mrb[0].mxu0 %v1377
  %v1453 = vpop.f32.mrb[0].mxu0
  %v1454 = vadd.f32 %v1371, %v1453
  %v1455 = vpop.f32.mrb[0].mxu0
  %1456 = vdwg.mxu0
  %v1458 = vsel %vm128, %v1354, 0
  %1460 = vmatprep.subr.mxu0 0.0
  %1461 = vmatpush1.msra.mxu0 %v1353
  %1462 = vmatprep.subr.mxu0 0.0
  %1463 = vmatpush1.msra.mxu0 %v1458
  %1464 = vmatprep.subr.mxu0 0.0
  %1465 = vmatpush1.msra.mxu0 0.0
  %1466 = vmatprep.subr.mxu0 0.0
  %1467 = vmatpush1.msra.mxu0 0.0
  %1468 = vmatprep.subr.mxu0 0.0
  %1469 = vmatpush1.msra.mxu0 0.0
  %1470 = vmatprep.subr.mxu0 0.0
  %1471 = vmatpush1.msra.mxu0 0.0
  %1472 = vmatprep.subr.mxu0 0.0
  %1473 = vmatpush1.msra.mxu0 0.0
  %1474 = vmatprep.subr.mxu0 0.0
  %1475 = vmatpush1.msra.mxu0 0.0
  %1476 = vmatprep.subr.mxu0 0.0
  %1477 = vmatpush1.msra.mxu0 0.0
  %1478 = vmatprep.subr.mxu0 0.0
  %1479 = vmatpush1.msra.mxu0 0.0
  %1480 = vmatprep.subr.mxu0 0.0
  %1481 = vmatpush1.msra.mxu0 0.0
  %1482 = vmatprep.subr.mxu0 0.0
  %1483 = vmatpush1.msra.mxu0 0.0
  %1484 = vmatprep.subr.mxu0 0.0
  %1485 = vmatpush1.msra.mxu0 0.0
  %1486 = vmatprep.subr.mxu0 0.0
  %1487 = vmatpush1.msra.mxu0 0.0
  %1488 = vmatprep.subr.mxu0 0.0
  %1489 = vmatpush1.msra.mxu0 0.0
  %1490 = vmatprep.subr.mxu0 0.0
  %1491 = vmatpush1.msra.mxu0 0.0
  %1492 = vmatprep.subr.mxu0 0.0
  %1493 = vmatpush1.msra.mxu0 0.0
  %1494 = vmatprep.subr.mxu0 0.0
  %1495 = vmatpush1.msra.mxu0 0.0
  %1496 = vmatprep.subr.mxu0 0.0
  %1497 = vmatpush1.msra.mxu0 0.0
  %1498 = vmatprep.subr.mxu0 0.0
  %1499 = vmatpush1.msra.mxu0 0.0
  %1500 = vmatprep.subr.mxu0 0.0
  %1501 = vmatpush1.msra.mxu0 0.0
  %1502 = vmatprep.subr.mxu0 0.0
  %1503 = vmatpush1.msra.mxu0 0.0
  %1504 = vmatprep.subr.mxu0 0.0
  %1505 = vmatpush1.msra.mxu0 0.0
  %1506 = vmatprep.subr.mxu0 0.0
  %1507 = vmatpush1.msra.mxu0 0.0
  %1508 = vmatprep.subr.mxu0 0.0
  %1509 = vmatpush1.msra.mxu0 0.0
  %1510 = vmatprep.subr.mxu0 0.0
  %1511 = vmatpush1.msra.mxu0 0.0
  %1512 = vmatprep.subr.mxu0 0.0
  %1513 = vmatpush1.msra.mxu0 0.0
  %1514 = vmatprep.subr.mxu0 0.0
  %1515 = vmatpush1.msra.mxu0 0.0
  %1516 = vmatprep.subr.mxu0 0.0
  %1517 = vmatpush1.msra.mxu0 0.0
  %1518 = vmatprep.subr.mxu0 0.0
  %1519 = vmatpush1.msra.mxu0 0.0
  %1520 = vmatprep.subr.mxu0 0.0
  %1521 = vmatpush1.msra.mxu0 0.0
  %1522 = vmatprep.subr.mxu0 0.0
  %1523 = vmatpush1.msra.mxu0 0.0
  %1524 = vmatprep.mubr.f32.mxu0 0.0
  %1525 = vmatmul.mubr.f32.gmra.mrb[0].mxu0 %v126
  %v1526 = vpop.f32.mrb[0].mxu0
  %v1527 = vadd.f32 0.0, %v1526
  %v1528 = vpop.f32.mrb[0].mxu0
  %1529 = vdwg.mxu0
  %v1530 = vadd.f32 %v1449, %v1527
  %v1531 = vxor.u32 %v1530, 2147483648
  %v1532 = vmul.f32 %v1531, 1.442695
  %v1533 = vpow.pop %v1532
  %v1534 = vadd.f32 %v1533, 1.0
  %v1535 = vrcp.pop %v1534
  %v1536 = vmul.f32 1.0, %v1535
  %v1537 = vtanh.pop %v1530
  %v1538 = vmul.f32 %v1536, 0.0
  %1540 = vrot.lane.b32.xlu0 %v1537, 98
  %v1541 = vpop.permute.xlu0 %1540
  %v1543 = vmul.f32 %v1536, %v1541
  %1545 = vrot.lane.b32.xlu0 %v1543, 10
  %v1546 = vpop.permute.xlu0 %1545
  %v1548 = vadd.f32 %v1538, %v1546
  %v1549 = vtanh.pop %v1548
  %1551 = vrot.lane.b32.xlu0 %v1549, 10
  %v1552 = vpop.permute.xlu0 %1551
  %v1554 = vmul.f32 %v1536, %v1552
  %1556 = vrot.lane.b32.xlu0 %v1554, 108
  %v1557 = vpop.permute.xlu0 %1556
  %v1558 = vsel %vm124, %v1557, 0
  %1560 = vmatprep.subr.mxu0 0.0
  %1561 = vmatpush1.msra.mxu0 %v1353
  %1562 = vmatprep.subr.mxu0 0.0
  %1563 = vmatpush1.msra.mxu0 %v1458
  %1564 = vmatprep.subr.mxu0 0.0
  %1565 = vmatpush1.msra.mxu0 0.0
  %1566 = vmatprep.subr.mxu0 0.0
  %1567 = vmatpush1.msra.mxu0 0.0
  %1568 = vmatprep.subr.mxu0 0.0
  %1569 = vmatpush1.msra.mxu0 0.0
  %1570 = vmatprep.subr.mxu0 0.0
  %1571 = vmatpush1.msra.mxu0 0.0
  %1572 = vmatprep.subr.mxu0 0.0
  %1573 = vmatpush1.msra.mxu0 0.0
  %1574 = vmatprep.subr.mxu0 0.0
  %1575 = vmatpush1.msra.mxu0 0.0
  %1576 = vmatprep.subr.mxu0 0.0
  %1577 = vmatpush1.msra.mxu0 0.0
  %1578 = vmatprep.subr.mxu0 0.0
  %1579 = vmatpush1.msra.mxu0 0.0
  %1580 = vmatprep.subr.mxu0 0.0
  %1581 = vmatpush1.msra.mxu0 0.0
  %1582 = vmatprep.subr.mxu0 0.0
  %1583 = vmatpush1.msra.mxu0 0.0
  %1584 = vmatprep.subr.mxu0 0.0
  %1585 = vmatpush1.msra.mxu0 0.0
  %1586 = vmatprep.subr.mxu0 0.0
  %1587 = vmatpush1.msra.mxu0 0.0
  %1588 = vmatprep.subr.mxu0 0.0
  %1589 = vmatpush1.msra.mxu0 0.0
  %1590 = vmatprep.subr.mxu0 0.0
  %1591 = vmatpush1.msra.mxu0 0.0
  %1592 = vmatprep.subr.mxu0 0.0
  %1593 = vmatpush1.msra.mxu0 0.0
  %1594 = vmatprep.subr.mxu0 0.0
  %1595 = vmatpush1.msra.mxu0 0.0
  %1596 = vmatprep.subr.mxu0 0.0
  %1597 = vmatpush1.msra.mxu0 0.0
  %1598 = vmatprep.subr.mxu0 0.0
  %1599 = vmatpush1.msra.mxu0 0.0
  %1600 = vmatprep.subr.mxu0 0.0
  %1601 = vmatpush1.msra.mxu0 0.0
  %1602 = vmatprep.subr.mxu0 0.0
  %1603 = vmatpush1.msra.mxu0 0.0
  %1604 = vmatprep.subr.mxu0 0.0
  %1605 = vmatpush1.msra.mxu0 0.0
  %1606 = vmatprep.subr.mxu0 0.0
  %1607 = vmatpush1.msra.mxu0 0.0
  %1608 = vmatprep.subr.mxu0 0.0
  %1609 = vmatpush1.msra.mxu0 0.0
  %1610 = vmatprep.subr.mxu0 0.0
  %1611 = vmatpush1.msra.mxu0 0.0
  %1612 = vmatprep.subr.mxu0 0.0
  %1613 = vmatpush1.msra.mxu0 0.0
  %1614 = vmatprep.subr.mxu0 0.0
  %1615 = vmatpush1.msra.mxu0 0.0
  %1616 = vmatprep.subr.mxu0 0.0
  %1617 = vmatpush1.msra.mxu0 0.0
  %1618 = vmatprep.subr.mxu0 0.0
  %1619 = vmatpush1.msra.mxu0 0.0
  %1620 = vmatprep.subr.mxu0 0.0
  %1621 = vmatpush1.msra.mxu0 0.0
  %1622 = vmatprep.subr.mxu0 0.0
  %1623 = vmatpush1.msra.mxu0 0.0
  %1624 = vmatprep.mubr.f32.mxu0 0.0
  %1625 = vmatmul.mubr.f32.gmra.mrb[0].mxu0 %v1558
  %v1626 = vpop.f32.mrb[0].mxu0
  %v1627 = vadd.f32 0.0, %v1626
  %v1628 = vpop.f32.mrb[0].mxu0
  %1629 = vdwg.mxu0
  %v1630 = vadd.f32 %v1454, %v1627
  %v1631 = vxor.u32 %v1630, 2147483648
  %v1632 = vmul.f32 %v1631, 1.442695
  %v1633 = vpow.pop %v1632
  %v1634 = vadd.f32 %v1633, 1.0
  %v1635 = vrcp.pop %v1634
  %v1636 = vmul.f32 1.0, %v1635
  %v1637 = vtanh.pop %v1630
  %v1638 = vmul.f32 %v1636, %v1548
  %1640 = vrot.lane.b32.xlu0 %v1637, 98
  %v1641 = vpop.permute.xlu0 %1640
  %v1643 = vmul.f32 %v1636, %v1641
  %1645 = vrot.lane.b32.xlu0 %v1643, 10
  %v1646 = vpop.permute.xlu0 %1645
  %v1648 = vadd.f32 %v1638, %v1646
  %v1649 = vtanh.pop %v1648
  %1651 = vrot.lane.b32.xlu0 %v1649, 10
  %v1652 = vpop.permute.xlu0 %1651
  %v1654 = vmul.f32 %v1636, %v1652
  %1657 = vrot.lane.b32.xlu0 %v1654, 108
  %v1658 = vpop.permute.xlu0 %1657
  %v1660 = vsel %vm1345, %v1557, %v1658
  %v1661 = vsel %vm1345, %v1658, %v1557
  %s1662 = scalar_lea.vmem %s4, 48
  %v1663 = vld [vmem:[%s1662] sm:$0xff]
  %v1664 = vld [vmem:[%s1662 + $0x8] sm:$0xff]
  %v1665 = vld [vmem:[%s1662 + $0x10] sm:$0xf]
  %s1666 = scalar_lea.vmem %s5, 32
  %v1667 = vld [vmem:[%s1666] sm:$0xff]
  %v1668 = vld [vmem:[%s1666 + $0x8] sm:$0x3]
  %s1669 = scalar_lea.vmem %s6, 2
  %v1670 = vld [vmem:[%s1669] sm:$0x1]
  %1672 = vrot.lane.b32.xlu0 %v1661, 10
  %v1673 = vpop.permute.xlu0 %1672
  %v1675 = vsel %vm124, %v1660, %v1673
  %1677 = vrot.lane.b32.xlu0 %v1660, 10
  %v1678 = vpop.permute.xlu0 %1677
  %v1680 = vsel %vm124, %v1661, %v1678
  %v1682 = vlaneseq
  %v1683 = vshrl.u32 %v1682, 7
  %v1684 = vsub.s32 0, %v1683
  %v1685 = vrot.slane %v1670, %v1684
  %v1688 = vsel %vm1057, %v1675, 0
  %v1691 = vsel %vm1057, %v1680, 0
  %v1694 = vsel %vm1063, %v1665, 0
  %1696 = vmatprep.subr.mxu0 0.0
  %1697 = vmatpush1.msra.mxu0 %v1663
  %1698 = vmatprep.subr.mxu0 0.0
  %1699 = vmatpush1.msra.mxu0 %v1664
  %1700 = vmatprep.subr.mxu0 0.0
  %1701 = vmatpush1.msra.mxu0 %v1694
  %1702 = vmatprep.subr.mxu0 0.0
  %1703 = vmatpush1.msra.mxu0 0.0
  %1704 = vmatprep.subr.mxu0 0.0
  %1705 = vmatpush1.msra.mxu0 0.0
  %1706 = vmatprep.subr.mxu0 0.0
  %1707 = vmatpush1.msra.mxu0 0.0
  %1708 = vmatprep.subr.mxu0 0.0
  %1709 = vmatpush1.msra.mxu0 0.0
  %1710 = vmatprep.subr.mxu0 0.0
  %1711 = vmatpush1.msra.mxu0 0.0
  %1712 = vmatprep.subr.mxu0 0.0
  %1713 = vmatpush1.msra.mxu0 0.0
  %1714 = vmatprep.subr.mxu0 0.0
  %1715 = vmatpush1.msra.mxu0 0.0
  %1716 = vmatprep.subr.mxu0 0.0
  %1717 = vmatpush1.msra.mxu0 0.0
  %1718 = vmatprep.subr.mxu0 0.0
  %1719 = vmatpush1.msra.mxu0 0.0
  %1720 = vmatprep.subr.mxu0 0.0
  %1721 = vmatpush1.msra.mxu0 0.0
  %1722 = vmatprep.subr.mxu0 0.0
  %1723 = vmatpush1.msra.mxu0 0.0
  %1724 = vmatprep.subr.mxu0 0.0
  %1725 = vmatpush1.msra.mxu0 0.0
  %1726 = vmatprep.subr.mxu0 0.0
  %1727 = vmatpush1.msra.mxu0 0.0
  %1728 = vmatprep.subr.mxu0 0.0
  %1729 = vmatpush1.msra.mxu0 0.0
  %1730 = vmatprep.subr.mxu0 0.0
  %1731 = vmatpush1.msra.mxu0 0.0
  %1732 = vmatprep.subr.mxu0 0.0
  %1733 = vmatpush1.msra.mxu0 0.0
  %1734 = vmatprep.subr.mxu0 0.0
  %1735 = vmatpush1.msra.mxu0 0.0
  %1736 = vmatprep.subr.mxu0 0.0
  %1737 = vmatpush1.msra.mxu0 0.0
  %1738 = vmatprep.subr.mxu0 0.0
  %1739 = vmatpush1.msra.mxu0 0.0
  %1740 = vmatprep.subr.mxu0 0.0
  %1741 = vmatpush1.msra.mxu0 0.0
  %1742 = vmatprep.subr.mxu0 0.0
  %1743 = vmatpush1.msra.mxu0 0.0
  %1744 = vmatprep.subr.mxu0 0.0
  %1745 = vmatpush1.msra.mxu0 0.0
  %1746 = vmatprep.subr.mxu0 0.0
  %1747 = vmatpush1.msra.mxu0 0.0
  %1748 = vmatprep.subr.mxu0 0.0
  %1749 = vmatpush1.msra.mxu0 0.0
  %1750 = vmatprep.subr.mxu0 0.0
  %1751 = vmatpush1.msra.mxu0 0.0
  %1752 = vmatprep.subr.mxu0 0.0
  %1753 = vmatpush1.msra.mxu0 0.0
  %1754 = vmatprep.subr.mxu0 0.0
  %1755 = vmatpush1.msra.mxu0 0.0
  %1756 = vmatprep.subr.mxu0 0.0
  %1757 = vmatpush1.msra.mxu0 0.0
  %1758 = vmatprep.subr.mxu0 0.0
  %1759 = vmatpush1.msra.mxu0 0.0
  %1760 = vmatprep.mubr.f32.mxu0 0.0
  %1761 = vmatmul.mubr.f32.gmra.mrb[0].mxu0 %v1688
  %v1762 = vpop.f32.mrb[0].mxu0
  %v1763 = vadd.f32 %v1685, %v1762
  %v1764 = vpop.f32.mrb[0].mxu0
  %1765 = vmatprep.mubr.f32.mxu0 0.0
  %1766 = vmatmul.mubr.f32.gmra.mrb[0].mxu0 %v1691
  %v1767 = vpop.f32.mrb[0].mxu0
  %v1768 = vadd.f32 %v1685, %v1767
  %v1769 = vpop.f32.mrb[0].mxu0
  %1770 = vdwg.mxu0
  %v1772 = vsel %vm128, %v1668, 0
  %1774 = vmatprep.subr.mxu0 0.0
  %1775 = vmatpush1.msra.mxu0 %v1667
  %1776 = vmatprep.subr.mxu0 0.0
  %1777 = vmatpush1.msra.mxu0 %v1772
  %1778 = vmatprep.subr.mxu0 0.0
  %1779 = vmatpush1.msra.mxu0 0.0
  %1780 = vmatprep.subr.mxu0 0.0
  %1781 = vmatpush1.msra.mxu0 0.0
  %1782 = vmatprep.subr.mxu0 0.0
  %1783 = vmatpush1.msra.mxu0 0.0
  %1784 = vmatprep.subr.mxu0 0.0
  %1785 = vmatpush1.msra.mxu0 0.0
  %1786 = vmatprep.subr.mxu0 0.0
  %1787 = vmatpush1.msra.mxu0 0.0
  %1788 = vmatprep.subr.mxu0 0.0
  %1789 = vmatpush1.msra.mxu0 0.0
  %1790 = vmatprep.subr.mxu0 0.0
  %1791 = vmatpush1.msra.mxu0 0.0
  %1792 = vmatprep.subr.mxu0 0.0
  %1793 = vmatpush1.msra.mxu0 0.0
  %1794 = vmatprep.subr.mxu0 0.0
  %1795 = vmatpush1.msra.mxu0 0.0
  %1796 = vmatprep.subr.mxu0 0.0
  %1797 = vmatpush1.msra.mxu0 0.0
  %1798 = vmatprep.subr.mxu0 0.0
  %1799 = vmatpush1.msra.mxu0 0.0
  %1800 = vmatprep.subr.mxu0 0.0
  %1801 = vmatpush1.msra.mxu0 0.0
  %1802 = vmatprep.subr.mxu0 0.0
  %1803 = vmatpush1.msra.mxu0 0.0
  %1804 = vmatprep.subr.mxu0 0.0
  %1805 = vmatpush1.msra.mxu0 0.0
  %1806 = vmatprep.subr.mxu0 0.0
  %1807 = vmatpush1.msra.mxu0 0.0
  %1808 = vmatprep.subr.mxu0 0.0
  %1809 = vmatpush1.msra.mxu0 0.0
  %1810 = vmatprep.subr.mxu0 0.0
  %1811 = vmatpush1.msra.mxu0 0.0
  %1812 = vmatprep.subr.mxu0 0.0
  %1813 = vmatpush1.msra.mxu0 0.0
  %1814 = vmatprep.subr.mxu0 0.0
  %1815 = vmatpush1.msra.mxu0 0.0
  %1816 = vmatprep.subr.mxu0 0.0
  %1817 = vmatpush1.msra.mxu0 0.0
  %1818 = vmatprep.subr.mxu0 0.0
  %1819 = vmatpush1.msra.mxu0 0.0
  %1820 = vmatprep.subr.mxu0 0.0
  %1821 = vmatpush1.msra.mxu0 0.0
  %1822 = vmatprep.subr.mxu0 0.0
  %1823 = vmatpush1.msra.mxu0 0.0
  %1824 = vmatprep.subr.mxu0 0.0
  %1825 = vmatpush1.msra.mxu0 0.0
  %1826 = vmatprep.subr.mxu0 0.0
  %1827 = vmatpush1.msra.mxu0 0.0
  %1828 = vmatprep.subr.mxu0 0.0
  %1829 = vmatpush1.msra.mxu0 0.0
  %1830 = vmatprep.subr.mxu0 0.0
  %1831 = vmatpush1.msra.mxu0 0.0
  %1832 = vmatprep.subr.mxu0 0.0
  %1833 = vmatpush1.msra.mxu0 0.0
  %1834 = vmatprep.subr.mxu0 0.0
  %1835 = vmatpush1.msra.mxu0 0.0
  %1836 = vmatprep.subr.mxu0 0.0
  %1837 = vmatpush1.msra.mxu0 0.0
  %1838 = vmatprep.mubr.f32.mxu0 0.0
  %1839 = vmatmul.mubr.f32.gmra.mrb[0].mxu0 %v126
  %v1840 = vpop.f32.mrb[0].mxu0
  %v1841 = vadd.f32 0.0, %v1840
  %v1842 = vpop.f32.mrb[0].mxu0
  %1843 = vdwg.mxu0
  %v1844 = vadd.f32 %v1763, %v1841
  %v1845 = vxor.u32 %v1844, 2147483648
  %v1846 = vmul.f32 %v1845, 1.442695
  %v1847 = vpow.pop %v1846
  %v1848 = vadd.f32 %v1847, 1.0
  %v1849 = vrcp.pop %v1848
  %v1850 = vmul.f32 1.0, %v1849
  %v1851 = vtanh.pop %v1844
  %v1852 = vmul.f32 %v1850, 0.0
  %1854 = vrot.lane.b32.xlu0 %v1851, 98
  %v1855 = vpop.permute.xlu0 %1854
  %v1857 = vmul.f32 %v1850, %v1855
  %1859 = vrot.lane.b32.xlu0 %v1857, 10
  %v1860 = vpop.permute.xlu0 %1859
  %v1862 = vadd.f32 %v1852, %v1860
  %v1863 = vtanh.pop %v1862
  %1865 = vrot.lane.b32.xlu0 %v1863, 10
  %v1866 = vpop.permute.xlu0 %1865
  %v1868 = vmul.f32 %v1850, %v1866
  %1870 = vrot.lane.b32.xlu0 %v1868, 108
  %v1871 = vpop.permute.xlu0 %1870
  %v1872 = vsel %vm124, %v1871, 0
  %1874 = vmatprep.subr.mxu0 0.0
  %1875 = vmatpush1.msra.mxu0 %v1667
  %1876 = vmatprep.subr.mxu0 0.0
  %1877 = vmatpush1.msra.mxu0 %v1772
  %1878 = vmatprep.subr.mxu0 0.0
  %1879 = vmatpush1.msra.mxu0 0.0
  %1880 = vmatprep.subr.mxu0 0.0
  %1881 = vmatpush1.msra.mxu0 0.0
  %1882 = vmatprep.subr.mxu0 0.0
  %1883 = vmatpush1.msra.mxu0 0.0
  %1884 = vmatprep.subr.mxu0 0.0
  %1885 = vmatpush1.msra.mxu0 0.0
  %1886 = vmatprep.subr.mxu0 0.0
  %1887 = vmatpush1.msra.mxu0 0.0
  %1888 = vmatprep.subr.mxu0 0.0
  %1889 = vmatpush1.msra.mxu0 0.0
  %1890 = vmatprep.subr.mxu0 0.0
  %1891 = vmatpush1.msra.mxu0 0.0
  %1892 = vmatprep.subr.mxu0 0.0
  %1893 = vmatpush1.msra.mxu0 0.0
  %1894 = vmatprep.subr.mxu0 0.0
  %1895 = vmatpush1.msra.mxu0 0.0
  %1896 = vmatprep.subr.mxu0 0.0
  %1897 = vmatpush1.msra.mxu0 0.0
  %1898 = vmatprep.subr.mxu0 0.0
  %1899 = vmatpush1.msra.mxu0 0.0
  %1900 = vmatprep.subr.mxu0 0.0
  %1901 = vmatpush1.msra.mxu0 0.0
  %1902 = vmatprep.subr.mxu0 0.0
  %1903 = vmatpush1.msra.mxu0 0.0
  %1904 = vmatprep.subr.mxu0 0.0
  %1905 = vmatpush1.msra.mxu0 0.0
  %1906 = vmatprep.subr.mxu0 0.0
  %1907 = vmatpush1.msra.mxu0 0.0
  %1908 = vmatprep.subr.mxu0 0.0
  %1909 = vmatpush1.msra.mxu0 0.0
  %1910 = vmatprep.subr.mxu0 0.0
  %1911 = vmatpush1.msra.mxu0 0.0
  %1912 = vmatprep.subr.mxu0 0.0
  %1913 = vmatpush1.msra.mxu0 0.0
  %1914 = vmatprep.subr.mxu0 0.0
  %1915 = vmatpush1.msra.mxu0 0.0
  %1916 = vmatprep.subr.mxu0 0.0
  %1917 = vmatpush1.msra.mxu0 0.0
  %1918 = vmatprep.subr.mxu0 0.0
  %1919 = vmatpush1.msra.mxu0 0.0
  %1920 = vmatprep.subr.mxu0 0.0
  %1921 = vmatpush1.msra.mxu0 0.0
  %1922 = vmatprep.subr.mxu0 0.0
  %1923 = vmatpush1.msra.mxu0 0.0
  %1924 = vmatprep.subr.mxu0 0.0
  %1925 = vmatpush1.msra.mxu0 0.0
  %1926 = vmatprep.subr.mxu0 0.0
  %1927 = vmatpush1.msra.mxu0 0.0
  %1928 = vmatprep.subr.mxu0 0.0
  %1929 = vmatpush1.msra.mxu0 0.0
  %1930 = vmatprep.subr.mxu0 0.0
  %1931 = vmatpush1.msra.mxu0 0.0
  %1932 = vmatprep.subr.mxu0 0.0
  %1933 = vmatpush1.msra.mxu0 0.0
  %1934 = vmatprep.subr.mxu0 0.0
  %1935 = vmatpush1.msra.mxu0 0.0
  %1936 = vmatprep.subr.mxu0 0.0
  %1937 = vmatpush1.msra.mxu0 0.0
  %1938 = vmatprep.mubr.f32.mxu0 0.0
  %1939 = vmatmul.mubr.f32.gmra.mrb[0].mxu0 %v1872
  %v1940 = vpop.f32.mrb[0].mxu0
  %v1941 = vadd.f32 0.0, %v1940
  %v1942 = vpop.f32.mrb[0].mxu0
  %1943 = vdwg.mxu0
  %v1944 = vadd.f32 %v1768, %v1941
  %v1945 = vxor.u32 %v1944, 2147483648
  %v1946 = vmul.f32 %v1945, 1.442695
  %v1947 = vpow.pop %v1946
  %v1948 = vadd.f32 %v1947, 1.0
  %v1949 = vrcp.pop %v1948
  %v1950 = vmul.f32 1.0, %v1949
  %v1951 = vtanh.pop %v1944
  %v1952 = vmul.f32 %v1950, %v1862
  %1954 = vrot.lane.b32.xlu0 %v1951, 98
  %v1955 = vpop.permute.xlu0 %1954
  %v1957 = vmul.f32 %v1950, %v1955
  %1959 = vrot.lane.b32.xlu0 %v1957, 10
  %v1960 = vpop.permute.xlu0 %1959
  %v1962 = vadd.f32 %v1952, %v1960
  %v1963 = vtanh.pop %v1962
  %1965 = vrot.lane.b32.xlu0 %v1963, 10
  %v1966 = vpop.permute.xlu0 %1965
  %v1968 = vmul.f32 %v1950, %v1966
  %1971 = vrot.lane.b32.xlu0 %v1968, 108
  %v1972 = vpop.permute.xlu0 %1971
  %v1974 = vsel %vm1345, %v1871, %v1972
  %v1975 = vsel %vm1345, %v1972, %v1871
  %s1976 = scalar_lea.vmem %s4, 72
  %v1977 = vld [vmem:[%s1976] sm:$0xff]
  %v1978 = vld [vmem:[%s1976 + $0x8] sm:$0xff]
  %v1979 = vld [vmem:[%s1976 + $0x10] sm:$0xf]
  %s1980 = scalar_lea.vmem %s5, 48
  %v1981 = vld [vmem:[%s1980] sm:$0xff]
  %v1982 = vld [vmem:[%s1980 + $0x8] sm:$0x3]
  %s1983 = scalar_lea.vmem %s6, 3
  %v1984 = vld [vmem:[%s1983] sm:$0x1]
  %1986 = vrot.lane.b32.xlu0 %v1975, 10
  %v1987 = vpop.permute.xlu0 %1986
  %v1989 = vsel %vm124, %v1974, %v1987
  %1991 = vrot.lane.b32.xlu0 %v1974, 10
  %v1992 = vpop.permute.xlu0 %1991
  %v1994 = vsel %vm124, %v1975, %v1992
  %v1996 = vlaneseq
  %v1997 = vshrl.u32 %v1996, 7
  %v1998 = vsub.s32 0, %v1997
  %v1999 = vrot.slane %v1984, %v1998
  %v2002 = vsel %vm1057, %v1989, 0
  %v2005 = vsel %vm1057, %v1994, 0
  %v2008 = vsel %vm1063, %v1979, 0
  %2010 = vmatprep.subr.mxu0 0.0
  %2011 = vmatpush1.msra.mxu0 %v1977
  %2012 = vmatprep.subr.mxu0 0.0
  %2013 = vmatpush1.msra.mxu0 %v1978
  %2014 = vmatprep.subr.mxu0 0.0
  %2015 = vmatpush1.msra.mxu0 %v2008
  %2016 = vmatprep.subr.mxu0 0.0
  %2017 = vmatpush1.msra.mxu0 0.0
  %2018 = vmatprep.subr.mxu0 0.0
  %2019 = vmatpush1.msra.mxu0 0.0
  %2020 = vmatprep.subr.mxu0 0.0
  %2021 = vmatpush1.msra.mxu0 0.0
  %2022 = vmatprep.subr.mxu0 0.0
  %2023 = vmatpush1.msra.mxu0 0.0
  %2024 = vmatprep.subr.mxu0 0.0
  %2025 = vmatpush1.msra.mxu0 0.0
  %2026 = vmatprep.subr.mxu0 0.0
  %2027 = vmatpush1.msra.mxu0 0.0
  %2028 = vmatprep.subr.mxu0 0.0
  %2029 = vmatpush1.msra.mxu0 0.0
  %2030 = vmatprep.subr.mxu0 0.0
  %2031 = vmatpush1.msra.mxu0 0.0
  %2032 = vmatprep.subr.mxu0 0.0
  %2033 = vmatpush1.msra.mxu0 0.0
  %2034 = vmatprep.subr.mxu0 0.0
  %2035 = vmatpush1.msra.mxu0 0.0
  %2036 = vmatprep.subr.mxu0 0.0
  %2037 = vmatpush1.msra.mxu0 0.0
  %2038 = vmatprep.subr.mxu0 0.0
  %2039 = vmatpush1.msra.mxu0 0.0
  %2040 = vmatprep.subr.mxu0 0.0
  %2041 = vmatpush1.msra.mxu0 0.0
  %2042 = vmatprep.subr.mxu0 0.0
  %2043 = vmatpush1.msra.mxu0 0.0
  %2044 = vmatprep.subr.mxu0 0.0
  %2045 = vmatpush1.msra.mxu0 0.0
  %2046 = vmatprep.subr.mxu0 0.0
  %2047 = vmatpush1.msra.mxu0 0.0
  %2048 = vmatprep.subr.mxu0 0.0
  %2049 = vmatpush1.msra.mxu0 0.0
  %2050 = vmatprep.subr.mxu0 0.0
  %2051 = vmatpush1.msra.mxu0 0.0
  %2052 = vmatprep.subr.mxu0 0.0
  %2053 = vmatpush1.msra.mxu0 0.0
  %2054 = vmatprep.subr.mxu0 0.0
  %2055 = vmatpush1.msra.mxu0 0.0
  %2056 = vmatprep.subr.mxu0 0.0
  %2057 = vmatpush1.msra.mxu0 0.0
  %2058 = vmatprep.subr.mxu0 0.0
  %2059 = vmatpush1.msra.mxu0 0.0
  %2060 = vmatprep.subr.mxu0 0.0
  %2061 = vmatpush1.msra.mxu0 0.0
  %2062 = vmatprep.subr.mxu0 0.0
  %2063 = vmatpush1.msra.mxu0 0.0
  %2064 = vmatprep.subr.mxu0 0.0
  %2065 = vmatpush1.msra.mxu0 0.0
  %2066 = vmatprep.subr.mxu0 0.0
  %2067 = vmatpush1.msra.mxu0 0.0
  %2068 = vmatprep.subr.mxu0 0.0
  %2069 = vmatpush1.msra.mxu0 0.0
  %2070 = vmatprep.subr.mxu0 0.0
  %2071 = vmatpush1.msra.mxu0 0.0
  %2072 = vmatprep.subr.mxu0 0.0
  %2073 = vmatpush1.msra.mxu0 0.0
  %2074 = vmatprep.mubr.f32.mxu0 0.0
  %2075 = vmatmul.mubr.f32.gmra.mrb[0].mxu0 %v2002
  %v2076 = vpop.f32.mrb[0].mxu0
  %v2077 = vadd.f32 %v1999, %v2076
  %v2078 = vpop.f32.mrb[0].mxu0
  %2079 = vmatprep.mubr.f32.mxu0 0.0
  %2080 = vmatmul.mubr.f32.gmra.mrb[0].mxu0 %v2005
  %v2081 = vpop.f32.mrb[0].mxu0
  %v2082 = vadd.f32 %v1999, %v2081
  %v2083 = vpop.f32.mrb[0].mxu0
  %2084 = vdwg.mxu0
  %v2086 = vsel %vm128, %v1982, 0
  %2088 = vmatprep.subr.mxu0 0.0
  %2089 = vmatpush1.msra.mxu0 %v1981
  %2090 = vmatprep.subr.mxu0 0.0
  %2091 = vmatpush1.msra.mxu0 %v2086
  %2092 = vmatprep.subr.mxu0 0.0
  %2093 = vmatpush1.msra.mxu0 0.0
  %2094 = vmatprep.subr.mxu0 0.0
  %2095 = vmatpush1.msra.mxu0 0.0
  %2096 = vmatprep.subr.mxu0 0.0
  %2097 = vmatpush1.msra.mxu0 0.0
  %2098 = vmatprep.subr.mxu0 0.0
  %2099 = vmatpush1.msra.mxu0 0.0
  %2100 = vmatprep.subr.mxu0 0.0
  %2101 = vmatpush1.msra.mxu0 0.0
  %2102 = vmatprep.subr.mxu0 0.0
  %2103 = vmatpush1.msra.mxu0 0.0
  %2104 = vmatprep.subr.mxu0 0.0
  %2105 = vmatpush1.msra.mxu0 0.0
  %2106 = vmatprep.subr.mxu0 0.0
  %2107 = vmatpush1.msra.mxu0 0.0
  %2108 = vmatprep.subr.mxu0 0.0
  %2109 = vmatpush1.msra.mxu0 0.0
  %2110 = vmatprep.subr.mxu0 0.0
  %2111 = vmatpush1.msra.mxu0 0.0
  %2112 = vmatprep.subr.mxu0 0.0
  %2113 = vmatpush1.msra.mxu0 0.0
  %2114 = vmatprep.subr.mxu0 0.0
  %2115 = vmatpush1.msra.mxu0 0.0
  %2116 = vmatprep.subr.mxu0 0.0
  %2117 = vmatpush1.msra.mxu0 0.0
  %2118 = vmatprep.subr.mxu0 0.0
  %2119 = vmatpush1.msra.mxu0 0.0
  %2120 = vmatprep.subr.mxu0 0.0
  %2121 = vmatpush1.msra.mxu0 0.0
  %2122 = vmatprep.subr.mxu0 0.0
  %2123 = vmatpush1.msra.mxu0 0.0
  %2124 = vmatprep.subr.mxu0 0.0
  %2125 = vmatpush1.msra.mxu0 0.0
  %2126 = vmatprep.subr.mxu0 0.0
  %2127 = vmatpush1.msra.mxu0 0.0
  %2128 = vmatprep.subr.mxu0 0.0
  %2129 = vmatpush1.msra.mxu0 0.0
  %2130 = vmatprep.subr.mxu0 0.0
  %2131 = vmatpush1.msra.mxu0 0.0
  %2132 = vmatprep.subr.mxu0 0.0
  %2133 = vmatpush1.msra.mxu0 0.0
  %2134 = vmatprep.subr.mxu0 0.0
  %2135 = vmatpush1.msra.mxu0 0.0
  %2136 = vmatprep.subr.mxu0 0.0
  %2137 = vmatpush1.msra.mxu0 0.0
  %2138 = vmatprep.subr.mxu0 0.0
  %2139 = vmatpush1.msra.mxu0 0.0
  %2140 = vmatprep.subr.mxu0 0.0
  %2141 = vmatpush1.msra.mxu0 0.0
  %2142 = vmatprep.subr.mxu0 0.0
  %2143 = vmatpush1.msra.mxu0 0.0
  %2144 = vmatprep.subr.mxu0 0.0
  %2145 = vmatpush1.msra.mxu0 0.0
  %2146 = vmatprep.subr.mxu0 0.0
  %2147 = vmatpush1.msra.mxu0 0.0
  %2148 = vmatprep.subr.mxu0 0.0
  %2149 = vmatpush1.msra.mxu0 0.0
  %2150 = vmatprep.subr.mxu0 0.0
  %2151 = vmatpush1.msra.mxu0 0.0
  %2152 = vmatprep.mubr.f32.mxu0 0.0
  %2153 = vmatmul.mubr.f32.gmra.mrb[0].mxu0 %v126
  %v2154 = vpop.f32.mrb[0].mxu0
  %v2155 = vadd.f32 0.0, %v2154
  %v2156 = vpop.f32.mrb[0].mxu0
  %2157 = vdwg.mxu0
  %v2158 = vadd.f32 %v2077, %v2155
  %v2159 = vxor.u32 %v2158, 2147483648
  %v2160 = vmul.f32 %v2159, 1.442695
  %v2161 = vpow.pop %v2160
  %v2162 = vadd.f32 %v2161, 1.0
  %v2163 = vrcp.pop %v2162
  %v2164 = vmul.f32 1.0, %v2163
  %v2165 = vtanh.pop %v2158
  %v2166 = vmul.f32 %v2164, 0.0
  %2168 = vrot.lane.b32.xlu0 %v2165, 98
  %v2169 = vpop.permute.xlu0 %2168
  %v2171 = vmul.f32 %v2164, %v2169
  %2173 = vrot.lane.b32.xlu0 %v2171, 10
  %v2174 = vpop.permute.xlu0 %2173
  %v2176 = vadd.f32 %v2166, %v2174
  %v2177 = vtanh.pop %v2176
  %2179 = vrot.lane.b32.xlu0 %v2177, 10
  %v2180 = vpop.permute.xlu0 %2179
  %v2182 = vmul.f32 %v2164, %v2180
  %2184 = vrot.lane.b32.xlu0 %v2182, 108
  %v2185 = vpop.permute.xlu0 %2184
  %v2186 = vsel %vm124, %v2185, 0
  %2188 = vmatprep.subr.mxu0 0.0
  %2189 = vmatpush1.msra.mxu0 %v1981
  %2190 = vmatprep.subr.mxu0 0.0
  %2191 = vmatpush1.msra.mxu0 %v2086
  %2192 = vmatprep.subr.mxu0 0.0
  %2193 = vmatpush1.msra.mxu0 0.0
  %2194 = vmatprep.subr.mxu0 0.0
  %2195 = vmatpush1.msra.mxu0 0.0
  %2196 = vmatprep.subr.mxu0 0.0
  %2197 = vmatpush1.msra.mxu0 0.0
  %2198 = vmatprep.subr.mxu0 0.0
  %2199 = vmatpush1.msra.mxu0 0.0
  %2200 = vmatprep.subr.mxu0 0.0
  %2201 = vmatpush1.msra.mxu0 0.0
  %2202 = vmatprep.subr.mxu0 0.0
  %2203 = vmatpush1.msra.mxu0 0.0
  %2204 = vmatprep.subr.mxu0 0.0
  %2205 = vmatpush1.msra.mxu0 0.0
  %2206 = vmatprep.subr.mxu0 0.0
  %2207 = vmatpush1.msra.mxu0 0.0
  %2208 = vmatprep.subr.mxu0 0.0
  %2209 = vmatpush1.msra.mxu0 0.0
  %2210 = vmatprep.subr.mxu0 0.0
  %2211 = vmatpush1.msra.mxu0 0.0
  %2212 = vmatprep.subr.mxu0 0.0
  %2213 = vmatpush1.msra.mxu0 0.0
  %2214 = vmatprep.subr.mxu0 0.0
  %2215 = vmatpush1.msra.mxu0 0.0
  %2216 = vmatprep.subr.mxu0 0.0
  %2217 = vmatpush1.msra.mxu0 0.0
  %2218 = vmatprep.subr.mxu0 0.0
  %2219 = vmatpush1.msra.mxu0 0.0
  %2220 = vmatprep.subr.mxu0 0.0
  %2221 = vmatpush1.msra.mxu0 0.0
  %2222 = vmatprep.subr.mxu0 0.0
  %2223 = vmatpush1.msra.mxu0 0.0
  %2224 = vmatprep.subr.mxu0 0.0
  %2225 = vmatpush1.msra.mxu0 0.0
  %2226 = vmatprep.subr.mxu0 0.0
  %2227 = vmatpush1.msra.mxu0 0.0
  %2228 = vmatprep.subr.mxu0 0.0
  %2229 = vmatpush1.msra.mxu0 0.0
  %2230 = vmatprep.subr.mxu0 0.0
  %2231 = vmatpush1.msra.mxu0 0.0
  %2232 = vmatprep.subr.mxu0 0.0
  %2233 = vmatpush1.msra.mxu0 0.0
  %2234 = vmatprep.subr.mxu0 0.0
  %2235 = vmatpush1.msra.mxu0 0.0
  %2236 = vmatprep.subr.mxu0 0.0
  %2237 = vmatpush1.msra.mxu0 0.0
  %2238 = vmatprep.subr.mxu0 0.0
  %2239 = vmatpush1.msra.mxu0 0.0
  %2240 = vmatprep.subr.mxu0 0.0
  %2241 = vmatpush1.msra.mxu0 0.0
  %2242 = vmatprep.subr.mxu0 0.0
  %2243 = vmatpush1.msra.mxu0 0.0
  %2244 = vmatprep.subr.mxu0 0.0
  %2245 = vmatpush1.msra.mxu0 0.0
  %2246 = vmatprep.subr.mxu0 0.0
  %2247 = vmatpush1.msra.mxu0 0.0
  %2248 = vmatprep.subr.mxu0 0.0
  %2249 = vmatpush1.msra.mxu0 0.0
  %2250 = vmatprep.subr.mxu0 0.0
  %2251 = vmatpush1.msra.mxu0 0.0
  %2252 = vmatprep.mubr.f32.mxu0 0.0
  %2253 = vmatmul.mubr.f32.gmra.mrb[0].mxu0 %v2186
  %v2254 = vpop.f32.mrb[0].mxu0
  %v2255 = vadd.f32 0.0, %v2254
  %v2256 = vpop.f32.mrb[0].mxu0
  %2257 = vdwg.mxu0
  %v2258 = vadd.f32 %v2082, %v2255
  %v2259 = vxor.u32 %v2258, 2147483648
  %v2260 = vmul.f32 %v2259, 1.442695
  %v2261 = vpow.pop %v2260
  %v2262 = vadd.f32 %v2261, 1.0
  %v2263 = vrcp.pop %v2262
  %v2264 = vmul.f32 1.0, %v2263
  %v2265 = vtanh.pop %v2258
  %v2266 = vmul.f32 %v2264, %v2176
  %2268 = vrot.lane.b32.xlu0 %v2265, 98
  %v2269 = vpop.permute.xlu0 %2268
  %v2271 = vmul.f32 %v2264, %v2269
  %2273 = vrot.lane.b32.xlu0 %v2271, 10
  %v2274 = vpop.permute.xlu0 %2273
  %v2276 = vadd.f32 %v2266, %v2274
  %v2277 = vtanh.pop %v2276
  %2279 = vrot.lane.b32.xlu0 %v2277, 10
  %v2280 = vpop.permute.xlu0 %2279
  %v2282 = vmul.f32 %v2264, %v2280
  %2285 = vrot.lane.b32.xlu0 %v2282, 108
  %v2286 = vpop.permute.xlu0 %2285
  %v2288 = vsel %vm1345, %v2185, %v2286
  %v2289 = vsel %vm1345, %v2286, %v2185
  %s2290 = scalar_lea.vmem %s4, 96
  %v2291 = vld [vmem:[%s2290] sm:$0xff]
  %v2292 = vld [vmem:[%s2290 + $0x8] sm:$0xff]
  %v2293 = vld [vmem:[%s2290 + $0x10] sm:$0xf]
  %s2294 = scalar_lea.vmem %s5, 64
  %v2295 = vld [vmem:[%s2294] sm:$0xff]
  %v2296 = vld [vmem:[%s2294 + $0x8] sm:$0x3]
  %s2297 = scalar_lea.vmem %s6, 4
  %v2298 = vld [vmem:[%s2297] sm:$0x1]
  %2300 = vrot.lane.b32.xlu0 %v2289, 10
  %v2301 = vpop.permute.xlu0 %2300
  %v2303 = vsel %vm124, %v2288, %v2301
  %2305 = vrot.lane.b32.xlu0 %v2288, 10
  %v2306 = vpop.permute.xlu0 %2305
  %v2308 = vsel %vm124, %v2289, %v2306
  %v2310 = vlaneseq
  %v2311 = vshrl.u32 %v2310, 7
  %v2312 = vsub.s32 0, %v2311
  %v2313 = vrot.slane %v2298, %v2312
  %v2316 = vsel %vm1057, %v2303, 0
  %v2319 = vsel %vm1057, %v2308, 0
  %v2322 = vsel %vm1063, %v2293, 0
  %2324 = vmatprep.subr.mxu0 0.0
  %2325 = vmatpush1.msra.mxu0 %v2291
  %2326 = vmatprep.subr.mxu0 0.0
  %2327 = vmatpush1.msra.mxu0 %v2292
  %2328 = vmatprep.subr.mxu0 0.0
  %2329 = vmatpush1.msra.mxu0 %v2322
  %2330 = vmatprep.subr.mxu0 0.0
  %2331 = vmatpush1.msra.mxu0 0.0
  %2332 = vmatprep.subr.mxu0 0.0
  %2333 = vmatpush1.msra.mxu0 0.0
  %2334 = vmatprep.subr.mxu0 0.0
  %2335 = vmatpush1.msra.mxu0 0.0
  %2336 = vmatprep.subr.mxu0 0.0
  %2337 = vmatpush1.msra.mxu0 0.0
  %2338 = vmatprep.subr.mxu0 0.0
  %2339 = vmatpush1.msra.mxu0 0.0
  %2340 = vmatprep.subr.mxu0 0.0
  %2341 = vmatpush1.msra.mxu0 0.0
  %2342 = vmatprep.subr.mxu0 0.0
  %2343 = vmatpush1.msra.mxu0 0.0
  %2344 = vmatprep.subr.mxu0 0.0
  %2345 = vmatpush1.msra.mxu0 0.0
  %2346 = vmatprep.subr.mxu0 0.0
  %2347 = vmatpush1.msra.mxu0 0.0
  %2348 = vmatprep.subr.mxu0 0.0
  %2349 = vmatpush1.msra.mxu0 0.0
  %2350 = vmatprep.subr.mxu0 0.0
  %2351 = vmatpush1.msra.mxu0 0.0
  %2352 = vmatprep.subr.mxu0 0.0
  %2353 = vmatpush1.msra.mxu0 0.0
  %2354 = vmatprep.subr.mxu0 0.0
  %2355 = vmatpush1.msra.mxu0 0.0
  %2356 = vmatprep.subr.mxu0 0.0
  %2357 = vmatpush1.msra.mxu0 0.0
  %2358 = vmatprep.subr.mxu0 0.0
  %2359 = vmatpush1.msra.mxu0 0.0
  %2360 = vmatprep.subr.mxu0 0.0
  %2361 = vmatpush1.msra.mxu0 0.0
  %2362 = vmatprep.subr.mxu0 0.0
  %2363 = vmatpush1.msra.mxu0 0.0
  %2364 = vmatprep.subr.mxu0 0.0
  %2365 = vmatpush1.msra.mxu0 0.0
  %2366 = vmatprep.subr.mxu0 0.0
  %2367 = vmatpush1.msra.mxu0 0.0
  %2368 = vmatprep.subr.mxu0 0.0
  %2369 = vmatpush1.msra.mxu0 0.0
  %2370 = vmatprep.subr.mxu0 0.0
  %2371 = vmatpush1.msra.mxu0 0.0
  %2372 = vmatprep.subr.mxu0 0.0
  %2373 = vmatpush1.msra.mxu0 0.0
  %2374 = vmatprep.subr.mxu0 0.0
  %2375 = vmatpush1.msra.mxu0 0.0
  %2376 = vmatprep.subr.mxu0 0.0
  %2377 = vmatpush1.msra.mxu0 0.0
  %2378 = vmatprep.subr.mxu0 0.0
  %2379 = vmatpush1.msra.mxu0 0.0
  %2380 = vmatprep.subr.mxu0 0.0
  %2381 = vmatpush1.msra.mxu0 0.0
  %2382 = vmatprep.subr.mxu0 0.0
  %2383 = vmatpush1.msra.mxu0 0.0
  %2384 = vmatprep.subr.mxu0 0.0
  %2385 = vmatpush1.msra.mxu0 0.0
  %2386 = vmatprep.subr.mxu0 0.0
  %2387 = vmatpush1.msra.mxu0 0.0
  %2388 = vmatprep.mubr.f32.mxu0 0.0
  %2389 = vmatmul.mubr.f32.gmra.mrb[0].mxu0 %v2316
  %v2390 = vpop.f32.mrb[0].mxu0
  %v2391 = vadd.f32 %v2313, %v2390
  %v2392 = vpop.f32.mrb[0].mxu0
  %2393 = vmatprep.mubr.f32.mxu0 0.0
  %2394 = vmatmul.mubr.f32.gmra.mrb[0].mxu0 %v2319
  %v2395 = vpop.f32.mrb[0].mxu0
  %v2396 = vadd.f32 %v2313, %v2395
  %v2397 = vpop.f32.mrb[0].mxu0
  %2398 = vdwg.mxu0
  %v2400 = vsel %vm128, %v2296, 0
  %2402 = vmatprep.subr.mxu0 0.0
  %2403 = vmatpush1.msra.mxu0 %v2295
  %2404 = vmatprep.subr.mxu0 0.0
  %2405 = vmatpush1.msra.mxu0 %v2400
  %2406 = vmatprep.subr.mxu0 0.0
  %2407 = vmatpush1.msra.mxu0 0.0
  %2408 = vmatprep.subr.mxu0 0.0
  %2409 = vmatpush1.msra.mxu0 0.0
  %2410 = vmatprep.subr.mxu0 0.0
  %2411 = vmatpush1.msra.mxu0 0.0
  %2412 = vmatprep.subr.mxu0 0.0
  %2413 = vmatpush1.msra.mxu0 0.0
  %2414 = vmatprep.subr.mxu0 0.0
  %2415 = vmatpush1.msra.mxu0 0.0
  %2416 = vmatprep.subr.mxu0 0.0
  %2417 = vmatpush1.msra.mxu0 0.0
  %2418 = vmatprep.subr.mxu0 0.0
  %2419 = vmatpush1.msra.mxu0 0.0
  %2420 = vmatprep.subr.mxu0 0.0
  %2421 = vmatpush1.msra.mxu0 0.0
  %2422 = vmatprep.subr.mxu0 0.0
  %2423 = vmatpush1.msra.mxu0 0.0
  %2424 = vmatprep.subr.mxu0 0.0
  %2425 = vmatpush1.msra.mxu0 0.0
  %2426 = vmatprep.subr.mxu0 0.0
  %2427 = vmatpush1.msra.mxu0 0.0
  %2428 = vmatprep.subr.mxu0 0.0
  %2429 = vmatpush1.msra.mxu0 0.0
  %2430 = vmatprep.subr.mxu0 0.0
  %2431 = vmatpush1.msra.mxu0 0.0
  %2432 = vmatprep.subr.mxu0 0.0
  %2433 = vmatpush1.msra.mxu0 0.0
  %2434 = vmatprep.subr.mxu0 0.0
  %2435 = vmatpush1.msra.mxu0 0.0
  %2436 = vmatprep.subr.mxu0 0.0
  %2437 = vmatpush1.msra.mxu0 0.0
  %2438 = vmatprep.subr.mxu0 0.0
  %2439 = vmatpush1.msra.mxu0 0.0
  %2440 = vmatprep.subr.mxu0 0.0
  %2441 = vmatpush1.msra.mxu0 0.0
  %2442 = vmatprep.subr.mxu0 0.0
  %2443 = vmatpush1.msra.mxu0 0.0
  %2444 = vmatprep.subr.mxu0 0.0
  %2445 = vmatpush1.msra.mxu0 0.0
  %2446 = vmatprep.subr.mxu0 0.0
  %2447 = vmatpush1.msra.mxu0 0.0
  %2448 = vmatprep.subr.mxu0 0.0
  %2449 = vmatpush1.msra.mxu0 0.0
  %2450 = vmatprep.subr.mxu0 0.0
  %2451 = vmatpush1.msra.mxu0 0.0
  %2452 = vmatprep.subr.mxu0 0.0
  %2453 = vmatpush1.msra.mxu0 0.0
  %2454 = vmatprep.subr.mxu0 0.0
  %2455 = vmatpush1.msra.mxu0 0.0
  %2456 = vmatprep.subr.mxu0 0.0
  %2457 = vmatpush1.msra.mxu0 0.0
  %2458 = vmatprep.subr.mxu0 0.0
  %2459 = vmatpush1.msra.mxu0 0.0
  %2460 = vmatprep.subr.mxu0 0.0
  %2461 = vmatpush1.msra.mxu0 0.0
  %2462 = vmatprep.subr.mxu0 0.0
  %2463 = vmatpush1.msra.mxu0 0.0
  %2464 = vmatprep.subr.mxu0 0.0
  %2465 = vmatpush1.msra.mxu0 0.0
  %2466 = vmatprep.mubr.f32.mxu0 0.0
  %2467 = vmatmul.mubr.f32.gmra.mrb[0].mxu0 %v126
  %v2468 = vpop.f32.mrb[0].mxu0
  %v2469 = vadd.f32 0.0, %v2468
  %v2470 = vpop.f32.mrb[0].mxu0
  %2471 = vdwg.mxu0
  %v2472 = vadd.f32 %v2391, %v2469
  %v2473 = vxor.u32 %v2472, 2147483648
  %v2474 = vmul.f32 %v2473, 1.442695
  %v2475 = vpow.pop %v2474
  %v2476 = vadd.f32 %v2475, 1.0
  %v2477 = vrcp.pop %v2476
  %v2478 = vmul.f32 1.0, %v2477
  %v2479 = vtanh.pop %v2472
  %v2480 = vmul.f32 %v2478, 0.0
  %2482 = vrot.lane.b32.xlu0 %v2479, 98
  %v2483 = vpop.permute.xlu0 %2482
  %v2485 = vmul.f32 %v2478, %v2483
  %2487 = vrot.lane.b32.xlu0 %v2485, 10
  %v2488 = vpop.permute.xlu0 %2487
  %v2490 = vadd.f32 %v2480, %v2488
  %v2491 = vtanh.pop %v2490
  %2493 = vrot.lane.b32.xlu0 %v2491, 10
  %v2494 = vpop.permute.xlu0 %2493
  %v2496 = vmul.f32 %v2478, %v2494
  %2498 = vrot.lane.b32.xlu0 %v2496, 108
  %v2499 = vpop.permute.xlu0 %2498
  %v2500 = vsel %vm124, %v2499, 0
  %2502 = vmatprep.subr.mxu0 0.0
  %2503 = vmatpush1.msra.mxu0 %v2295
  %2504 = vmatprep.subr.mxu0 0.0
  %2505 = vmatpush1.msra.mxu0 %v2400
  %2506 = vmatprep.subr.mxu0 0.0
  %2507 = vmatpush1.msra.mxu0 0.0
  %2508 = vmatprep.subr.mxu0 0.0
  %2509 = vmatpush1.msra.mxu0 0.0
  %2510 = vmatprep.subr.mxu0 0.0
  %2511 = vmatpush1.msra.mxu0 0.0
  %2512 = vmatprep.subr.mxu0 0.0
  %2513 = vmatpush1.msra.mxu0 0.0
  %2514 = vmatprep.subr.mxu0 0.0
  %2515 = vmatpush1.msra.mxu0 0.0
  %2516 = vmatprep.subr.mxu0 0.0
  %2517 = vmatpush1.msra.mxu0 0.0
  %2518 = vmatprep.subr.mxu0 0.0
  %2519 = vmatpush1.msra.mxu0 0.0
  %2520 = vmatprep.subr.mxu0 0.0
  %2521 = vmatpush1.msra.mxu0 0.0
  %2522 = vmatprep.subr.mxu0 0.0
  %2523 = vmatpush1.msra.mxu0 0.0
  %2524 = vmatprep.subr.mxu0 0.0
  %2525 = vmatpush1.msra.mxu0 0.0
  %2526 = vmatprep.subr.mxu0 0.0
  %2527 = vmatpush1.msra.mxu0 0.0
  %2528 = vmatprep.subr.mxu0 0.0
  %2529 = vmatpush1.msra.mxu0 0.0
  %2530 = vmatprep.subr.mxu0 0.0
  %2531 = vmatpush1.msra.mxu0 0.0
  %2532 = vmatprep.subr.mxu0 0.0
  %2533 = vmatpush1.msra.mxu0 0.0
  %2534 = vmatprep.subr.mxu0 0.0
  %2535 = vmatpush1.msra.mxu0 0.0
  %2536 = vmatprep.subr.mxu0 0.0
  %2537 = vmatpush1.msra.mxu0 0.0
  %2538 = vmatprep.subr.mxu0 0.0
  %2539 = vmatpush1.msra.mxu0 0.0
  %2540 = vmatprep.subr.mxu0 0.0
  %2541 = vmatpush1.msra.mxu0 0.0
  %2542 = vmatprep.subr.mxu0 0.0
  %2543 = vmatpush1.msra.mxu0 0.0
  %2544 = vmatprep.subr.mxu0 0.0
  %2545 = vmatpush1.msra.mxu0 0.0
  %2546 = vmatprep.subr.mxu0 0.0
  %2547 = vmatpush1.msra.mxu0 0.0
  %2548 = vmatprep.subr.mxu0 0.0
  %2549 = vmatpush1.msra.mxu0 0.0
  %2550 = vmatprep.subr.mxu0 0.0
  %2551 = vmatpush1.msra.mxu0 0.0
  %2552 = vmatprep.subr.mxu0 0.0
  %2553 = vmatpush1.msra.mxu0 0.0
  %2554 = vmatprep.subr.mxu0 0.0
  %2555 = vmatpush1.msra.mxu0 0.0
  %2556 = vmatprep.subr.mxu0 0.0
  %2557 = vmatpush1.msra.mxu0 0.0
  %2558 = vmatprep.subr.mxu0 0.0
  %2559 = vmatpush1.msra.mxu0 0.0
  %2560 = vmatprep.subr.mxu0 0.0
  %2561 = vmatpush1.msra.mxu0 0.0
  %2562 = vmatprep.subr.mxu0 0.0
  %2563 = vmatpush1.msra.mxu0 0.0
  %2564 = vmatprep.subr.mxu0 0.0
  %2565 = vmatpush1.msra.mxu0 0.0
  %2566 = vmatprep.mubr.f32.mxu0 0.0
  %2567 = vmatmul.mubr.f32.gmra.mrb[0].mxu0 %v2500
  %v2568 = vpop.f32.mrb[0].mxu0
  %v2569 = vadd.f32 0.0, %v2568
  %v2570 = vpop.f32.mrb[0].mxu0
  %2571 = vdwg.mxu0
  %v2572 = vadd.f32 %v2396, %v2569
  %v2573 = vxor.u32 %v2572, 2147483648
  %v2574 = vmul.f32 %v2573, 1.442695
  %v2575 = vpow.pop %v2574
  %v2576 = vadd.f32 %v2575, 1.0
  %v2577 = vrcp.pop %v2576
  %v2578 = vmul.f32 1.0, %v2577
  %v2579 = vtanh.pop %v2572
  %v2580 = vmul.f32 %v2578, %v2490
  %2582 = vrot.lane.b32.xlu0 %v2579, 98
  %v2583 = vpop.permute.xlu0 %2582
  %v2585 = vmul.f32 %v2578, %v2583
  %2587 = vrot.lane.b32.xlu0 %v2585, 10
  %v2588 = vpop.permute.xlu0 %2587
  %v2590 = vadd.f32 %v2580, %v2588
  %v2591 = vtanh.pop %v2590
  %2593 = vrot.lane.b32.xlu0 %v2591, 10
  %v2594 = vpop.permute.xlu0 %2593
  %v2596 = vmul.f32 %v2578, %v2594
  %2599 = vrot.lane.b32.xlu0 %v2596, 108
  %v2600 = vpop.permute.xlu0 %2599
  %v2602 = vsel %vm1345, %v2499, %v2600
  %v2603 = vsel %vm1345, %v2600, %v2499
  %s2604 = scalar_lea.vmem %s4, 120
  %v2605 = vld [vmem:[%s2604] sm:$0xff]
  %v2606 = vld [vmem:[%s2604 + $0x8] sm:$0xff]
  %v2607 = vld [vmem:[%s2604 + $0x10] sm:$0xf]
  %s2608 = scalar_lea.vmem %s5, 80
  %v2609 = vld [vmem:[%s2608] sm:$0xff]
  %v2610 = vld [vmem:[%s2608 + $0x8] sm:$0x3]
  %s2611 = scalar_lea.vmem %s6, 5
  %v2612 = vld [vmem:[%s2611] sm:$0x1]
  %2614 = vrot.lane.b32.xlu0 %v2603, 10
  %v2615 = vpop.permute.xlu0 %2614
  %v2617 = vsel %vm124, %v2602, %v2615
  %2619 = vrot.lane.b32.xlu0 %v2602, 10
  %v2620 = vpop.permute.xlu0 %2619
  %v2622 = vsel %vm124, %v2603, %v2620
  %v2624 = vlaneseq
  %v2625 = vshrl.u32 %v2624, 7
  %v2626 = vsub.s32 0, %v2625
  %v2627 = vrot.slane %v2612, %v2626
  %v2630 = vsel %vm1057, %v2617, 0
  %v2633 = vsel %vm1057, %v2622, 0
  %v2636 = vsel %vm1063, %v2607, 0
  %2638 = vmatprep.subr.mxu0 0.0
  %2639 = vmatpush1.msra.mxu0 %v2605
  %2640 = vmatprep.subr.mxu0 0.0
  %2641 = vmatpush1.msra.mxu0 %v2606
  %2642 = vmatprep.subr.mxu0 0.0
  %2643 = vmatpush1.msra.mxu0 %v2636
  %2644 = vmatprep.subr.mxu0 0.0
  %2645 = vmatpush1.msra.mxu0 0.0
  %2646 = vmatprep.subr.mxu0 0.0
  %2647 = vmatpush1.msra.mxu0 0.0
  %2648 = vmatprep.subr.mxu0 0.0
  %2649 = vmatpush1.msra.mxu0 0.0
  %2650 = vmatprep.subr.mxu0 0.0
  %2651 = vmatpush1.msra.mxu0 0.0
  %2652 = vmatprep.subr.mxu0 0.0
  %2653 = vmatpush1.msra.mxu0 0.0
  %2654 = vmatprep.subr.mxu0 0.0
  %2655 = vmatpush1.msra.mxu0 0.0
  %2656 = vmatprep.subr.mxu0 0.0
  %2657 = vmatpush1.msra.mxu0 0.0
  %2658 = vmatprep.subr.mxu0 0.0
  %2659 = vmatpush1.msra.mxu0 0.0
  %2660 = vmatprep.subr.mxu0 0.0
  %2661 = vmatpush1.msra.mxu0 0.0
  %2662 = vmatprep.subr.mxu0 0.0
  %2663 = vmatpush1.msra.mxu0 0.0
  %2664 = vmatprep.subr.mxu0 0.0
  %2665 = vmatpush1.msra.mxu0 0.0
  %2666 = vmatprep.subr.mxu0 0.0
  %2667 = vmatpush1.msra.mxu0 0.0
  %2668 = vmatprep.subr.mxu0 0.0
  %2669 = vmatpush1.msra.mxu0 0.0
  %2670 = vmatprep.subr.mxu0 0.0
  %2671 = vmatpush1.msra.mxu0 0.0
  %2672 = vmatprep.subr.mxu0 0.0
  %2673 = vmatpush1.msra.mxu0 0.0
  %2674 = vmatprep.subr.mxu0 0.0
  %2675 = vmatpush1.msra.mxu0 0.0
  %2676 = vmatprep.subr.mxu0 0.0
  %2677 = vmatpush1.msra.mxu0 0.0
  %2678 = vmatprep.subr.mxu0 0.0
  %2679 = vmatpush1.msra.mxu0 0.0
  %2680 = vmatprep.subr.mxu0 0.0
  %2681 = vmatpush1.msra.mxu0 0.0
  %2682 = vmatprep.subr.mxu0 0.0
  %2683 = vmatpush1.msra.mxu0 0.0
  %2684 = vmatprep.subr.mxu0 0.0
  %2685 = vmatpush1.msra.mxu0 0.0
  %2686 = vmatprep.subr.mxu0 0.0
  %2687 = vmatpush1.msra.mxu0 0.0
  %2688 = vmatprep.subr.mxu0 0.0
  %2689 = vmatpush1.msra.mxu0 0.0
  %2690 = vmatprep.subr.mxu0 0.0
  %2691 = vmatpush1.msra.mxu0 0.0
  %2692 = vmatprep.subr.mxu0 0.0
  %2693 = vmatpush1.msra.mxu0 0.0
  %2694 = vmatprep.subr.mxu0 0.0
  %2695 = vmatpush1.msra.mxu0 0.0
  %2696 = vmatprep.subr.mxu0 0.0
  %2697 = vmatpush1.msra.mxu0 0.0
  %2698 = vmatprep.subr.mxu0 0.0
  %2699 = vmatpush1.msra.mxu0 0.0
  %2700 = vmatprep.subr.mxu0 0.0
  %2701 = vmatpush1.msra.mxu0 0.0
  %2702 = vmatprep.mubr.f32.mxu0 0.0
  %2703 = vmatmul.mubr.f32.gmra.mrb[0].mxu0 %v2630
  %v2704 = vpop.f32.mrb[0].mxu0
  %v2705 = vadd.f32 %v2627, %v2704
  %v2706 = vpop.f32.mrb[0].mxu0
  %2707 = vmatprep.mubr.f32.mxu0 0.0
  %2708 = vmatmul.mubr.f32.gmra.mrb[0].mxu0 %v2633
  %v2709 = vpop.f32.mrb[0].mxu0
  %v2710 = vadd.f32 %v2627, %v2709
  %v2711 = vpop.f32.mrb[0].mxu0
  %2712 = vdwg.mxu0
  %v2714 = vsel %vm128, %v2610, 0
  %2716 = vmatprep.subr.mxu0 0.0
  %2717 = vmatpush1.msra.mxu0 %v2609
  %2718 = vmatprep.subr.mxu0 0.0
  %2719 = vmatpush1.msra.mxu0 %v2714
  %2720 = vmatprep.subr.mxu0 0.0
  %2721 = vmatpush1.msra.mxu0 0.0
  %2722 = vmatprep.subr.mxu0 0.0
  %2723 = vmatpush1.msra.mxu0 0.0
  %2724 = vmatprep.subr.mxu0 0.0
  %2725 = vmatpush1.msra.mxu0 0.0
  %2726 = vmatprep.subr.mxu0 0.0
  %2727 = vmatpush1.msra.mxu0 0.0
  %2728 = vmatprep.subr.mxu0 0.0
  %2729 = vmatpush1.msra.mxu0 0.0
  %2730 = vmatprep.subr.mxu0 0.0
  %2731 = vmatpush1.msra.mxu0 0.0
  %2732 = vmatprep.subr.mxu0 0.0
  %2733 = vmatpush1.msra.mxu0 0.0
  %2734 = vmatprep.subr.mxu0 0.0
  %2735 = vmatpush1.msra.mxu0 0.0
  %2736 = vmatprep.subr.mxu0 0.0
  %2737 = vmatpush1.msra.mxu0 0.0
  %2738 = vmatprep.subr.mxu0 0.0
  %2739 = vmatpush1.msra.mxu0 0.0
  %2740 = vmatprep.subr.mxu0 0.0
  %2741 = vmatpush1.msra.mxu0 0.0
  %2742 = vmatprep.subr.mxu0 0.0
  %2743 = vmatpush1.msra.mxu0 0.0
  %2744 = vmatprep.subr.mxu0 0.0
  %2745 = vmatpush1.msra.mxu0 0.0
  %2746 = vmatprep.subr.mxu0 0.0
  %2747 = vmatpush1.msra.mxu0 0.0
  %2748 = vmatprep.subr.mxu0 0.0
  %2749 = vmatpush1.msra.mxu0 0.0
  %2750 = vmatprep.subr.mxu0 0.0
  %2751 = vmatpush1.msra.mxu0 0.0
  %2752 = vmatprep.subr.mxu0 0.0
  %2753 = vmatpush1.msra.mxu0 0.0
  %2754 = vmatprep.subr.mxu0 0.0
  %2755 = vmatpush1.msra.mxu0 0.0
  %2756 = vmatprep.subr.mxu0 0.0
  %2757 = vmatpush1.msra.mxu0 0.0
  %2758 = vmatprep.subr.mxu0 0.0
  %2759 = vmatpush1.msra.mxu0 0.0
  %2760 = vmatprep.subr.mxu0 0.0
  %2761 = vmatpush1.msra.mxu0 0.0
  %2762 = vmatprep.subr.mxu0 0.0
  %2763 = vmatpush1.msra.mxu0 0.0
  %2764 = vmatprep.subr.mxu0 0.0
  %2765 = vmatpush1.msra.mxu0 0.0
  %2766 = vmatprep.subr.mxu0 0.0
  %2767 = vmatpush1.msra.mxu0 0.0
  %2768 = vmatprep.subr.mxu0 0.0
  %2769 = vmatpush1.msra.mxu0 0.0
  %2770 = vmatprep.subr.mxu0 0.0
  %2771 = vmatpush1.msra.mxu0 0.0
  %2772 = vmatprep.subr.mxu0 0.0
  %2773 = vmatpush1.msra.mxu0 0.0
  %2774 = vmatprep.subr.mxu0 0.0
  %2775 = vmatpush1.msra.mxu0 0.0
  %2776 = vmatprep.subr.mxu0 0.0
  %2777 = vmatpush1.msra.mxu0 0.0
  %2778 = vmatprep.subr.mxu0 0.0
  %2779 = vmatpush1.msra.mxu0 0.0
  %2780 = vmatprep.mubr.f32.mxu0 0.0
  %2781 = vmatmul.mubr.f32.gmra.mrb[0].mxu0 %v126
  %v2782 = vpop.f32.mrb[0].mxu0
  %v2783 = vadd.f32 0.0, %v2782
  %v2784 = vpop.f32.mrb[0].mxu0
  %2785 = vdwg.mxu0
  %v2786 = vadd.f32 %v2705, %v2783
  %v2787 = vxor.u32 %v2786, 2147483648
  %v2788 = vmul.f32 %v2787, 1.442695
  %v2789 = vpow.pop %v2788
  %v2790 = vadd.f32 %v2789, 1.0
  %v2791 = vrcp.pop %v2790
  %v2792 = vmul.f32 1.0, %v2791
  %v2793 = vtanh.pop %v2786
  %v2794 = vmul.f32 %v2792, 0.0
  %2796 = vrot.lane.b32.xlu0 %v2793, 98
  %v2797 = vpop.permute.xlu0 %2796
  %v2799 = vmul.f32 %v2792, %v2797
  %2801 = vrot.lane.b32.xlu0 %v2799, 10
  %v2802 = vpop.permute.xlu0 %2801
  %v2804 = vadd.f32 %v2794, %v2802
  %v2805 = vtanh.pop %v2804
  %2807 = vrot.lane.b32.xlu0 %v2805, 10
  %v2808 = vpop.permute.xlu0 %2807
  %v2810 = vmul.f32 %v2792, %v2808
  %2812 = vrot.lane.b32.xlu0 %v2810, 108
  %v2813 = vpop.permute.xlu0 %2812
  %v2814 = vsel %vm124, %v2813, 0
  %2816 = vmatprep.subr.mxu0 0.0
  %2817 = vmatpush1.msra.mxu0 %v2609
  %2818 = vmatprep.subr.mxu0 0.0
  %2819 = vmatpush1.msra.mxu0 %v2714
  %2820 = vmatprep.subr.mxu0 0.0
  %2821 = vmatpush1.msra.mxu0 0.0
  %2822 = vmatprep.subr.mxu0 0.0
  %2823 = vmatpush1.msra.mxu0 0.0
  %2824 = vmatprep.subr.mxu0 0.0
  %2825 = vmatpush1.msra.mxu0 0.0
  %2826 = vmatprep.subr.mxu0 0.0
  %2827 = vmatpush1.msra.mxu0 0.0
  %2828 = vmatprep.subr.mxu0 0.0
  %2829 = vmatpush1.msra.mxu0 0.0
  %2830 = vmatprep.subr.mxu0 0.0
  %2831 = vmatpush1.msra.mxu0 0.0
  %2832 = vmatprep.subr.mxu0 0.0
  %2833 = vmatpush1.msra.mxu0 0.0
  %2834 = vmatprep.subr.mxu0 0.0
  %2835 = vmatpush1.msra.mxu0 0.0
  %2836 = vmatprep.subr.mxu0 0.0
  %2837 = vmatpush1.msra.mxu0 0.0
  %2838 = vmatprep.subr.mxu0 0.0
  %2839 = vmatpush1.msra.mxu0 0.0
  %2840 = vmatprep.subr.mxu0 0.0
  %2841 = vmatpush1.msra.mxu0 0.0
  %2842 = vmatprep.subr.mxu0 0.0
  %2843 = vmatpush1.msra.mxu0 0.0
  %2844 = vmatprep.subr.mxu0 0.0
  %2845 = vmatpush1.msra.mxu0 0.0
  %2846 = vmatprep.subr.mxu0 0.0
  %2847 = vmatpush1.msra.mxu0 0.0
  %2848 = vmatprep.subr.mxu0 0.0
  %2849 = vmatpush1.msra.mxu0 0.0
  %2850 = vmatprep.subr.mxu0 0.0
  %2851 = vmatpush1.msra.mxu0 0.0
  %2852 = vmatprep.subr.mxu0 0.0
  %2853 = vmatpush1.msra.mxu0 0.0
  %2854 = vmatprep.subr.mxu0 0.0
  %2855 = vmatpush1.msra.mxu0 0.0
  %2856 = vmatprep.subr.mxu0 0.0
  %2857 = vmatpush1.msra.mxu0 0.0
  %2858 = vmatprep.subr.mxu0 0.0
  %2859 = vmatpush1.msra.mxu0 0.0
  %2860 = vmatprep.subr.mxu0 0.0
  %2861 = vmatpush1.msra.mxu0 0.0
  %2862 = vmatprep.subr.mxu0 0.0
  %2863 = vmatpush1.msra.mxu0 0.0
  %2864 = vmatprep.subr.mxu0 0.0
  %2865 = vmatpush1.msra.mxu0 0.0
  %2866 = vmatprep.subr.mxu0 0.0
  %2867 = vmatpush1.msra.mxu0 0.0
  %2868 = vmatprep.subr.mxu0 0.0
  %2869 = vmatpush1.msra.mxu0 0.0
  %2870 = vmatprep.subr.mxu0 0.0
  %2871 = vmatpush1.msra.mxu0 0.0
  %2872 = vmatprep.subr.mxu0 0.0
  %2873 = vmatpush1.msra.mxu0 0.0
  %2874 = vmatprep.subr.mxu0 0.0
  %2875 = vmatpush1.msra.mxu0 0.0
  %2876 = vmatprep.subr.mxu0 0.0
  %2877 = vmatpush1.msra.mxu0 0.0
  %2878 = vmatprep.subr.mxu0 0.0
  %2879 = vmatpush1.msra.mxu0 0.0
  %2880 = vmatprep.mubr.f32.mxu0 0.0
  %2881 = vmatmul.mubr.f32.gmra.mrb[0].mxu0 %v2814
  %v2882 = vpop.f32.mrb[0].mxu0
  %v2883 = vadd.f32 0.0, %v2882
  %v2884 = vpop.f32.mrb[0].mxu0
  %2885 = vdwg.mxu0
  %v2886 = vadd.f32 %v2710, %v2883
  %v2887 = vxor.u32 %v2886, 2147483648
  %v2888 = vmul.f32 %v2887, 1.442695
  %v2889 = vpow.pop %v2888
  %v2890 = vadd.f32 %v2889, 1.0
  %v2891 = vrcp.pop %v2890
  %v2892 = vmul.f32 1.0, %v2891
  %v2893 = vtanh.pop %v2886
  %v2894 = vmul.f32 %v2892, %v2804
  %2896 = vrot.lane.b32.xlu0 %v2893, 98
  %v2897 = vpop.permute.xlu0 %2896
  %v2899 = vmul.f32 %v2892, %v2897
  %2901 = vrot.lane.b32.xlu0 %v2899, 10
  %v2902 = vpop.permute.xlu0 %2901
  %v2904 = vadd.f32 %v2894, %v2902
  %v2905 = vtanh.pop %v2904
  %2907 = vrot.lane.b32.xlu0 %v2905, 10
  %v2908 = vpop.permute.xlu0 %2907
  %v2910 = vmul.f32 %v2892, %v2908
  %2913 = vrot.lane.b32.xlu0 %v2910, 108
  %v2914 = vpop.permute.xlu0 %2913
  %v2916 = vsel %vm1345, %v2813, %v2914
  %v2917 = vsel %vm1345, %v2914, %v2813
  %s2918 = scalar_lea.vmem %s4, 144
  %v2919 = vld [vmem:[%s2918] sm:$0xff]
  %v2920 = vld [vmem:[%s2918 + $0x8] sm:$0xff]
  %v2921 = vld [vmem:[%s2918 + $0x10] sm:$0xf]
  %s2922 = scalar_lea.vmem %s5, 96
  %v2923 = vld [vmem:[%s2922] sm:$0xff]
  %v2924 = vld [vmem:[%s2922 + $0x8] sm:$0x3]
  %s2925 = scalar_lea.vmem %s6, 6
  %v2926 = vld [vmem:[%s2925] sm:$0x1]
  %2928 = vrot.lane.b32.xlu0 %v2917, 10
  %v2929 = vpop.permute.xlu0 %2928
  %v2931 = vsel %vm124, %v2916, %v2929
  %2933 = vrot.lane.b32.xlu0 %v2916, 10
  %v2934 = vpop.permute.xlu0 %2933
  %v2936 = vsel %vm124, %v2917, %v2934
  %v2938 = vlaneseq
  %v2939 = vshrl.u32 %v2938, 7
  %v2940 = vsub.s32 0, %v2939
  %v2941 = vrot.slane %v2926, %v2940
  %v2944 = vsel %vm1057, %v2931, 0
  %v2947 = vsel %vm1057, %v2936, 0
  %v2950 = vsel %vm1063, %v2921, 0
  %2952 = vmatprep.subr.mxu0 0.0
  %2953 = vmatpush1.msra.mxu0 %v2919
  %2954 = vmatprep.subr.mxu0 0.0
  %2955 = vmatpush1.msra.mxu0 %v2920
  %2956 = vmatprep.subr.mxu0 0.0
  %2957 = vmatpush1.msra.mxu0 %v2950
  %2958 = vmatprep.subr.mxu0 0.0
  %2959 = vmatpush1.msra.mxu0 0.0
  %2960 = vmatprep.subr.mxu0 0.0
  %2961 = vmatpush1.msra.mxu0 0.0
  %2962 = vmatprep.subr.mxu0 0.0
  %2963 = vmatpush1.msra.mxu0 0.0
  %2964 = vmatprep.subr.mxu0 0.0
  %2965 = vmatpush1.msra.mxu0 0.0
  %2966 = vmatprep.subr.mxu0 0.0
  %2967 = vmatpush1.msra.mxu0 0.0
  %2968 = vmatprep.subr.mxu0 0.0
  %2969 = vmatpush1.msra.mxu0 0.0
  %2970 = vmatprep.subr.mxu0 0.0
  %2971 = vmatpush1.msra.mxu0 0.0
  %2972 = vmatprep.subr.mxu0 0.0
  %2973 = vmatpush1.msra.mxu0 0.0
  %2974 = vmatprep.subr.mxu0 0.0
  %2975 = vmatpush1.msra.mxu0 0.0
  %2976 = vmatprep.subr.mxu0 0.0
  %2977 = vmatpush1.msra.mxu0 0.0
  %2978 = vmatprep.subr.mxu0 0.0
  %2979 = vmatpush1.msra.mxu0 0.0
  %2980 = vmatprep.subr.mxu0 0.0
  %2981 = vmatpush1.msra.mxu0 0.0
  %2982 = vmatprep.subr.mxu0 0.0
  %2983 = vmatpush1.msra.mxu0 0.0
  %2984 = vmatprep.subr.mxu0 0.0
  %2985 = vmatpush1.msra.mxu0 0.0
  %2986 = vmatprep.subr.mxu0 0.0
  %2987 = vmatpush1.msra.mxu0 0.0
  %2988 = vmatprep.subr.mxu0 0.0
  %2989 = vmatpush1.msra.mxu0 0.0
  %2990 = vmatprep.subr.mxu0 0.0
  %2991 = vmatpush1.msra.mxu0 0.0
  %2992 = vmatprep.subr.mxu0 0.0
  %2993 = vmatpush1.msra.mxu0 0.0
  %2994 = vmatprep.subr.mxu0 0.0
  %2995 = vmatpush1.msra.mxu0 0.0
  %2996 = vmatprep.subr.mxu0 0.0
  %2997 = vmatpush1.msra.mxu0 0.0
  %2998 = vmatprep.subr.mxu0 0.0
  %2999 = vmatpush1.msra.mxu0 0.0
  %3000 = vmatprep.subr.mxu0 0.0
  %3001 = vmatpush1.msra.mxu0 0.0
  %3002 = vmatprep.subr.mxu0 0.0
  %3003 = vmatpush1.msra.mxu0 0.0
  %3004 = vmatprep.subr.mxu0 0.0
  %3005 = vmatpush1.msra.mxu0 0.0
  %3006 = vmatprep.subr.mxu0 0.0
  %3007 = vmatpush1.msra.mxu0 0.0
  %3008 = vmatprep.subr.mxu0 0.0
  %3009 = vmatpush1.msra.mxu0 0.0
  %3010 = vmatprep.subr.mxu0 0.0
  %3011 = vmatpush1.msra.mxu0 0.0
  %3012 = vmatprep.subr.mxu0 0.0
  %3013 = vmatpush1.msra.mxu0 0.0
  %3014 = vmatprep.subr.mxu0 0.0
  %3015 = vmatpush1.msra.mxu0 0.0
  %3016 = vmatprep.mubr.f32.mxu0 0.0
  %3017 = vmatmul.mubr.f32.gmra.mrb[0].mxu0 %v2944
  %v3018 = vpop.f32.mrb[0].mxu0
  %v3019 = vadd.f32 %v2941, %v3018
  %v3020 = vpop.f32.mrb[0].mxu0
  %3021 = vmatprep.mubr.f32.mxu0 0.0
  %3022 = vmatmul.mubr.f32.gmra.mrb[0].mxu0 %v2947
  %v3023 = vpop.f32.mrb[0].mxu0
  %v3024 = vadd.f32 %v2941, %v3023
  %v3025 = vpop.f32.mrb[0].mxu0
  %3026 = vdwg.mxu0
  %v3028 = vsel %vm128, %v2924, 0
  %3030 = vmatprep.subr.mxu0 0.0
  %3031 = vmatpush1.msra.mxu0 %v2923
  %3032 = vmatprep.subr.mxu0 0.0
  %3033 = vmatpush1.msra.mxu0 %v3028
  %3034 = vmatprep.subr.mxu0 0.0
  %3035 = vmatpush1.msra.mxu0 0.0
  %3036 = vmatprep.subr.mxu0 0.0
  %3037 = vmatpush1.msra.mxu0 0.0
  %3038 = vmatprep.subr.mxu0 0.0
  %3039 = vmatpush1.msra.mxu0 0.0
  %3040 = vmatprep.subr.mxu0 0.0
  %3041 = vmatpush1.msra.mxu0 0.0
  %3042 = vmatprep.subr.mxu0 0.0
  %3043 = vmatpush1.msra.mxu0 0.0
  %3044 = vmatprep.subr.mxu0 0.0
  %3045 = vmatpush1.msra.mxu0 0.0
  %3046 = vmatprep.subr.mxu0 0.0
  %3047 = vmatpush1.msra.mxu0 0.0
  %3048 = vmatprep.subr.mxu0 0.0
  %3049 = vmatpush1.msra.mxu0 0.0
  %3050 = vmatprep.subr.mxu0 0.0
  %3051 = vmatpush1.msra.mxu0 0.0
  %3052 = vmatprep.subr.mxu0 0.0
  %3053 = vmatpush1.msra.mxu0 0.0
  %3054 = vmatprep.subr.mxu0 0.0
  %3055 = vmatpush1.msra.mxu0 0.0
  %3056 = vmatprep.subr.mxu0 0.0
  %3057 = vmatpush1.msra.mxu0 0.0
  %3058 = vmatprep.subr.mxu0 0.0
  %3059 = vmatpush1.msra.mxu0 0.0
  %3060 = vmatprep.subr.mxu0 0.0
  %3061 = vmatpush1.msra.mxu0 0.0
  %3062 = vmatprep.subr.mxu0 0.0
  %3063 = vmatpush1.msra.mxu0 0.0
  %3064 = vmatprep.subr.mxu0 0.0
  %3065 = vmatpush1.msra.mxu0 0.0
  %3066 = vmatprep.subr.mxu0 0.0
  %3067 = vmatpush1.msra.mxu0 0.0
  %3068 = vmatprep.subr.mxu0 0.0
  %3069 = vmatpush1.msra.mxu0 0.0
  %3070 = vmatprep.subr.mxu0 0.0
  %3071 = vmatpush1.msra.mxu0 0.0
  %3072 = vmatprep.subr.mxu0 0.0
  %3073 = vmatpush1.msra.mxu0 0.0
  %3074 = vmatprep.subr.mxu0 0.0
  %3075 = vmatpush1.msra.mxu0 0.0
  %3076 = vmatprep.subr.mxu0 0.0
  %3077 = vmatpush1.msra.mxu0 0.0
  %3078 = vmatprep.subr.mxu0 0.0
  %3079 = vmatpush1.msra.mxu0 0.0
  %3080 = vmatprep.subr.mxu0 0.0
  %3081 = vmatpush1.msra.mxu0 0.0
  %3082 = vmatprep.subr.mxu0 0.0
  %3083 = vmatpush1.msra.mxu0 0.0
  %3084 = vmatprep.subr.mxu0 0.0
  %3085 = vmatpush1.msra.mxu0 0.0
  %3086 = vmatprep.subr.mxu0 0.0
  %3087 = vmatpush1.msra.mxu0 0.0
  %3088 = vmatprep.subr.mxu0 0.0
  %3089 = vmatpush1.msra.mxu0 0.0
  %3090 = vmatprep.subr.mxu0 0.0
  %3091 = vmatpush1.msra.mxu0 0.0
  %3092 = vmatprep.subr.mxu0 0.0
  %3093 = vmatpush1.msra.mxu0 0.0
  %3094 = vmatprep.mubr.f32.mxu0 0.0
  %3095 = vmatmul.mubr.f32.gmra.mrb[0].mxu0 %v126
  %v3096 = vpop.f32.mrb[0].mxu0
  %v3097 = vadd.f32 0.0, %v3096
  %v3098 = vpop.f32.mrb[0].mxu0
  %3099 = vdwg.mxu0
  %v3100 = vadd.f32 %v3019, %v3097
  %v3101 = vxor.u32 %v3100, 2147483648
  %v3102 = vmul.f32 %v3101, 1.442695
  %v3103 = vpow.pop %v3102
  %v3104 = vadd.f32 %v3103, 1.0
  %v3105 = vrcp.pop %v3104
  %v3106 = vmul.f32 1.0, %v3105
  %v3107 = vtanh.pop %v3100
  %v3108 = vmul.f32 %v3106, 0.0
  %3110 = vrot.lane.b32.xlu0 %v3107, 98
  %v3111 = vpop.permute.xlu0 %3110
  %v3113 = vmul.f32 %v3106, %v3111
  %3115 = vrot.lane.b32.xlu0 %v3113, 10
  %v3116 = vpop.permute.xlu0 %3115
  %v3118 = vadd.f32 %v3108, %v3116
  %v3119 = vtanh.pop %v3118
  %3121 = vrot.lane.b32.xlu0 %v3119, 10
  %v3122 = vpop.permute.xlu0 %3121
  %v3124 = vmul.f32 %v3106, %v3122
  %3126 = vrot.lane.b32.xlu0 %v3124, 108
  %v3127 = vpop.permute.xlu0 %3126
  %v3128 = vsel %vm124, %v3127, 0
  %3130 = vmatprep.subr.mxu0 0.0
  %3131 = vmatpush1.msra.mxu0 %v2923
  %3132 = vmatprep.subr.mxu0 0.0
  %3133 = vmatpush1.msra.mxu0 %v3028
  %3134 = vmatprep.subr.mxu0 0.0
  %3135 = vmatpush1.msra.mxu0 0.0
  %3136 = vmatprep.subr.mxu0 0.0
  %3137 = vmatpush1.msra.mxu0 0.0
  %3138 = vmatprep.subr.mxu0 0.0
  %3139 = vmatpush1.msra.mxu0 0.0
  %3140 = vmatprep.subr.mxu0 0.0
  %3141 = vmatpush1.msra.mxu0 0.0
  %3142 = vmatprep.subr.mxu0 0.0
  %3143 = vmatpush1.msra.mxu0 0.0
  %3144 = vmatprep.subr.mxu0 0.0
  %3145 = vmatpush1.msra.mxu0 0.0
  %3146 = vmatprep.subr.mxu0 0.0
  %3147 = vmatpush1.msra.mxu0 0.0
  %3148 = vmatprep.subr.mxu0 0.0
  %3149 = vmatpush1.msra.mxu0 0.0
  %3150 = vmatprep.subr.mxu0 0.0
  %3151 = vmatpush1.msra.mxu0 0.0
  %3152 = vmatprep.subr.mxu0 0.0
  %3153 = vmatpush1.msra.mxu0 0.0
  %3154 = vmatprep.subr.mxu0 0.0
  %3155 = vmatpush1.msra.mxu0 0.0
  %3156 = vmatprep.subr.mxu0 0.0
  %3157 = vmatpush1.msra.mxu0 0.0
  %3158 = vmatprep.subr.mxu0 0.0
  %3159 = vmatpush1.msra.mxu0 0.0
  %3160 = vmatprep.subr.mxu0 0.0
  %3161 = vmatpush1.msra.mxu0 0.0
  %3162 = vmatprep.subr.mxu0 0.0
  %3163 = vmatpush1.msra.mxu0 0.0
  %3164 = vmatprep.subr.mxu0 0.0
  %3165 = vmatpush1.msra.mxu0 0.0
  %3166 = vmatprep.subr.mxu0 0.0
  %3167 = vmatpush1.msra.mxu0 0.0
  %3168 = vmatprep.subr.mxu0 0.0
  %3169 = vmatpush1.msra.mxu0 0.0
  %3170 = vmatprep.subr.mxu0 0.0
  %3171 = vmatpush1.msra.mxu0 0.0
  %3172 = vmatprep.subr.mxu0 0.0
  %3173 = vmatpush1.msra.mxu0 0.0
  %3174 = vmatprep.subr.mxu0 0.0
  %3175 = vmatpush1.msra.mxu0 0.0
  %3176 = vmatprep.subr.mxu0 0.0
  %3177 = vmatpush1.msra.mxu0 0.0
  %3178 = vmatprep.subr.mxu0 0.0
  %3179 = vmatpush1.msra.mxu0 0.0
  %3180 = vmatprep.subr.mxu0 0.0
  %3181 = vmatpush1.msra.mxu0 0.0
  %3182 = vmatprep.subr.mxu0 0.0
  %3183 = vmatpush1.msra.mxu0 0.0
  %3184 = vmatprep.subr.mxu0 0.0
  %3185 = vmatpush1.msra.mxu0 0.0
  %3186 = vmatprep.subr.mxu0 0.0
  %3187 = vmatpush1.msra.mxu0 0.0
  %3188 = vmatprep.subr.mxu0 0.0
  %3189 = vmatpush1.msra.mxu0 0.0
  %3190 = vmatprep.subr.mxu0 0.0
  %3191 = vmatpush1.msra.mxu0 0.0
  %3192 = vmatprep.subr.mxu0 0.0
  %3193 = vmatpush1.msra.mxu0 0.0
  %3194 = vmatprep.mubr.f32.mxu0 0.0
  %3195 = vmatmul.mubr.f32.gmra.mrb[0].mxu0 %v3128
  %v3196 = vpop.f32.mrb[0].mxu0
  %v3197 = vadd.f32 0.0, %v3196
  %v3198 = vpop.f32.mrb[0].mxu0
  %3199 = vdwg.mxu0
  %v3200 = vadd.f32 %v3024, %v3197
  %v3201 = vxor.u32 %v3200, 2147483648
  %v3202 = vmul.f32 %v3201, 1.442695
  %v3203 = vpow.pop %v3202
  %v3204 = vadd.f32 %v3203, 1.0
  %v3205 = vrcp.pop %v3204
  %v3206 = vmul.f32 1.0, %v3205
  %v3207 = vtanh.pop %v3200
  %v3208 = vmul.f32 %v3206, %v3118
  %3210 = vrot.lane.b32.xlu0 %v3207, 98
  %v3211 = vpop.permute.xlu0 %3210
  %v3213 = vmul.f32 %v3206, %v3211
  %3215 = vrot.lane.b32.xlu0 %v3213, 10
  %v3216 = vpop.permute.xlu0 %3215
  %v3218 = vadd.f32 %v3208, %v3216
  %v3219 = vtanh.pop %v3218
  %3221 = vrot.lane.b32.xlu0 %v3219, 10
  %v3222 = vpop.permute.xlu0 %3221
  %v3224 = vmul.f32 %v3206, %v3222
  %3227 = vrot.lane.b32.xlu0 %v3224, 108
  %v3228 = vpop.permute.xlu0 %3227
  %v3230 = vsel %vm1345, %v3127, %v3228
  %v3231 = vsel %vm1345, %v3228, %v3127
  %s3232 = scalar_lea.vmem %s4, 168
  %v3233 = vld [vmem:[%s3232] sm:$0xff]
  %v3234 = vld [vmem:[%s3232 + $0x8] sm:$0xff]
  %v3235 = vld [vmem:[%s3232 + $0x10] sm:$0xf]
  %s3236 = scalar_lea.vmem %s5, 112
  %v3237 = vld [vmem:[%s3236] sm:$0xff]
  %v3238 = vld [vmem:[%s3236 + $0x8] sm:$0x3]
  %s3239 = scalar_lea.vmem %s6, 7
  %v3240 = vld [vmem:[%s3239] sm:$0x1]
  %3242 = vrot.lane.b32.xlu0 %v3231, 10
  %v3243 = vpop.permute.xlu0 %3242
  %v3245 = vsel %vm124, %v3230, %v3243
  %3247 = vrot.lane.b32.xlu0 %v3230, 10
  %v3248 = vpop.permute.xlu0 %3247
  %v3250 = vsel %vm124, %v3231, %v3248
  %v3252 = vlaneseq
  %v3253 = vshrl.u32 %v3252, 7
  %v3254 = vsub.s32 0, %v3253
  %v3255 = vrot.slane %v3240, %v3254
  %v3258 = vsel %vm1057, %v3245, 0
  %v3261 = vsel %vm1057, %v3250, 0
  %v3264 = vsel %vm1063, %v3235, 0
  %3266 = vmatprep.subr.mxu0 0.0
  %3267 = vmatpush1.msra.mxu0 %v3233
  %3268 = vmatprep.subr.mxu0 0.0
  %3269 = vmatpush1.msra.mxu0 %v3234
  %3270 = vmatprep.subr.mxu0 0.0
  %3271 = vmatpush1.msra.mxu0 %v3264
  %3272 = vmatprep.subr.mxu0 0.0
  %3273 = vmatpush1.msra.mxu0 0.0
  %3274 = vmatprep.subr.mxu0 0.0
  %3275 = vmatpush1.msra.mxu0 0.0
  %3276 = vmatprep.subr.mxu0 0.0
  %3277 = vmatpush1.msra.mxu0 0.0
  %3278 = vmatprep.subr.mxu0 0.0
  %3279 = vmatpush1.msra.mxu0 0.0
  %3280 = vmatprep.subr.mxu0 0.0
  %3281 = vmatpush1.msra.mxu0 0.0
  %3282 = vmatprep.subr.mxu0 0.0
  %3283 = vmatpush1.msra.mxu0 0.0
  %3284 = vmatprep.subr.mxu0 0.0
  %3285 = vmatpush1.msra.mxu0 0.0
  %3286 = vmatprep.subr.mxu0 0.0
  %3287 = vmatpush1.msra.mxu0 0.0
  %3288 = vmatprep.subr.mxu0 0.0
  %3289 = vmatpush1.msra.mxu0 0.0
  %3290 = vmatprep.subr.mxu0 0.0
  %3291 = vmatpush1.msra.mxu0 0.0
  %3292 = vmatprep.subr.mxu0 0.0
  %3293 = vmatpush1.msra.mxu0 0.0
  %3294 = vmatprep.subr.mxu0 0.0
  %3295 = vmatpush1.msra.mxu0 0.0
  %3296 = vmatprep.subr.mxu0 0.0
  %3297 = vmatpush1.msra.mxu0 0.0
  %3298 = vmatprep.subr.mxu0 0.0
  %3299 = vmatpush1.msra.mxu0 0.0
  %3300 = vmatprep.subr.mxu0 0.0
  %3301 = vmatpush1.msra.mxu0 0.0
  %3302 = vmatprep.subr.mxu0 0.0
  %3303 = vmatpush1.msra.mxu0 0.0
  %3304 = vmatprep.subr.mxu0 0.0
  %3305 = vmatpush1.msra.mxu0 0.0
  %3306 = vmatprep.subr.mxu0 0.0
  %3307 = vmatpush1.msra.mxu0 0.0
  %3308 = vmatprep.subr.mxu0 0.0
  %3309 = vmatpush1.msra.mxu0 0.0
  %3310 = vmatprep.subr.mxu0 0.0
  %3311 = vmatpush1.msra.mxu0 0.0
  %3312 = vmatprep.subr.mxu0 0.0
  %3313 = vmatpush1.msra.mxu0 0.0
  %3314 = vmatprep.subr.mxu0 0.0
  %3315 = vmatpush1.msra.mxu0 0.0
  %3316 = vmatprep.subr.mxu0 0.0
  %3317 = vmatpush1.msra.mxu0 0.0
  %3318 = vmatprep.subr.mxu0 0.0
  %3319 = vmatpush1.msra.mxu0 0.0
  %3320 = vmatprep.subr.mxu0 0.0
  %3321 = vmatpush1.msra.mxu0 0.0
  %3322 = vmatprep.subr.mxu0 0.0
  %3323 = vmatpush1.msra.mxu0 0.0
  %3324 = vmatprep.subr.mxu0 0.0
  %3325 = vmatpush1.msra.mxu0 0.0
  %3326 = vmatprep.subr.mxu0 0.0
  %3327 = vmatpush1.msra.mxu0 0.0
  %3328 = vmatprep.subr.mxu0 0.0
  %3329 = vmatpush1.msra.mxu0 0.0
  %3330 = vmatprep.mubr.f32.mxu0 0.0
  %3331 = vmatmul.mubr.f32.gmra.mrb[0].mxu0 %v3258
  %v3332 = vpop.f32.mrb[0].mxu0
  %v3333 = vadd.f32 %v3255, %v3332
  %v3334 = vpop.f32.mrb[0].mxu0
  %3335 = vmatprep.mubr.f32.mxu0 0.0
  %3336 = vmatmul.mubr.f32.gmra.mrb[0].mxu0 %v3261
  %v3337 = vpop.f32.mrb[0].mxu0
  %v3338 = vadd.f32 %v3255, %v3337
  %v3339 = vpop.f32.mrb[0].mxu0
  %3340 = vdwg.mxu0
  %v3342 = vsel %vm128, %v3238, 0
  %3344 = vmatprep.subr.mxu0 0.0
  %3345 = vmatpush1.msra.mxu0 %v3237
  %3346 = vmatprep.subr.mxu0 0.0
  %3347 = vmatpush1.msra.mxu0 %v3342
  %3348 = vmatprep.subr.mxu0 0.0
  %3349 = vmatpush1.msra.mxu0 0.0
  %3350 = vmatprep.subr.mxu0 0.0
  %3351 = vmatpush1.msra.mxu0 0.0
  %3352 = vmatprep.subr.mxu0 0.0
  %3353 = vmatpush1.msra.mxu0 0.0
  %3354 = vmatprep.subr.mxu0 0.0
  %3355 = vmatpush1.msra.mxu0 0.0
  %3356 = vmatprep.subr.mxu0 0.0
  %3357 = vmatpush1.msra.mxu0 0.0
  %3358 = vmatprep.subr.mxu0 0.0
  %3359 = vmatpush1.msra.mxu0 0.0
  %3360 = vmatprep.subr.mxu0 0.0
  %3361 = vmatpush1.msra.mxu0 0.0
  %3362 = vmatprep.subr.mxu0 0.0
  %3363 = vmatpush1.msra.mxu0 0.0
  %3364 = vmatprep.subr.mxu0 0.0
  %3365 = vmatpush1.msra.mxu0 0.0
  %3366 = vmatprep.subr.mxu0 0.0
  %3367 = vmatpush1.msra.mxu0 0.0
  %3368 = vmatprep.subr.mxu0 0.0
  %3369 = vmatpush1.msra.mxu0 0.0
  %3370 = vmatprep.subr.mxu0 0.0
  %3371 = vmatpush1.msra.mxu0 0.0
  %3372 = vmatprep.subr.mxu0 0.0
  %3373 = vmatpush1.msra.mxu0 0.0
  %3374 = vmatprep.subr.mxu0 0.0
  %3375 = vmatpush1.msra.mxu0 0.0
  %3376 = vmatprep.subr.mxu0 0.0
  %3377 = vmatpush1.msra.mxu0 0.0
  %3378 = vmatprep.subr.mxu0 0.0
  %3379 = vmatpush1.msra.mxu0 0.0
  %3380 = vmatprep.subr.mxu0 0.0
  %3381 = vmatpush1.msra.mxu0 0.0
  %3382 = vmatprep.subr.mxu0 0.0
  %3383 = vmatpush1.msra.mxu0 0.0
  %3384 = vmatprep.subr.mxu0 0.0
  %3385 = vmatpush1.msra.mxu0 0.0
  %3386 = vmatprep.subr.mxu0 0.0
  %3387 = vmatpush1.msra.mxu0 0.0
  %3388 = vmatprep.subr.mxu0 0.0
  %3389 = vmatpush1.msra.mxu0 0.0
  %3390 = vmatprep.subr.mxu0 0.0
  %3391 = vmatpush1.msra.mxu0 0.0
  %3392 = vmatprep.subr.mxu0 0.0
  %3393 = vmatpush1.msra.mxu0 0.0
  %3394 = vmatprep.subr.mxu0 0.0
  %3395 = vmatpush1.msra.mxu0 0.0
  %3396 = vmatprep.subr.mxu0 0.0
  %3397 = vmatpush1.msra.mxu0 0.0
  %3398 = vmatprep.subr.mxu0 0.0
  %3399 = vmatpush1.msra.mxu0 0.0
  %3400 = vmatprep.subr.mxu0 0.0
  %3401 = vmatpush1.msra.mxu0 0.0
  %3402 = vmatprep.subr.mxu0 0.0
  %3403 = vmatpush1.msra.mxu0 0.0
  %3404 = vmatprep.subr.mxu0 0.0
  %3405 = vmatpush1.msra.mxu0 0.0
  %3406 = vmatprep.subr.mxu0 0.0
  %3407 = vmatpush1.msra.mxu0 0.0
  %3408 = vmatprep.mubr.f32.mxu0 0.0
  %3409 = vmatmul.mubr.f32.gmra.mrb[0].mxu0 %v126
  %v3410 = vpop.f32.mrb[0].mxu0
  %v3411 = vadd.f32 0.0, %v3410
  %v3412 = vpop.f32.mrb[0].mxu0
  %3413 = vdwg.mxu0
  %v3414 = vadd.f32 %v3333, %v3411
  %v3415 = vxor.u32 %v3414, 2147483648
  %v3416 = vmul.f32 %v3415, 1.442695
  %v3417 = vpow.pop %v3416
  %v3418 = vadd.f32 %v3417, 1.0
  %v3419 = vrcp.pop %v3418
  %v3420 = vmul.f32 1.0, %v3419
  %v3421 = vtanh.pop %v3414
  %v3422 = vmul.f32 %v3420, 0.0
  %3424 = vrot.lane.b32.xlu0 %v3421, 98
  %v3425 = vpop.permute.xlu0 %3424
  %v3427 = vmul.f32 %v3420, %v3425
  %3429 = vrot.lane.b32.xlu0 %v3427, 10
  %v3430 = vpop.permute.xlu0 %3429
  %v3432 = vadd.f32 %v3422, %v3430
  %v3433 = vtanh.pop %v3432
  %3435 = vrot.lane.b32.xlu0 %v3433, 10
  %v3436 = vpop.permute.xlu0 %3435
  %v3438 = vmul.f32 %v3420, %v3436
  %3440 = vrot.lane.b32.xlu0 %v3438, 108
  %v3441 = vpop.permute.xlu0 %3440
  %v3442 = vsel %vm124, %v3441, 0
  %3444 = vmatprep.subr.mxu0 0.0
  %3445 = vmatpush1.msra.mxu0 %v3237
  %3446 = vmatprep.subr.mxu0 0.0
  %3447 = vmatpush1.msra.mxu0 %v3342
  %3448 = vmatprep.subr.mxu0 0.0
  %3449 = vmatpush1.msra.mxu0 0.0
  %3450 = vmatprep.subr.mxu0 0.0
  %3451 = vmatpush1.msra.mxu0 0.0
  %3452 = vmatprep.subr.mxu0 0.0
  %3453 = vmatpush1.msra.mxu0 0.0
  %3454 = vmatprep.subr.mxu0 0.0
  %3455 = vmatpush1.msra.mxu0 0.0
  %3456 = vmatprep.subr.mxu0 0.0
  %3457 = vmatpush1.msra.mxu0 0.0
  %3458 = vmatprep.subr.mxu0 0.0
  %3459 = vmatpush1.msra.mxu0 0.0
  %3460 = vmatprep.subr.mxu0 0.0
  %3461 = vmatpush1.msra.mxu0 0.0
  %3462 = vmatprep.subr.mxu0 0.0
  %3463 = vmatpush1.msra.mxu0 0.0
  %3464 = vmatprep.subr.mxu0 0.0
  %3465 = vmatpush1.msra.mxu0 0.0
  %3466 = vmatprep.subr.mxu0 0.0
  %3467 = vmatpush1.msra.mxu0 0.0
  %3468 = vmatprep.subr.mxu0 0.0
  %3469 = vmatpush1.msra.mxu0 0.0
  %3470 = vmatprep.subr.mxu0 0.0
  %3471 = vmatpush1.msra.mxu0 0.0
  %3472 = vmatprep.subr.mxu0 0.0
  %3473 = vmatpush1.msra.mxu0 0.0
  %3474 = vmatprep.subr.mxu0 0.0
  %3475 = vmatpush1.msra.mxu0 0.0
  %3476 = vmatprep.subr.mxu0 0.0
  %3477 = vmatpush1.msra.mxu0 0.0
  %3478 = vmatprep.subr.mxu0 0.0
  %3479 = vmatpush1.msra.mxu0 0.0
  %3480 = vmatprep.subr.mxu0 0.0
  %3481 = vmatpush1.msra.mxu0 0.0
  %3482 = vmatprep.subr.mxu0 0.0
  %3483 = vmatpush1.msra.mxu0 0.0
  %3484 = vmatprep.subr.mxu0 0.0
  %3485 = vmatpush1.msra.mxu0 0.0
  %3486 = vmatprep.subr.mxu0 0.0
  %3487 = vmatpush1.msra.mxu0 0.0
  %3488 = vmatprep.subr.mxu0 0.0
  %3489 = vmatpush1.msra.mxu0 0.0
  %3490 = vmatprep.subr.mxu0 0.0
  %3491 = vmatpush1.msra.mxu0 0.0
  %3492 = vmatprep.subr.mxu0 0.0
  %3493 = vmatpush1.msra.mxu0 0.0
  %3494 = vmatprep.subr.mxu0 0.0
  %3495 = vmatpush1.msra.mxu0 0.0
  %3496 = vmatprep.subr.mxu0 0.0
  %3497 = vmatpush1.msra.mxu0 0.0
  %3498 = vmatprep.subr.mxu0 0.0
  %3499 = vmatpush1.msra.mxu0 0.0
  %3500 = vmatprep.subr.mxu0 0.0
  %3501 = vmatpush1.msra.mxu0 0.0
  %3502 = vmatprep.subr.mxu0 0.0
  %3503 = vmatpush1.msra.mxu0 0.0
  %3504 = vmatprep.subr.mxu0 0.0
  %3505 = vmatpush1.msra.mxu0 0.0
  %3506 = vmatprep.subr.mxu0 0.0
  %3507 = vmatpush1.msra.mxu0 0.0
  %3508 = vmatprep.mubr.f32.mxu0 0.0
  %3509 = vmatmul.mubr.f32.gmra.mrb[0].mxu0 %v3442
  %v3510 = vpop.f32.mrb[0].mxu0
  %v3511 = vadd.f32 0.0, %v3510
  %v3512 = vpop.f32.mrb[0].mxu0
  %3513 = vdwg.mxu0
  %v3514 = vadd.f32 %v3338, %v3511
  %v3515 = vxor.u32 %v3514, 2147483648
  %v3516 = vmul.f32 %v3515, 1.442695
  %v3517 = vpow.pop %v3516
  %v3518 = vadd.f32 %v3517, 1.0
  %v3519 = vrcp.pop %v3518
  %v3520 = vmul.f32 1.0, %v3519
  %v3521 = vtanh.pop %v3514
  %v3522 = vmul.f32 %v3520, %v3432
  %3524 = vrot.lane.b32.xlu0 %v3521, 98
  %v3525 = vpop.permute.xlu0 %3524
  %v3527 = vmul.f32 %v3520, %v3525
  %3529 = vrot.lane.b32.xlu0 %v3527, 10
  %v3530 = vpop.permute.xlu0 %3529
  %v3532 = vadd.f32 %v3522, %v3530
  %v3533 = vtanh.pop %v3532
  %3535 = vrot.lane.b32.xlu0 %v3533, 10
  %v3536 = vpop.permute.xlu0 %3535
  %v3538 = vmul.f32 %v3520, %v3536
  %3541 = vrot.lane.b32.xlu0 %v3538, 108
  %v3542 = vpop.permute.xlu0 %3541
  %v3544 = vsel %vm1345, %v3441, %v3542
  %v3545 = vsel %vm1345, %v3542, %v3441
  %v3546 = vld [vmem:[%s7] sm:$0xff]
  %v3547 = vld [vmem:[%s7 + $0x8] sm:$0x3]
  %v3548 = vld [vmem:[%s8] sm:$0x1]
  %v3550 = vlaneseq
  %v3551 = vshrl.u32 %v3550, 7
  %v3552 = vsub.s32 0, %v3551
  %v3553 = vrot.slane %v3548, %v3552
  %v3556 = vsel %vm124, %v3544, 0
  %v3559 = vsel %vm124, %v3545, 0
  %v3562 = vsel %vm128, %v3547, 0
  %3564 = vmatprep.subr.mxu0 0.0
  %3565 = vmatpush1.msra.mxu0 %v3546
  %3566 = vmatprep.subr.mxu0 0.0
  %3567 = vmatpush1.msra.mxu0 %v3562
  %3568 = vmatprep.subr.mxu0 0.0
  %3569 = vmatpush1.msra.mxu0 0.0
  %3570 = vmatprep.subr.mxu0 0.0
  %3571 = vmatpush1.msra.mxu0 0.0
  %3572 = vmatprep.subr.mxu0 0.0
  %3573 = vmatpush1.msra.mxu0 0.0
  %3574 = vmatprep.subr.mxu0 0.0
  %3575 = vmatpush1.msra.mxu0 0.0
  %3576 = vmatprep.subr.mxu0 0.0
  %3577 = vmatpush1.msra.mxu0 0.0
  %3578 = vmatprep.subr.mxu0 0.0
  %3579 = vmatpush1.msra.mxu0 0.0
  %3580 = vmatprep.subr.mxu0 0.0
  %3581 = vmatpush1.msra.mxu0 0.0
  %3582 = vmatprep.subr.mxu0 0.0
  %3583 = vmatpush1.msra.mxu0 0.0
  %3584 = vmatprep.subr.mxu0 0.0
  %3585 = vmatpush1.msra.mxu0 0.0
  %3586 = vmatprep.subr.mxu0 0.0
  %3587 = vmatpush1.msra.mxu0 0.0
  %3588 = vmatprep.subr.mxu0 0.0
  %3589 = vmatpush1.msra.mxu0 0.0
  %3590 = vmatprep.subr.mxu0 0.0
  %3591 = vmatpush1.msra.mxu0 0.0
  %3592 = vmatprep.subr.mxu0 0.0
  %3593 = vmatpush1.msra.mxu0 0.0
  %3594 = vmatprep.subr.mxu0 0.0
  %3595 = vmatpush1.msra.mxu0 0.0
  %3596 = vmatprep.subr.mxu0 0.0
  %3597 = vmatpush1.msra.mxu0 0.0
  %3598 = vmatprep.subr.mxu0 0.0
  %3599 = vmatpush1.msra.mxu0 0.0
  %3600 = vmatprep.subr.mxu0 0.0
  %3601 = vmatpush1.msra.mxu0 0.0
  %3602 = vmatprep.subr.mxu0 0.0
  %3603 = vmatpush1.msra.mxu0 0.0
  %3604 = vmatprep.subr.mxu0 0.0
  %3605 = vmatpush1.msra.mxu0 0.0
  %3606 = vmatprep.subr.mxu0 0.0
  %3607 = vmatpush1.msra.mxu0 0.0
  %3608 = vmatprep.subr.mxu0 0.0
  %3609 = vmatpush1.msra.mxu0 0.0
  %3610 = vmatprep.subr.mxu0 0.0
  %3611 = vmatpush1.msra.mxu0 0.0
  %3612 = vmatprep.subr.mxu0 0.0
  %3613 = vmatpush1.msra.mxu0 0.0
  %3614 = vmatprep.subr.mxu0 0.0
  %3615 = vmatpush1.msra.mxu0 0.0
  %3616 = vmatprep.subr.mxu0 0.0
  %3617 = vmatpush1.msra.mxu0 0.0
  %3618 = vmatprep.subr.mxu0 0.0
  %3619 = vmatpush1.msra.mxu0 0.0
  %3620 = vmatprep.subr.mxu0 0.0
  %3621 = vmatpush1.msra.mxu0 0.0
  %3622 = vmatprep.subr.mxu0 0.0
  %3623 = vmatpush1.msra.mxu0 0.0
  %3624 = vmatprep.subr.mxu0 0.0
  %3625 = vmatpush1.msra.mxu0 0.0
  %3626 = vmatprep.subr.mxu0 0.0
  %3627 = vmatpush1.msra.mxu0 0.0
  %3628 = vmatprep.mubr.f32.mxu0 0.0
  %3629 = vmatmul.mubr.f32.gmra.mrb[0].mxu0 %v3556
  %v3630 = vpop.f32.mrb[0].mxu0
  %v3631 = vadd.f32 %v3553, %v3630
  %v3632 = vpop.f32.mrb[0].mxu0
  %3633 = vmatprep.mubr.f32.mxu0 0.0
  %3634 = vmatmul.mubr.f32.gmra.mrb[0].mxu0 %v3559
  %v3635 = vpop.f32.mrb[0].mxu0
  %v3636 = vadd.f32 %v3553, %v3635
  %v3637 = vpop.f32.mrb[0].mxu0
  %3638 = vdwg.mxu0
  %v3639 = vld [vmem:[%s9] sm:$0xff]
  %v3640 = vld [vmem:[%s9 + $0x8] sm:$0xff]
  %v3641 = vld [vmem:[%s9 + $0x10] sm:$0xff]
  %v3642 = vld [vmem:[%s9 + $0x18] sm:$0xff]
  %v3643 = vld [vmem:[%s9 + $0x20] sm:$0xff]
  %v3644 = vld [vmem:[%s9 + $0x28] sm:$0xff]
  %v3645 = vld [vmem:[%s9 + $0x30] sm:$0xff]
  %v3646 = vld [vmem:[%s9 + $0x38] sm:$0xff]
  %v3647 = vld [vmem:[%s9 + $0x40] sm:$0xff]
  %v3648 = vld [vmem:[%s9 + $0x48] sm:$0xff]
  %v3649 = vld [vmem:[%s9 + $0x50] sm:$0xff]
  %v3650 = vld [vmem:[%s9 + $0x58] sm:$0xff]
  %v3651 = vld [vmem:[%s9 + $0x60] sm:$0xf]
  %v3652 = vld [vmem:[%s10] sm:$0x1]
  %v3654 = vlaneseq
  %v3655 = vshrl.u32 %v3654, 7
  %v3656 = vsub.s32 0, %v3655
  %v3657 = vrot.slane %v3652, %v3656
  %vm3659 = vcmask 818176
  %v3661 = vsel %vm3659, %v3631, 0
  %v3664 = vsel %vm3659, %v3636, 0
  %v3667 = vsel %vm1063, %v3651, 0
  %3669 = vmatprep.subr.mxu0 0.0
  %3670 = vmatpush1.msra.mxu0 %v3639
  %3671 = vmatprep.subr.mxu0 0.0
  %3672 = vmatpush1.msra.mxu0 %v3640
  %3673 = vmatprep.subr.mxu0 0.0
  %3674 = vmatpush1.msra.mxu0 %v3641
  %3675 = vmatprep.subr.mxu0 0.0
  %3676 = vmatpush1.msra.mxu0 %v3642
  %3677 = vmatprep.subr.mxu0 0.0
  %3678 = vmatpush1.msra.mxu0 %v3643
  %3679 = vmatprep.subr.mxu0 0.0
  %3680 = vmatpush1.msra.mxu0 %v3644
  %3681 = vmatprep.subr.mxu0 0.0
  %3682 = vmatpush1.msra.mxu0 %v3645
  %3683 = vmatprep.subr.mxu0 0.0
  %3684 = vmatpush1.msra.mxu0 %v3646
  %3685 = vmatprep.subr.mxu0 0.0
  %3686 = vmatpush1.msra.mxu0 %v3647
  %3687 = vmatprep.subr.mxu0 0.0
  %3688 = vmatpush1.msra.mxu0 %v3648
  %3689 = vmatprep.subr.mxu0 0.0
  %3690 = vmatpush1.msra.mxu0 %v3649
  %3691 = vmatprep.subr.mxu0 0.0
  %3692 = vmatpush1.msra.mxu0 %v3650
  %3693 = vmatprep.subr.mxu0 0.0
  %3694 = vmatpush1.msra.mxu0 %v3667
  %3695 = vmatprep.subr.mxu0 0.0
  %3696 = vmatpush1.msra.mxu0 0.0
  %3697 = vmatprep.subr.mxu0 0.0
  %3698 = vmatpush1.msra.mxu0 0.0
  %3699 = vmatprep.subr.mxu0 0.0
  %3700 = vmatpush1.msra.mxu0 0.0
  %3701 = vmatprep.subr.mxu0 0.0
  %3702 = vmatpush1.msra.mxu0 0.0
  %3703 = vmatprep.subr.mxu0 0.0
  %3704 = vmatpush1.msra.mxu0 0.0
  %3705 = vmatprep.subr.mxu0 0.0
  %3706 = vmatpush1.msra.mxu0 0.0
  %3707 = vmatprep.subr.mxu0 0.0
  %3708 = vmatpush1.msra.mxu0 0.0
  %3709 = vmatprep.subr.mxu0 0.0
  %3710 = vmatpush1.msra.mxu0 0.0
  %3711 = vmatprep.subr.mxu0 0.0
  %3712 = vmatpush1.msra.mxu0 0.0
  %3713 = vmatprep.subr.mxu0 0.0
  %3714 = vmatpush1.msra.mxu0 0.0
  %3715 = vmatprep.subr.mxu0 0.0
  %3716 = vmatpush1.msra.mxu0 0.0
  %3717 = vmatprep.subr.mxu0 0.0
  %3718 = vmatpush1.msra.mxu0 0.0
  %3719 = vmatprep.subr.mxu0 0.0
  %3720 = vmatpush1.msra.mxu0 0.0
  %3721 = vmatprep.subr.mxu0 0.0
  %3722 = vmatpush1.msra.mxu0 0.0
  %3723 = vmatprep.subr.mxu0 0.0
  %3724 = vmatpush1.msra.mxu0 0.0
  %3725 = vmatprep.subr.mxu0 0.0
  %3726 = vmatpush1.msra.mxu0 0.0
  %3727 = vmatprep.subr.mxu0 0.0
  %3728 = vmatpush1.msra.mxu0 0.0
  %3729 = vmatprep.subr.mxu0 0.0
  %3730 = vmatpush1.msra.mxu0 0.0
  %3731 = vmatprep.subr.mxu0 0.0
  %3732 = vmatpush1.msra.mxu0 0.0
  %3733 = vmatprep.mubr.f32.mxu0 0.0
  %3734 = vmatmul.mubr.f32.gmra.mrb[0].mxu0 %v3661
  %v3735 = vpop.f32.mrb[0].mxu0
  %v3736 = vadd.f32 %v3657, %v3735
  %v3737 = vpop.f32.mrb[0].mxu0
  %3738 = vmatprep.mubr.f32.mxu0 0.0
  %3739 = vmatmul.mubr.f32.gmra.mrb[0].mxu0 %v3664
  %v3740 = vpop.f32.mrb[0].mxu0
  %v3741 = vadd.f32 %v3657, %v3740
  %v3742 = vpop.f32.mrb[0].mxu0
  %3743 = vdwg.mxu0
  %v3744 = vld [vmem:[%s11] sm:$0xff]
  %v3745 = vld [vmem:[%s11 + $0x8] sm:$0x3]
  %v3746 = vld [vmem:[%s12] sm:$0x1]
  %v3748 = vlaneseq
  %v3749 = vshrl.u32 %v3748, 7
  %v3750 = vsub.s32 0, %v3749
  %v3751 = vrot.slane %v3746, %v3750
  %v3754 = vsel %vm124, %v3736, 0
  %v3757 = vsel %vm124, %v3741, 0
  %v3760 = vsel %vm128, %v3745, 0
  %3762 = vmatprep.subr.mxu0 0.0
  %3763 = vmatpush1.msra.mxu0 %v3744
  %3764 = vmatprep.subr.mxu0 0.0
  %3765 = vmatpush1.msra.mxu0 %v3760
  %3766 = vmatprep.subr.mxu0 0.0
  %3767 = vmatpush1.msra.mxu0 0.0
  %3768 = vmatprep.subr.mxu0 0.0
  %3769 = vmatpush1.msra.mxu0 0.0
  %3770 = vmatprep.subr.mxu0 0.0
  %3771 = vmatpush1.msra.mxu0 0.0
  %3772 = vmatprep.subr.mxu0 0.0
  %3773 = vmatpush1.msra.mxu0 0.0
  %3774 = vmatprep.subr.mxu0 0.0
  %3775 = vmatpush1.msra.mxu0 0.0
  %3776 = vmatprep.subr.mxu0 0.0
  %3777 = vmatpush1.msra.mxu0 0.0
  %3778 = vmatprep.subr.mxu0 0.0
  %3779 = vmatpush1.msra.mxu0 0.0
  %3780 = vmatprep.subr.mxu0 0.0
  %3781 = vmatpush1.msra.mxu0 0.0
  %3782 = vmatprep.subr.mxu0 0.0
  %3783 = vmatpush1.msra.mxu0 0.0
  %3784 = vmatprep.subr.mxu0 0.0
  %3785 = vmatpush1.msra.mxu0 0.0
  %3786 = vmatprep.subr.mxu0 0.0
  %3787 = vmatpush1.msra.mxu0 0.0
  %3788 = vmatprep.subr.mxu0 0.0
  %3789 = vmatpush1.msra.mxu0 0.0
  %3790 = vmatprep.subr.mxu0 0.0
  %3791 = vmatpush1.msra.mxu0 0.0
  %3792 = vmatprep.subr.mxu0 0.0
  %3793 = vmatpush1.msra.mxu0 0.0
  %3794 = vmatprep.subr.mxu0 0.0
  %3795 = vmatpush1.msra.mxu0 0.0
  %3796 = vmatprep.subr.mxu0 0.0
  %3797 = vmatpush1.msra.mxu0 0.0
  %3798 = vmatprep.subr.mxu0 0.0
  %3799 = vmatpush1.msra.mxu0 0.0
  %3800 = vmatprep.subr.mxu0 0.0
  %3801 = vmatpush1.msra.mxu0 0.0
  %3802 = vmatprep.subr.mxu0 0.0
  %3803 = vmatpush1.msra.mxu0 0.0
  %3804 = vmatprep.subr.mxu0 0.0
  %3805 = vmatpush1.msra.mxu0 0.0
  %3806 = vmatprep.subr.mxu0 0.0
  %3807 = vmatpush1.msra.mxu0 0.0
  %3808 = vmatprep.subr.mxu0 0.0
  %3809 = vmatpush1.msra.mxu0 0.0
  %3810 = vmatprep.subr.mxu0 0.0
  %3811 = vmatpush1.msra.mxu0 0.0
  %3812 = vmatprep.subr.mxu0 0.0
  %3813 = vmatpush1.msra.mxu0 0.0
  %3814 = vmatprep.subr.mxu0 0.0
  %3815 = vmatpush1.msra.mxu0 0.0
  %3816 = vmatprep.subr.mxu0 0.0
  %3817 = vmatpush1.msra.mxu0 0.0
  %3818 = vmatprep.subr.mxu0 0.0
  %3819 = vmatpush1.msra.mxu0 0.0
  %3820 = vmatprep.subr.mxu0 0.0
  %3821 = vmatpush1.msra.mxu0 0.0
  %3822 = vmatprep.subr.mxu0 0.0
  %3823 = vmatpush1.msra.mxu0 0.0
  %3824 = vmatprep.subr.mxu0 0.0
  %3825 = vmatpush1.msra.mxu0 0.0
  %3826 = vmatprep.mubr.f32.mxu0 0.0
  %3827 = vmatmul.mubr.f32.gmra.mrb[0].mxu0 %v3754
  %v3828 = vpop.f32.mrb[0].mxu0
  %v3829 = vadd.f32 %v3751, %v3828
  %v3830 = vpop.f32.mrb[0].mxu0
  %3831 = vmatprep.mubr.f32.mxu0 0.0
  %3832 = vmatmul.mubr.f32.gmra.mrb[0].mxu0 %v3757
  %v3833 = vpop.f32.mrb[0].mxu0
  %v3834 = vadd.f32 %v3751, %v3833
  %v3835 = vpop.f32.mrb[0].mxu0
  %3836 = vdwg.mxu0
  %vm3837 = vcmask 31744
  %3838 = vst.msk [vmem:[%s13] sm:$0xff] %vm3837, %v3829
  %3839 = vst.msk [vmem:[%s13 + $0x8] sm:$0xff] %vm3837, %v3834
  // Predicated region
  $region54: #{forward.1} parent=0 // pred_check
    _
  $region55: #{forward.1} parent=0 // pred_check_branch
    %3841 = sbr.rel (0) target = $region57
  $region56: #{forward.1} parent=0 // pred_region
    _
  $region57: #{forward.1} parent=0 // pred_fallthru
    _
  // Predicated region
  $region58: #{forward.1} parent=0 // pred_check
    _
  $region59: #{forward.1} parent=0 // pred_check_branch
    %3843 = sbr.rel (0) target = $region61
  $region60: #{forward.1} parent=0 // pred_region
    _
  $region61: #{forward.1} parent=0 // pred_fallthru
    _

</llo_original>
